<compile_context>
chip_gen: v7x
topology: tpu7x:2x2x1
jax: 0.10.0
libtpu: 0.0.40
codegen_flags: <defaults>
</compile_context>

<pallas_src>
from functools import partial

import numpy as np
import jax
import jax.numpy as jnp
from jax import lax
from jax.experimental import pallas as pl
from jax.experimental.pallas import tpu as pltpu

NODE_IDS = (0, 1, 2, 3, 4)      # Down_Body2Node.node
N_NODES = len(NODE_IDS)         # 5 body components -> pooled down to 1 node
FOLD = 128                      # rows folded onto the 128-lane axis

_BLOCK_BYTES_BUDGET = 18 * 1024 * 1024   # target for explicit double-buffered blocks
_VMEM_LIMIT_BYTES = 40 * 1024 * 1024     # scoped VMEM request (< 64 MiB physical on v7x)


def _round_up(a, b):
    return (a + b - 1) // b * b


def _choose_block_rows(rows, v, itemsize):
    """Pick the folded-row tile: keep double-buffered blocks ~<= 18 MiB and keep
    at least 2 grid steps whenever there is enough work (v7x megacore)."""
    in_row_bytes = FOLD * v * itemsize        # one folded input row
    out_row_bytes = FOLD * itemsize           # one output row
    w_bytes = FOLD * v * FOLD * itemsize      # selection matrix (assume double-buffered)
    avail = max(_BLOCK_BYTES_BUDGET - 2 * w_bytes, 2 * 1024 * 1024)
    tr = int(avail // (2 * (in_row_bytes + out_row_bytes)))
    tr = max(32, (tr // 32) * 32)             # multiple of 32: sublane-aligned for f32/bf16/8-bit
    if rows > 32:
        tr = min(tr, _round_up(pl.cdiv(rows, 2), 32))   # ensure >= 2 grid steps
    else:
        tr = 32                                         # single (possibly clipped) block
    return tr


def _body2node_kernel(x_ref, w_ref, o_ref, *, precision, inv_nodes):
    # x_ref: (tr, FOLD*V)   folded input tile, native dtype (no VPU upcast)
    # w_ref: (FOLD*V, FOLD) banded 0/1 selection matrix, native dtype
    # o_ref: (tr, FOLD)     lane-dense output tile, already in original row order
    acc = jnp.dot(x_ref[...], w_ref[...],
                  preferred_element_type=jnp.float32,
                  precision=precision)
    o_ref[...] = (acc * inv_nodes).astype(o_ref.dtype)   # 1/5 scale in f32, then cast


def down_body2node(x, *, block_rows=None):
    """x: (N, C, T, V >= 5) -> (N, C, T, 1): mean over last-axis entries NODE_IDS."""
    N, C, T, V = x.shape
    assert V > max(NODE_IDS), f"need at least {max(NODE_IDS) + 1} nodes on the last axis, got {V}"
    itemsize = jnp.dtype(x.dtype).itemsize
    M = N * C * T

    # Flatten to (M, V).  Do NOT pre-slice the node columns: the kernel's zero
    # weight columns discard them for free (no extra HBM pass).
    x2 = x.reshape(M, V)

    # Fold 128 consecutive rows onto the lane axis (free reshape when M % 128 == 0,
    # the common case).  Only a ragged M pays a one-off pad copy + output slice.
    pad = (-M) % FOLD
    if pad:
        x2 = jnp.pad(x2, ((0, pad), (0, 0)))
    Mp = M + pad
    rows = Mp // FOLD
    xf = x2.reshape(rows, FOLD * V)

    # Banded 0/1 selection matrix: column j sums entries NODE_IDS of original row
    # (i*128 + j).  Values 0.0/1.0 are exact in every float dtype; the 1/|nodes|
    # scale happens in f32 inside the kernel (avoids bf16's 1/5 bias).
    w_np = np.zeros((FOLD * V, FOLD), dtype=np.float32)
    for j in range(FOLD):
        for k in NODE_IDS:
            w_np[j * V + k, j] = 1.0
    w = jnp.asarray(w_np, dtype=x.dtype)

    if block_rows is None:
        tr = _choose_block_rows(rows, V, itemsize)
    else:
        tr = max(32, (int(block_rows) // 32) * 32)
    G = pl.cdiv(rows, tr)

    # Native-dtype MXU feed; for f32 force full-precision contraction so the result
    # is an exact f32 sum (weights are exactly representable, so no extra rounding).
    precision = lax.Precision.HIGHEST if x.dtype == jnp.float32 else None
    kernel = partial(_body2node_kernel, precision=precision, inv_nodes=1.0 / N_NODES)

    cost = pl.CostEstimate(
        flops=2 * rows * (FOLD * V) * FOLD,
        transcendentals=0,
        bytes_accessed=rows * FOLD * V * itemsize + rows * FOLD * itemsize + w.size * itemsize,
    )

    out = pl.pallas_call(
        kernel,
        out_shape=jax.ShapeDtypeStruct((rows, FOLD), x.dtype),
        grid_spec=pltpu.PrefetchScalarGridSpec(
            num_scalar_prefetch=0,
            grid=(G,),
            in_specs=[
                # Boundary blocks can hold uninitialized rows past `rows`; safe because
                # each output row depends only on its own input row (no sublane mixing)
                # and out-of-range output rows are clipped on write-back.
                pl.BlockSpec((tr, FOLD * V), lambda i: (i, 0)),
                # Constant block index -> the weight is DMA'd once, not per grid step.
                pl.BlockSpec((FOLD * V, FOLD), lambda i: (0, 0)),
            ],
            out_specs=pl.BlockSpec((tr, FOLD), lambda i: (i, 0)),
        ),
        compiler_params=pltpu.CompilerParams(
            dimension_semantics=("parallel",),   # v7x: shard grid steps over both TCs
            vmem_limit_bytes=_VMEM_LIMIT_BYTES,
        ),
        cost_estimate=cost,
    )(xf, w)

    flat = out.reshape(Mp)
    if pad:
        flat = flat[:M]          # only in the rare ragged-M fallback
    return flat.reshape(N, C, T, 1)


def down_body2node_ref(x):
    """Pure-JAX reference mirroring the PyTorch forward exactly."""
    return jnp.mean(x[..., jnp.asarray(NODE_IDS)], axis=-1, keepdims=True)


if __name__ == "__main__":
    key = jax.random.PRNGKey(0)

    f32_cases = [
        (2, 4, 16, 5),     # body level (V=5), M=128 -> single clipped block
        (2, 4, 640, 25),   # full joint set (V=25), M=5120 -> multi-step grid + ragged last block
        (3, 4, 10, 7),     # M=120 not a multiple of 128 -> pad fallback path
    ]
    for shape in f32_cases:
        key, sub = jax.random.split(key)
        x = jax.random.normal(sub, shape, dtype=jnp.float32)
        out = jax.block_until_ready(down_body2node(x))
        ref = down_body2node_ref(x)
        assert out.shape == shape[:3] + (1,), out.shape
        np.testing.assert_allclose(np.asarray(out), np.asarray(ref), rtol=1e-5, atol=1e-5)

    # Low-precision path: bf16 fed straight to the MXU (no f32 upcast), 1/5 scale in f32.
    key, sub = jax.random.split(key)
    xb = jax.random.normal(sub, (2, 4, 16, 5), dtype=jnp.float32).astype(jnp.bfloat16)
    outb = jax.block_until_ready(down_body2node(xb))
    refb = down_body2node_ref(xb.astype(jnp.float32))
    np.testing.assert_allclose(np.asarray(outb.astype(jnp.float32)), np.asarray(refb),
                               rtol=1e-2, atol=1e-2)

    print("KERNEL_OK")
</pallas_src>

<mosaic_0001>
module attributes {stable_mosaic.version = 11 : i64} {
  func.func @_body2node_kernel(%arg0: i32, %arg1: memref<32x640xf32, #tpu.memory_space<vmem>>, %arg2: memref<640x128xf32, #tpu.memory_space<vmem>>, %arg3: memref<32x128xf32, #tpu.memory_space<vmem>>) attributes {dimension_semantics = [#tpu.dimension_semantics<parallel>], iteration_bounds = array<i64: 1>, scalar_prefetch = 0 : i64, scratch_operands = 0 : i64, tpu.core_type = #tpu.core_type<tc>, window_params = [{transform_indices = @transform_0, window_bounds = array<i64: 32, 640>}, {pipeline_mode = #tpu.pipeline_mode<synchronous>, transform_indices = @transform_1, window_bounds = array<i64: 640, 128>}, {transform_indices = @transform_2, window_bounds = array<i64: 32, 128>}]} {
    %c0 = arith.constant 0 : index
    %c0_0 = arith.constant 0 : index
    %0 = vector.load %arg1[%c0, %c0_0] : memref<32x640xf32, #tpu.memory_space<vmem>>, vector<32x640xf32>
    %c0_1 = arith.constant 0 : index
    %c0_2 = arith.constant 0 : index
    %1 = vector.load %arg2[%c0_1, %c0_2] : memref<640x128xf32, #tpu.memory_space<vmem>>, vector<640x128xf32>
    %cst = arith.constant dense<0.000000e+00> : vector<32x128xf32>
    %2 = tpu.matmul %0, %1, %cst {dimension_numbers = #tpu.dot_dimension_numbers<[1], [0], [0], [1], [0, 0, 1, 1], [], []>, precision = #tpu.contract_precision<fp32>} : vector<32x640xf32>, vector<640x128xf32>, vector<32x128xf32> -> vector<32x128xf32>
    %cst_3 = arith.constant 2.000000e-01 : f32
    %3 = vector.broadcast %cst_3 : f32 to vector<32x128xf32>
    %4 = arith.mulf %2, %3 : vector<32x128xf32>
    %c0_4 = arith.constant 0 : index
    %c0_5 = arith.constant 0 : index
    %5 = vector.load %arg3[%c0_4, %c0_5] : memref<32x128xf32, #tpu.memory_space<vmem>>, vector<32x128xf32>
    tpu.vector_store %arg3[%c0_4, %c0_5], %4 {strides = array<i32>} : memref<32x128xf32, #tpu.memory_space<vmem>>, vector<32x128xf32>,
    return
  }
  func.func @transform_0(%arg0: i32) -> (i32, i32) {
    %c0_i32 = arith.constant 0 : i32
    %c0_i32_0 = arith.constant 0 : i32
    return %arg0, %c0_i32 : i32, i32
  }
  func.func @transform_1(%arg0: i32) -> (i32, i32) {
    %c0_i32 = arith.constant 0 : i32
    %c0_i32_0 = arith.constant 0 : i32
    %c0_i32_1 = arith.constant 0 : i32
    return %c0_i32, %c0_i32_0 : i32, i32
  }
  func.func @transform_2(%arg0: i32) -> (i32, i32) {
    %c0_i32 = arith.constant 0 : i32
    %c0_i32_0 = arith.constant 0 : i32
    return %arg0, %c0_i32 : i32, i32
  }
}

</mosaic_0001>

<llo_original>
// kernel: tpu_custom_call.1
$region0: #{tpu_custom_call.1}
  #allocation0 [shape = 'u32[]', space=smem, size = 0x4, offset = 0x4, fixed_abs, tag = 'smem constant byte address 0x4 - core index']
  #allocation1 [shape = 'u32[144,128]{1,0:T(1,128)}', space=vmem, size = 0x12000, scoped, tag = 'internal scratch']
  %s0 = inlined_call_operand.hbm [shape: f32[1,640], index: 0, kind: input, shape index: {}]
  %s1 = inlined_call_operand.hbm [shape: f32[640,128], index: 1, kind: input, shape index: {}]
  %s2 = inlined_call_operand.hbm [shape: f32[1,128], index: 2, kind: output, shape index: {}]
  %s3 = sld [smem:[#allocation0]]
  $region26: #{tpu_custom_call.1} parent=0
    _
  %s5 = ssub.s32 1, %s3
  %s6 = scalar_select 0, %s5, %s3
  $region1: #{tpu_custom_call.1} parent=0
    #allocation2 [shape = 'u8[81920]{0}', space=vmem, size = 0x14000, scoped, tag = 'input window, operand 0, single buffered']
    #allocation3 [shape = 's32[1]{0}', space=sflag, size = 0x4, scoped, tag = 'scoped memory for tpu_custom_call.1']
    #allocation4 [shape = 's32[1]{0}', space=sflag, size = 0x4, scoped, tag = 'scoped memory for tpu_custom_call.1']
    #allocation5 [shape = 'u8[327680]{0}', space=vmem, size = 0x50000, scoped, tag = 'input window, operand 1, single buffered']
    #allocation6 [shape = 's32[1]{0}', space=sflag, size = 0x4, scoped, tag = 'scoped memory for tpu_custom_call.1']
    #allocation7 [shape = 'u8[16384]{0}', space=vmem, size = 0x4000, scoped, tag = 'output window, operand 0, single buffered']
    %7 = vsyncpa [#allocation3], 0
    %8 = vsyncpa [#allocation6], 0
    %9 = vsyncpa [#allocation4], 0
    // Predicated region
    $region2: #{tpu_custom_call.1} parent=1 // pred_check
      _
    $region3: #{tpu_custom_call.1} parent=1 // pred_check_branch
      %11 = sbr.rel (0) target = $region5
    $region4: #{tpu_custom_call.1} parent=1 // pred_region
      %s13 = ssub.s32 2560, 80
      %14 = vsyncadd [#allocation3], %s13
      %s15 = sshll.u32 [#allocation2], 4
      %s16 = int_to_ptr.vmem [resolvable:$true] %s15
      %21 = dma.hbm_to_vmem [thread:$0]  %s0, 80, %s16, [#allocation3], 80, 80, 5
    $region5: #{tpu_custom_call.1} parent=1 // pred_fallthru
      _
    // Predicated region
    $region6: #{tpu_custom_call.1} parent=1 // pred_check
      _
    $region7: #{tpu_custom_call.1} parent=1 // pred_check_branch
      %23 = sbr.rel (0) target = $region9
    $region8: #{tpu_custom_call.1} parent=1 // pred_region
      %s25 = ssub.s32 10240, 10240
      %26 = vsyncadd [#allocation6], %s25
      %s27 = sshll.u32 [#allocation5], 4
      %s28 = int_to_ptr.vmem [resolvable:$true] %s27
      %33 = dma.hbm_to_vmem [thread:$0]  %s1, 10240, %s28, [#allocation6], 128, 128, 8
    $region9: #{tpu_custom_call.1} parent=1 // pred_fallthru
      _
    // Predicated region
    $region10: #{tpu_custom_call.1} parent=1 // pred_check
      _
    $region11: #{tpu_custom_call.1} parent=1 // pred_check_branch
      %35 = sbr.rel (0) target = $region13
    $region12: #{tpu_custom_call.1} parent=1 // pred_region
      %36 = dma.done [#allocation3], 2560
    $region13: #{tpu_custom_call.1} parent=1 // pred_fallthru
      _
    // Predicated region
    $region14: #{tpu_custom_call.1} parent=1 // pred_check
      _
    $region15: #{tpu_custom_call.1} parent=1 // pred_check_branch
      %38 = sbr.rel (0) target = $region17
    $region16: #{tpu_custom_call.1} parent=1 // pred_region
      %39 = dma.done [#allocation6], 10240
    $region17: #{tpu_custom_call.1} parent=1 // pred_fallthru
      _
    %v40 = vld [vmem:[#allocation2] sm:$0x1f]
    %v41 = vld [vmem:[#allocation2 + $0x5] sm:$0x1f]
    %v42 = vld [vmem:[#allocation2 + $0xa] sm:$0x1f]
    %v43 = vld [vmem:[#allocation2 + $0xf] sm:$0x1f]
    %v44 = vld [vmem:[#allocation2 + $0x14] sm:$0x1f]
    %v45 = vld [vmem:[#allocation2 + $0x19] sm:$0x1f]
    %v46 = vld [vmem:[#allocation2 + $0x1e] sm:$0x1f]
    %v47 = vld [vmem:[#allocation2 + $0x23] sm:$0x1f]
    %v48 = vld [vmem:[#allocation2 + $0x28] sm:$0x1f]
    %v49 = vld [vmem:[#allocation2 + $0x2d] sm:$0x1f]
    %v50 = vld [vmem:[#allocation2 + $0x32] sm:$0x1f]
    %v51 = vld [vmem:[#allocation2 + $0x37] sm:$0x1f]
    %v52 = vld [vmem:[#allocation2 + $0x3c] sm:$0x1f]
    %v53 = vld [vmem:[#allocation2 + $0x41] sm:$0x1f]
    %v54 = vld [vmem:[#allocation2 + $0x46] sm:$0x1f]
    %v55 = vld [vmem:[#allocation2 + $0x4b] sm:$0x1f]
    %v56 = vld [vmem:[#allocation2 + $0x50] sm:$0x1f]
    %v57 = vld [vmem:[#allocation2 + $0x55] sm:$0x1f]
    %v58 = vld [vmem:[#allocation2 + $0x5a] sm:$0x1f]
    %v59 = vld [vmem:[#allocation2 + $0x5f] sm:$0x1f]
    %v60 = vld [vmem:[#allocation2 + $0x64] sm:$0x1f]
    %v61 = vld [vmem:[#allocation2 + $0x69] sm:$0x1f]
    %v62 = vld [vmem:[#allocation2 + $0x6e] sm:$0x1f]
    %v63 = vld [vmem:[#allocation2 + $0x73] sm:$0x1f]
    %v64 = vld [vmem:[#allocation2 + $0x78] sm:$0x1f]
    %v65 = vld [vmem:[#allocation2 + $0x7d] sm:$0x1f]
    %v66 = vld [vmem:[#allocation2 + $0x82] sm:$0x1f]
    %v67 = vld [vmem:[#allocation2 + $0x87] sm:$0x1f]
    %v68 = vld [vmem:[#allocation2 + $0x8c] sm:$0x1f]
    %v69 = vld [vmem:[#allocation2 + $0x91] sm:$0x1f]
    %v70 = vld [vmem:[#allocation2 + $0x96] sm:$0x1f]
    %v71 = vld [vmem:[#allocation2 + $0x9b] sm:$0x1f]
    %v72 = vld [vmem:[#allocation5] sm:$0xff]
    %v73 = vld [vmem:[#allocation5 + $0x8] sm:$0xff]
    %v74 = vld [vmem:[#allocation5 + $0x10] sm:$0xff]
    %v75 = vld [vmem:[#allocation5 + $0x18] sm:$0xff]
    %v76 = vld [vmem:[#allocation5 + $0x20] sm:$0xff]
    %v77 = vld [vmem:[#allocation5 + $0x28] sm:$0xff]
    %v78 = vld [vmem:[#allocation5 + $0x30] sm:$0xff]
    %v79 = vld [vmem:[#allocation5 + $0x38] sm:$0xff]
    %v80 = vld [vmem:[#allocation5 + $0x40] sm:$0xff]
    %v81 = vld [vmem:[#allocation5 + $0x48] sm:$0xff]
    %v82 = vld [vmem:[#allocation5 + $0x50] sm:$0xff]
    %v83 = vld [vmem:[#allocation5 + $0x58] sm:$0xff]
    %v84 = vld [vmem:[#allocation5 + $0x60] sm:$0xff]
    %v85 = vld [vmem:[#allocation5 + $0x68] sm:$0xff]
    %v86 = vld [vmem:[#allocation5 + $0x70] sm:$0xff]
    %v87 = vld [vmem:[#allocation5 + $0x78] sm:$0xff]
    %v88 = vld [vmem:[#allocation5 + $0x80] sm:$0xff]
    %v89 = vld [vmem:[#allocation5 + $0x88] sm:$0xff]
    %v90 = vld [vmem:[#allocation5 + $0x90] sm:$0xff]
    %v91 = vld [vmem:[#allocation5 + $0x98] sm:$0xff]
    %v92 = vld [vmem:[#allocation5 + $0xa0] sm:$0xff]
    %v93 = vld [vmem:[#allocation5 + $0xa8] sm:$0xff]
    %v94 = vld [vmem:[#allocation5 + $0xb0] sm:$0xff]
    %v95 = vld [vmem:[#allocation5 + $0xb8] sm:$0xff]
    %v96 = vld [vmem:[#allocation5 + $0xc0] sm:$0xff]
    %v97 = vld [vmem:[#allocation5 + $0xc8] sm:$0xff]
    %v98 = vld [vmem:[#allocation5 + $0xd0] sm:$0xff]
    %v99 = vld [vmem:[#allocation5 + $0xd8] sm:$0xff]
    %v100 = vld [vmem:[#allocation5 + $0xe0] sm:$0xff]
    %v101 = vld [vmem:[#allocation5 + $0xe8] sm:$0xff]
    %v102 = vld [vmem:[#allocation5 + $0xf0] sm:$0xff]
    %v103 = vld [vmem:[#allocation5 + $0xf8] sm:$0xff]
    %v104 = vld [vmem:[#allocation5 + $0x100] sm:$0xff]
    %v105 = vld [vmem:[#allocation5 + $0x108] sm:$0xff]
    %v106 = vld [vmem:[#allocation5 + $0x110] sm:$0xff]
    %v107 = vld [vmem:[#allocation5 + $0x118] sm:$0xff]
    %v108 = vld [vmem:[#allocation5 + $0x120] sm:$0xff]
    %v109 = vld [vmem:[#allocation5 + $0x128] sm:$0xff]
    %v110 = vld [vmem:[#allocation5 + $0x130] sm:$0xff]
    %v111 = vld [vmem:[#allocation5 + $0x138] sm:$0xff]
    %v112 = vld [vmem:[#allocation5 + $0x140] sm:$0xff]
    %v113 = vld [vmem:[#allocation5 + $0x148] sm:$0xff]
    %v114 = vld [vmem:[#allocation5 + $0x150] sm:$0xff]
    %v115 = vld [vmem:[#allocation5 + $0x158] sm:$0xff]
    %v116 = vld [vmem:[#allocation5 + $0x160] sm:$0xff]
    %v117 = vld [vmem:[#allocation5 + $0x168] sm:$0xff]
    %v118 = vld [vmem:[#allocation5 + $0x170] sm:$0xff]
    %v119 = vld [vmem:[#allocation5 + $0x178] sm:$0xff]
    %v120 = vld [vmem:[#allocation5 + $0x180] sm:$0xff]
    %v121 = vld [vmem:[#allocation5 + $0x188] sm:$0xff]
    %v122 = vld [vmem:[#allocation5 + $0x190] sm:$0xff]
    %v123 = vld [vmem:[#allocation5 + $0x198] sm:$0xff]
    %v124 = vld [vmem:[#allocation5 + $0x1a0] sm:$0xff]
    %v125 = vld [vmem:[#allocation5 + $0x1a8] sm:$0xff]
    %v126 = vld [vmem:[#allocation5 + $0x1b0] sm:$0xff]
    %v127 = vld [vmem:[#allocation5 + $0x1b8] sm:$0xff]
    %v128 = vld [vmem:[#allocation5 + $0x1c0] sm:$0xff]
    %v129 = vld [vmem:[#allocation5 + $0x1c8] sm:$0xff]
    %v130 = vld [vmem:[#allocation5 + $0x1d0] sm:$0xff]
    %v131 = vld [vmem:[#allocation5 + $0x1d8] sm:$0xff]
    %v132 = vld [vmem:[#allocation5 + $0x1e0] sm:$0xff]
    %v133 = vld [vmem:[#allocation5 + $0x1e8] sm:$0xff]
    %v134 = vld [vmem:[#allocation5 + $0x1f0] sm:$0xff]
    %v135 = vld [vmem:[#allocation5 + $0x1f8] sm:$0xff]
    %v136 = vld [vmem:[#allocation5 + $0x200] sm:$0xff]
    %v137 = vld [vmem:[#allocation5 + $0x208] sm:$0xff]
    %v138 = vld [vmem:[#allocation5 + $0x210] sm:$0xff]
    %v139 = vld [vmem:[#allocation5 + $0x218] sm:$0xff]
    %v140 = vld [vmem:[#allocation5 + $0x220] sm:$0xff]
    %v141 = vld [vmem:[#allocation5 + $0x228] sm:$0xff]
    %v142 = vld [vmem:[#allocation5 + $0x230] sm:$0xff]
    %v143 = vld [vmem:[#allocation5 + $0x238] sm:$0xff]
    %v144 = vld [vmem:[#allocation5 + $0x240] sm:$0xff]
    %v145 = vld [vmem:[#allocation5 + $0x248] sm:$0xff]
    %v146 = vld [vmem:[#allocation5 + $0x250] sm:$0xff]
    %v147 = vld [vmem:[#allocation5 + $0x258] sm:$0xff]
    %v148 = vld [vmem:[#allocation5 + $0x260] sm:$0xff]
    %v149 = vld [vmem:[#allocation5 + $0x268] sm:$0xff]
    %v150 = vld [vmem:[#allocation5 + $0x270] sm:$0xff]
    %v151 = vld [vmem:[#allocation5 + $0x278] sm:$0xff]
    %v184 = vcombine.low %v40, %v41
    %v185 = vcombine.high %v40, %v41
    %v186 = vcombine.low %v42, %v43
    %v187 = vcombine.high %v42, %v43
    %v188 = vcombine.low %v44, %v45
    %v189 = vcombine.high %v44, %v45
    %v190 = vcombine.low %v46, %v47
    %v191 = vcombine.high %v46, %v47
    %v193 = vunpack.c.l.s4 1966171168
    %v194 = vunpack.c.0.s8 %v193
    %v195 = vlaneseq
    %v196 = vshrl.u32 %v195, 7
    %v197 = vsub.s32 %v194, %v196
    %v198 = vrot.slane %v184, %v197
    %v200 = vunpack.c.l.s4 1966171168
    %v201 = vunpack.c.0.s8 %v200
    %v202 = vlaneseq
    %v203 = vshrl.u32 %v202, 7
    %v204 = vsub.s32 %v201, %v203
    %v205 = vrot.slane %v185, %v204
    %v207 = vunpack.c.l.s4 1966171168
    %v208 = vunpack.c.0.s8 %v207
    %v209 = vlaneseq
    %v210 = vshrl.u32 %v209, 7
    %v211 = vsub.s32 %v208, %v210
    %v212 = vrot.slane %v186, %v211
    %v214 = vunpack.c.l.s4 1966171168
    %v215 = vunpack.c.0.s8 %v214
    %v216 = vlaneseq
    %v217 = vshrl.u32 %v216, 7
    %v218 = vsub.s32 %v215, %v217
    %v219 = vrot.slane %v187, %v218
    %v221 = vunpack.c.l.s4 1966171168
    %v222 = vunpack.c.0.s8 %v221
    %v223 = vlaneseq
    %v224 = vshrl.u32 %v223, 7
    %v225 = vsub.s32 %v222, %v224
    %v226 = vrot.slane %v188, %v225
    %v228 = vunpack.c.l.s4 1966171168
    %v229 = vunpack.c.0.s8 %v228
    %v230 = vlaneseq
    %v231 = vshrl.u32 %v230, 7
    %v232 = vsub.s32 %v229, %v231
    %v233 = vrot.slane %v189, %v232
    %v235 = vunpack.c.l.s4 1966171168
    %v236 = vunpack.c.0.s8 %v235
    %v237 = vlaneseq
    %v238 = vshrl.u32 %v237, 7
    %v239 = vsub.s32 %v236, %v238
    %v240 = vrot.slane %v190, %v239
    %v242 = vunpack.c.l.s4 1966171168
    %v243 = vunpack.c.0.s8 %v242
    %v244 = vlaneseq
    %v245 = vshrl.u32 %v244, 7
    %v246 = vsub.s32 %v243, %v245
    %v247 = vrot.slane %v191, %v246
    %v248 = vcombine.low %v198, %v212
    %v249 = vcombine.high %v198, %v212
    %v250 = vcombine.low %v205, %v219
    %v251 = vcombine.low %v226, %v240
    %v252 = vcombine.high %v226, %v240
    %v253 = vcombine.low %v233, %v247
    %v255 = vunpack.c.l.s4 1966171168
    %v256 = vunpack.c.0.s8 %v255
    %v257 = vlaneseq
    %v258 = vshrl.u32 %v257, 7
    %v259 = vsub.s32 %v256, %v258
    %v260 = vrot.slane %v248, %v259
    %v262 = vunpack.c.l.s4 1966171168
    %v263 = vunpack.c.0.s8 %v262
    %v264 = vlaneseq
    %v265 = vshrl.u32 %v264, 7
    %v266 = vsub.s32 %v263, %v265
    %v267 = vrot.slane %v250, %v266
    %v269 = vunpack.c.l.s4 1966171168
    %v270 = vunpack.c.0.s8 %v269
    %v271 = vlaneseq
    %v272 = vshrl.u32 %v271, 7
    %v273 = vsub.s32 %v270, %v272
    %v274 = vrot.slane %v249, %v273
    %v276 = vunpack.c.l.s4 1966171168
    %v277 = vunpack.c.0.s8 %v276
    %v278 = vlaneseq
    %v279 = vshrl.u32 %v278, 7
    %v280 = vsub.s32 %v277, %v279
    %v281 = vrot.slane %v251, %v280
    %v283 = vunpack.c.l.s4 1966171168
    %v284 = vunpack.c.0.s8 %v283
    %v285 = vlaneseq
    %v286 = vshrl.u32 %v285, 7
    %v287 = vsub.s32 %v284, %v286
    %v288 = vrot.slane %v253, %v287
    %v290 = vunpack.c.l.s4 1966171168
    %v291 = vunpack.c.0.s8 %v290
    %v292 = vlaneseq
    %v293 = vshrl.u32 %v292, 7
    %v294 = vsub.s32 %v291, %v293
    %v295 = vrot.slane %v252, %v294
    %v296 = vcombine.low %v260, %v281
    %v297 = vcombine.high %v260, %v281
    %v298 = vcombine.low %v267, %v288
    %v299 = vcombine.low %v274, %v295
    %v300 = vcombine.high %v274, %v295
    %v301 = vcombine.low %v48, %v49
    %v302 = vcombine.high %v48, %v49
    %v303 = vcombine.low %v50, %v51
    %v304 = vcombine.high %v50, %v51
    %v305 = vcombine.low %v52, %v53
    %v306 = vcombine.high %v52, %v53
    %v307 = vcombine.low %v54, %v55
    %v308 = vcombine.high %v54, %v55
    %v310 = vunpack.c.l.s4 1966171168
    %v311 = vunpack.c.0.s8 %v310
    %v312 = vlaneseq
    %v313 = vshrl.u32 %v312, 7
    %v314 = vsub.s32 %v311, %v313
    %v315 = vrot.slane %v301, %v314
    %v317 = vunpack.c.l.s4 1966171168
    %v318 = vunpack.c.0.s8 %v317
    %v319 = vlaneseq
    %v320 = vshrl.u32 %v319, 7
    %v321 = vsub.s32 %v318, %v320
    %v322 = vrot.slane %v302, %v321
    %v324 = vunpack.c.l.s4 1966171168
    %v325 = vunpack.c.0.s8 %v324
    %v326 = vlaneseq
    %v327 = vshrl.u32 %v326, 7
    %v328 = vsub.s32 %v325, %v327
    %v329 = vrot.slane %v303, %v328
    %v331 = vunpack.c.l.s4 1966171168
    %v332 = vunpack.c.0.s8 %v331
    %v333 = vlaneseq
    %v334 = vshrl.u32 %v333, 7
    %v335 = vsub.s32 %v332, %v334
    %v336 = vrot.slane %v304, %v335
    %v338 = vunpack.c.l.s4 1966171168
    %v339 = vunpack.c.0.s8 %v338
    %v340 = vlaneseq
    %v341 = vshrl.u32 %v340, 7
    %v342 = vsub.s32 %v339, %v341
    %v343 = vrot.slane %v305, %v342
    %v345 = vunpack.c.l.s4 1966171168
    %v346 = vunpack.c.0.s8 %v345
    %v347 = vlaneseq
    %v348 = vshrl.u32 %v347, 7
    %v349 = vsub.s32 %v346, %v348
    %v350 = vrot.slane %v306, %v349
    %v352 = vunpack.c.l.s4 1966171168
    %v353 = vunpack.c.0.s8 %v352
    %v354 = vlaneseq
    %v355 = vshrl.u32 %v354, 7
    %v356 = vsub.s32 %v353, %v355
    %v357 = vrot.slane %v307, %v356
    %v359 = vunpack.c.l.s4 1966171168
    %v360 = vunpack.c.0.s8 %v359
    %v361 = vlaneseq
    %v362 = vshrl.u32 %v361, 7
    %v363 = vsub.s32 %v360, %v362
    %v364 = vrot.slane %v308, %v363
    %v365 = vcombine.low %v315, %v329
    %v366 = vcombine.high %v315, %v329
    %v367 = vcombine.low %v322, %v336
    %v368 = vcombine.low %v343, %v357
    %v369 = vcombine.high %v343, %v357
    %v370 = vcombine.low %v350, %v364
    %v372 = vunpack.c.l.s4 1966171168
    %v373 = vunpack.c.0.s8 %v372
    %v374 = vlaneseq
    %v375 = vshrl.u32 %v374, 7
    %v376 = vsub.s32 %v373, %v375
    %v377 = vrot.slane %v365, %v376
    %v379 = vunpack.c.l.s4 1966171168
    %v380 = vunpack.c.0.s8 %v379
    %v381 = vlaneseq
    %v382 = vshrl.u32 %v381, 7
    %v383 = vsub.s32 %v380, %v382
    %v384 = vrot.slane %v367, %v383
    %v386 = vunpack.c.l.s4 1966171168
    %v387 = vunpack.c.0.s8 %v386
    %v388 = vlaneseq
    %v389 = vshrl.u32 %v388, 7
    %v390 = vsub.s32 %v387, %v389
    %v391 = vrot.slane %v366, %v390
    %v393 = vunpack.c.l.s4 1966171168
    %v394 = vunpack.c.0.s8 %v393
    %v395 = vlaneseq
    %v396 = vshrl.u32 %v395, 7
    %v397 = vsub.s32 %v394, %v396
    %v398 = vrot.slane %v368, %v397
    %v400 = vunpack.c.l.s4 1966171168
    %v401 = vunpack.c.0.s8 %v400
    %v402 = vlaneseq
    %v403 = vshrl.u32 %v402, 7
    %v404 = vsub.s32 %v401, %v403
    %v405 = vrot.slane %v370, %v404
    %v407 = vunpack.c.l.s4 1966171168
    %v408 = vunpack.c.0.s8 %v407
    %v409 = vlaneseq
    %v410 = vshrl.u32 %v409, 7
    %v411 = vsub.s32 %v408, %v410
    %v412 = vrot.slane %v369, %v411
    %v413 = vcombine.low %v377, %v398
    %v414 = vcombine.high %v377, %v398
    %v415 = vcombine.low %v384, %v405
    %v416 = vcombine.low %v391, %v412
    %v417 = vcombine.high %v391, %v412
    %v418 = vcombine.low %v56, %v57
    %v419 = vcombine.high %v56, %v57
    %v420 = vcombine.low %v58, %v59
    %v421 = vcombine.high %v58, %v59
    %v422 = vcombine.low %v60, %v61
    %v423 = vcombine.high %v60, %v61
    %v424 = vcombine.low %v62, %v63
    %v425 = vcombine.high %v62, %v63
    %v427 = vunpack.c.l.s4 1966171168
    %v428 = vunpack.c.0.s8 %v427
    %v429 = vlaneseq
    %v430 = vshrl.u32 %v429, 7
    %v431 = vsub.s32 %v428, %v430
    %v432 = vrot.slane %v418, %v431
    %v434 = vunpack.c.l.s4 1966171168
    %v435 = vunpack.c.0.s8 %v434
    %v436 = vlaneseq
    %v437 = vshrl.u32 %v436, 7
    %v438 = vsub.s32 %v435, %v437
    %v439 = vrot.slane %v419, %v438
    %v441 = vunpack.c.l.s4 1966171168
    %v442 = vunpack.c.0.s8 %v441
    %v443 = vlaneseq
    %v444 = vshrl.u32 %v443, 7
    %v445 = vsub.s32 %v442, %v444
    %v446 = vrot.slane %v420, %v445
    %v448 = vunpack.c.l.s4 1966171168
    %v449 = vunpack.c.0.s8 %v448
    %v450 = vlaneseq
    %v451 = vshrl.u32 %v450, 7
    %v452 = vsub.s32 %v449, %v451
    %v453 = vrot.slane %v421, %v452
    %v455 = vunpack.c.l.s4 1966171168
    %v456 = vunpack.c.0.s8 %v455
    %v457 = vlaneseq
    %v458 = vshrl.u32 %v457, 7
    %v459 = vsub.s32 %v456, %v458
    %v460 = vrot.slane %v422, %v459
    %v462 = vunpack.c.l.s4 1966171168
    %v463 = vunpack.c.0.s8 %v462
    %v464 = vlaneseq
    %v465 = vshrl.u32 %v464, 7
    %v466 = vsub.s32 %v463, %v465
    %v467 = vrot.slane %v423, %v466
    %v469 = vunpack.c.l.s4 1966171168
    %v470 = vunpack.c.0.s8 %v469
    %v471 = vlaneseq
    %v472 = vshrl.u32 %v471, 7
    %v473 = vsub.s32 %v470, %v472
    %v474 = vrot.slane %v424, %v473
    %v476 = vunpack.c.l.s4 1966171168
    %v477 = vunpack.c.0.s8 %v476
    %v478 = vlaneseq
    %v479 = vshrl.u32 %v478, 7
    %v480 = vsub.s32 %v477, %v479
    %v481 = vrot.slane %v425, %v480
    %v482 = vcombine.low %v432, %v446
    %v483 = vcombine.high %v432, %v446
    %v484 = vcombine.low %v439, %v453
    %v485 = vcombine.low %v460, %v474
    %v486 = vcombine.high %v460, %v474
    %v487 = vcombine.low %v467, %v481
    %v489 = vunpack.c.l.s4 1966171168
    %v490 = vunpack.c.0.s8 %v489
    %v491 = vlaneseq
    %v492 = vshrl.u32 %v491, 7
    %v493 = vsub.s32 %v490, %v492
    %v494 = vrot.slane %v482, %v493
    %v496 = vunpack.c.l.s4 1966171168
    %v497 = vunpack.c.0.s8 %v496
    %v498 = vlaneseq
    %v499 = vshrl.u32 %v498, 7
    %v500 = vsub.s32 %v497, %v499
    %v501 = vrot.slane %v484, %v500
    %v503 = vunpack.c.l.s4 1966171168
    %v504 = vunpack.c.0.s8 %v503
    %v505 = vlaneseq
    %v506 = vshrl.u32 %v505, 7
    %v507 = vsub.s32 %v504, %v506
    %v508 = vrot.slane %v483, %v507
    %v510 = vunpack.c.l.s4 1966171168
    %v511 = vunpack.c.0.s8 %v510
    %v512 = vlaneseq
    %v513 = vshrl.u32 %v512, 7
    %v514 = vsub.s32 %v511, %v513
    %v515 = vrot.slane %v485, %v514
    %v517 = vunpack.c.l.s4 1966171168
    %v518 = vunpack.c.0.s8 %v517
    %v519 = vlaneseq
    %v520 = vshrl.u32 %v519, 7
    %v521 = vsub.s32 %v518, %v520
    %v522 = vrot.slane %v487, %v521
    %v524 = vunpack.c.l.s4 1966171168
    %v525 = vunpack.c.0.s8 %v524
    %v526 = vlaneseq
    %v527 = vshrl.u32 %v526, 7
    %v528 = vsub.s32 %v525, %v527
    %v529 = vrot.slane %v486, %v528
    %v530 = vcombine.low %v494, %v515
    %v531 = vcombine.high %v494, %v515
    %v532 = vcombine.low %v501, %v522
    %v533 = vcombine.low %v508, %v529
    %v534 = vcombine.high %v508, %v529
    %v535 = vcombine.low %v64, %v65
    %v536 = vcombine.high %v64, %v65
    %v537 = vcombine.low %v66, %v67
    %v538 = vcombine.high %v66, %v67
    %v539 = vcombine.low %v68, %v69
    %v540 = vcombine.high %v68, %v69
    %v541 = vcombine.low %v70, %v71
    %v542 = vcombine.high %v70, %v71
    %v544 = vunpack.c.l.s4 1966171168
    %v545 = vunpack.c.0.s8 %v544
    %v546 = vlaneseq
    %v547 = vshrl.u32 %v546, 7
    %v548 = vsub.s32 %v545, %v547
    %v549 = vrot.slane %v535, %v548
    %v551 = vunpack.c.l.s4 1966171168
    %v552 = vunpack.c.0.s8 %v551
    %v553 = vlaneseq
    %v554 = vshrl.u32 %v553, 7
    %v555 = vsub.s32 %v552, %v554
    %v556 = vrot.slane %v536, %v555
    %v558 = vunpack.c.l.s4 1966171168
    %v559 = vunpack.c.0.s8 %v558
    %v560 = vlaneseq
    %v561 = vshrl.u32 %v560, 7
    %v562 = vsub.s32 %v559, %v561
    %v563 = vrot.slane %v537, %v562
    %v565 = vunpack.c.l.s4 1966171168
    %v566 = vunpack.c.0.s8 %v565
    %v567 = vlaneseq
    %v568 = vshrl.u32 %v567, 7
    %v569 = vsub.s32 %v566, %v568
    %v570 = vrot.slane %v538, %v569
    %v572 = vunpack.c.l.s4 1966171168
    %v573 = vunpack.c.0.s8 %v572
    %v574 = vlaneseq
    %v575 = vshrl.u32 %v574, 7
    %v576 = vsub.s32 %v573, %v575
    %v577 = vrot.slane %v539, %v576
    %v579 = vunpack.c.l.s4 1966171168
    %v580 = vunpack.c.0.s8 %v579
    %v581 = vlaneseq
    %v582 = vshrl.u32 %v581, 7
    %v583 = vsub.s32 %v580, %v582
    %v584 = vrot.slane %v540, %v583
    %v586 = vunpack.c.l.s4 1966171168
    %v587 = vunpack.c.0.s8 %v586
    %v588 = vlaneseq
    %v589 = vshrl.u32 %v588, 7
    %v590 = vsub.s32 %v587, %v589
    %v591 = vrot.slane %v541, %v590
    %v593 = vunpack.c.l.s4 1966171168
    %v594 = vunpack.c.0.s8 %v593
    %v595 = vlaneseq
    %v596 = vshrl.u32 %v595, 7
    %v597 = vsub.s32 %v594, %v596
    %v598 = vrot.slane %v542, %v597
    %v599 = vcombine.low %v549, %v563
    %v600 = vcombine.high %v549, %v563
    %v601 = vcombine.low %v556, %v570
    %v602 = vcombine.low %v577, %v591
    %v603 = vcombine.high %v577, %v591
    %v604 = vcombine.low %v584, %v598
    %v606 = vunpack.c.l.s4 1966171168
    %v607 = vunpack.c.0.s8 %v606
    %v608 = vlaneseq
    %v609 = vshrl.u32 %v608, 7
    %v610 = vsub.s32 %v607, %v609
    %v611 = vrot.slane %v599, %v610
    %v613 = vunpack.c.l.s4 1966171168
    %v614 = vunpack.c.0.s8 %v613
    %v615 = vlaneseq
    %v616 = vshrl.u32 %v615, 7
    %v617 = vsub.s32 %v614, %v616
    %v618 = vrot.slane %v601, %v617
    %v620 = vunpack.c.l.s4 1966171168
    %v621 = vunpack.c.0.s8 %v620
    %v622 = vlaneseq
    %v623 = vshrl.u32 %v622, 7
    %v624 = vsub.s32 %v621, %v623
    %v625 = vrot.slane %v600, %v624
    %v627 = vunpack.c.l.s4 1966171168
    %v628 = vunpack.c.0.s8 %v627
    %v629 = vlaneseq
    %v630 = vshrl.u32 %v629, 7
    %v631 = vsub.s32 %v628, %v630
    %v632 = vrot.slane %v602, %v631
    %v634 = vunpack.c.l.s4 1966171168
    %v635 = vunpack.c.0.s8 %v634
    %v636 = vlaneseq
    %v637 = vshrl.u32 %v636, 7
    %v638 = vsub.s32 %v635, %v637
    %v639 = vrot.slane %v604, %v638
    %v641 = vunpack.c.l.s4 1966171168
    %v642 = vunpack.c.0.s8 %v641
    %v643 = vlaneseq
    %v644 = vshrl.u32 %v643, 7
    %v645 = vsub.s32 %v642, %v644
    %v646 = vrot.slane %v603, %v645
    %v647 = vcombine.low %v611, %v632
    %v648 = vcombine.high %v611, %v632
    %v649 = vcombine.low %v618, %v639
    %v650 = vcombine.low %v625, %v646
    %v651 = vcombine.high %v625, %v646
    %672 = vmatprep.subr.mxu0 0.0
    %v673 = vand.u32 %v72, 4294901760
    %674 = vmatpush1.msra.mxu0 %v673
    %675 = vmatprep.subr.mxu0 0.0
    %v676 = vand.u32 %v73, 4294901760
    %677 = vmatpush1.msra.mxu0 %v676
    %678 = vmatprep.subr.mxu0 0.0
    %v679 = vand.u32 %v74, 4294901760
    %680 = vmatpush1.msra.mxu0 %v679
    %681 = vmatprep.subr.mxu0 0.0
    %v682 = vand.u32 %v75, 4294901760
    %683 = vmatpush1.msra.mxu0 %v682
    %684 = vmatprep.subr.mxu0 0.0
    %v685 = vand.u32 %v76, 4294901760
    %686 = vmatpush1.msra.mxu0 %v685
    %687 = vmatprep.subr.mxu0 0.0
    %v688 = vand.u32 %v77, 4294901760
    %689 = vmatpush1.msra.mxu0 %v688
    %690 = vmatprep.subr.mxu0 0.0
    %v691 = vand.u32 %v78, 4294901760
    %692 = vmatpush1.msra.mxu0 %v691
    %693 = vmatprep.subr.mxu0 0.0
    %v694 = vand.u32 %v79, 4294901760
    %695 = vmatpush1.msra.mxu0 %v694
    %696 = vmatprep.subr.mxu0 0.0
    %v697 = vand.u32 %v80, 4294901760
    %698 = vmatpush1.msra.mxu0 %v697
    %699 = vmatprep.subr.mxu0 0.0
    %v700 = vand.u32 %v81, 4294901760
    %701 = vmatpush1.msra.mxu0 %v700
    %702 = vmatprep.subr.mxu0 0.0
    %v703 = vand.u32 %v82, 4294901760
    %704 = vmatpush1.msra.mxu0 %v703
    %705 = vmatprep.subr.mxu0 0.0
    %v706 = vand.u32 %v83, 4294901760
    %707 = vmatpush1.msra.mxu0 %v706
    %708 = vmatprep.subr.mxu0 0.0
    %v709 = vand.u32 %v84, 4294901760
    %710 = vmatpush1.msra.mxu0 %v709
    %711 = vmatprep.subr.mxu0 0.0
    %v712 = vand.u32 %v85, 4294901760
    %713 = vmatpush1.msra.mxu0 %v712
    %714 = vmatprep.subr.mxu0 0.0
    %v715 = vand.u32 %v86, 4294901760
    %716 = vmatpush1.msra.mxu0 %v715
    %717 = vmatprep.subr.mxu0 0.0
    %v718 = vand.u32 %v87, 4294901760
    %719 = vmatpush1.msra.mxu0 %v718
    %720 = vmatprep.subr.mxu0 0.0
    %v721 = vand.u32 %v88, 4294901760
    %722 = vmatpush1.msra.mxu0 %v721
    %723 = vmatprep.subr.mxu0 0.0
    %v724 = vand.u32 %v89, 4294901760
    %725 = vmatpush1.msra.mxu0 %v724
    %726 = vmatprep.subr.mxu0 0.0
    %v727 = vand.u32 %v90, 4294901760
    %728 = vmatpush1.msra.mxu0 %v727
    %729 = vmatprep.subr.mxu0 0.0
    %v730 = vand.u32 %v91, 4294901760
    %731 = vmatpush1.msra.mxu0 %v730
    %732 = vmatprep.subr.mxu0 0.0
    %v733 = vand.u32 %v92, 4294901760
    %734 = vmatpush1.msra.mxu0 %v733
    %735 = vmatprep.subr.mxu0 0.0
    %v736 = vand.u32 %v93, 4294901760
    %737 = vmatpush1.msra.mxu0 %v736
    %738 = vmatprep.subr.mxu0 0.0
    %v739 = vand.u32 %v94, 4294901760
    %740 = vmatpush1.msra.mxu0 %v739
    %741 = vmatprep.subr.mxu0 0.0
    %v742 = vand.u32 %v95, 4294901760
    %743 = vmatpush1.msra.mxu0 %v742
    %744 = vmatprep.subr.mxu0 0.0
    %v745 = vand.u32 %v96, 4294901760
    %746 = vmatpush1.msra.mxu0 %v745
    %747 = vmatprep.subr.mxu0 0.0
    %v748 = vand.u32 %v97, 4294901760
    %749 = vmatpush1.msra.mxu0 %v748
    %750 = vmatprep.subr.mxu0 0.0
    %v751 = vand.u32 %v98, 4294901760
    %752 = vmatpush1.msra.mxu0 %v751
    %753 = vmatprep.subr.mxu0 0.0
    %v754 = vand.u32 %v99, 4294901760
    %755 = vmatpush1.msra.mxu0 %v754
    %756 = vmatprep.subr.mxu0 0.0
    %v757 = vand.u32 %v100, 4294901760
    %758 = vmatpush1.msra.mxu0 %v757
    %759 = vmatprep.subr.mxu0 0.0
    %v760 = vand.u32 %v101, 4294901760
    %761 = vmatpush1.msra.mxu0 %v760
    %762 = vmatprep.subr.mxu0 0.0
    %v763 = vand.u32 %v102, 4294901760
    %764 = vmatpush1.msra.mxu0 %v763
    %765 = vmatprep.subr.mxu0 0.0
    %v766 = vand.u32 %v103, 4294901760
    %767 = vmatpush1.msra.mxu0 %v766
    %v768 = vand.u32 %v299, 4294901760
    %v769 = vsub.f32 %v299, %v768
    %v770 = vand.u32 %v769, 4294901760
    %v771 = vsub.f32 %v769, %v770
    %v772 = vand.u32 %v771, 4294901760
    %773 = vmatprep.mubr.f32.mxu0 %v772
    %v774 = vand.u32 %v296, 4294901760
    %v775 = vsub.f32 %v296, %v774
    %v776 = vand.u32 %v775, 4294901760
    %v777 = vsub.f32 %v775, %v776
    %v778 = vand.u32 %v777, 4294901760
    %779 = vmatmul.mubr.f32.gmra.mrb[0].mxu0 %v778
    %v780 = vpop.f32.mrb[0].mxu0
    %v781 = vadd.f32 0.0, %v780
    %v782 = vpop.f32.mrb[0].mxu0
    %v783 = vand.u32 %v416, 4294901760
    %v784 = vsub.f32 %v416, %v783
    %v785 = vand.u32 %v784, 4294901760
    %v786 = vsub.f32 %v784, %v785
    %v787 = vand.u32 %v786, 4294901760
    %788 = vmatprep.mubr.f32.mxu0 %v787
    %v789 = vand.u32 %v413, 4294901760
    %v790 = vsub.f32 %v413, %v789
    %v791 = vand.u32 %v790, 4294901760
    %v792 = vsub.f32 %v790, %v791
    %v793 = vand.u32 %v792, 4294901760
    %794 = vmatmul.mubr.f32.gmra.mrb[0].mxu0 %v793
    %v795 = vpop.f32.mrb[0].mxu0
    %v796 = vadd.f32 0.0, %v795
    %v797 = vpop.f32.mrb[0].mxu0
    %v798 = vand.u32 %v533, 4294901760
    %v799 = vsub.f32 %v533, %v798
    %v800 = vand.u32 %v799, 4294901760
    %v801 = vsub.f32 %v799, %v800
    %v802 = vand.u32 %v801, 4294901760
    %803 = vmatprep.mubr.f32.mxu0 %v802
    %v804 = vand.u32 %v530, 4294901760
    %v805 = vsub.f32 %v530, %v804
    %v806 = vand.u32 %v805, 4294901760
    %v807 = vsub.f32 %v805, %v806
    %v808 = vand.u32 %v807, 4294901760
    %809 = vmatmul.mubr.f32.gmra.mrb[0].mxu0 %v808
    %v810 = vpop.f32.mrb[0].mxu0
    %v811 = vadd.f32 0.0, %v810
    %v812 = vpop.f32.mrb[0].mxu0
    %v813 = vand.u32 %v650, 4294901760
    %v814 = vsub.f32 %v650, %v813
    %v815 = vand.u32 %v814, 4294901760
    %v816 = vsub.f32 %v814, %v815
    %v817 = vand.u32 %v816, 4294901760
    %818 = vmatprep.mubr.f32.mxu0 %v817
    %v819 = vand.u32 %v647, 4294901760
    %v820 = vsub.f32 %v647, %v819
    %v821 = vand.u32 %v820, 4294901760
    %v822 = vsub.f32 %v820, %v821
    %v823 = vand.u32 %v822, 4294901760
    %824 = vmatmul.mubr.f32.gmra.mrb[0].mxu0 %v823
    %v825 = vpop.f32.mrb[0].mxu0
    %v826 = vadd.f32 0.0, %v825
    %v827 = vpop.f32.mrb[0].mxu0
    %828 = vdwg.mxu0
    %829 = vmatprep.subr.mxu0 0.0
    %v830 = vand.u32 %v72, 4294901760
    %v831 = vsub.f32 %v72, %v830
    %v832 = vand.u32 %v831, 4294901760
    %v833 = vsub.f32 %v831, %v832
    %v834 = vand.u32 %v833, 4294901760
    %835 = vmatpush1.msra.mxu0 %v834
    %836 = vmatprep.subr.mxu0 0.0
    %v837 = vand.u32 %v73, 4294901760
    %v838 = vsub.f32 %v73, %v837
    %v839 = vand.u32 %v838, 4294901760
    %v840 = vsub.f32 %v838, %v839
    %v841 = vand.u32 %v840, 4294901760
    %842 = vmatpush1.msra.mxu0 %v841
    %843 = vmatprep.subr.mxu0 0.0
    %v844 = vand.u32 %v74, 4294901760
    %v845 = vsub.f32 %v74, %v844
    %v846 = vand.u32 %v845, 4294901760
    %v847 = vsub.f32 %v845, %v846
    %v848 = vand.u32 %v847, 4294901760
    %849 = vmatpush1.msra.mxu0 %v848
    %850 = vmatprep.subr.mxu0 0.0
    %v851 = vand.u32 %v75, 4294901760
    %v852 = vsub.f32 %v75, %v851
    %v853 = vand.u32 %v852, 4294901760
    %v854 = vsub.f32 %v852, %v853
    %v855 = vand.u32 %v854, 4294901760
    %856 = vmatpush1.msra.mxu0 %v855
    %857 = vmatprep.subr.mxu0 0.0
    %v858 = vand.u32 %v76, 4294901760
    %v859 = vsub.f32 %v76, %v858
    %v860 = vand.u32 %v859, 4294901760
    %v861 = vsub.f32 %v859, %v860
    %v862 = vand.u32 %v861, 4294901760
    %863 = vmatpush1.msra.mxu0 %v862
    %864 = vmatprep.subr.mxu0 0.0
    %v865 = vand.u32 %v77, 4294901760
    %v866 = vsub.f32 %v77, %v865
    %v867 = vand.u32 %v866, 4294901760
    %v868 = vsub.f32 %v866, %v867
    %v869 = vand.u32 %v868, 4294901760
    %870 = vmatpush1.msra.mxu0 %v869
    %871 = vmatprep.subr.mxu0 0.0
    %v872 = vand.u32 %v78, 4294901760
    %v873 = vsub.f32 %v78, %v872
    %v874 = vand.u32 %v873, 4294901760
    %v875 = vsub.f32 %v873, %v874
    %v876 = vand.u32 %v875, 4294901760
    %877 = vmatpush1.msra.mxu0 %v876
    %878 = vmatprep.subr.mxu0 0.0
    %v879 = vand.u32 %v79, 4294901760
    %v880 = vsub.f32 %v79, %v879
    %v881 = vand.u32 %v880, 4294901760
    %v882 = vsub.f32 %v880, %v881
    %v883 = vand.u32 %v882, 4294901760
    %884 = vmatpush1.msra.mxu0 %v883
    %885 = vmatprep.subr.mxu0 0.0
    %v886 = vand.u32 %v80, 4294901760
    %v887 = vsub.f32 %v80, %v886
    %v888 = vand.u32 %v887, 4294901760
    %v889 = vsub.f32 %v887, %v888
    %v890 = vand.u32 %v889, 4294901760
    %891 = vmatpush1.msra.mxu0 %v890
    %892 = vmatprep.subr.mxu0 0.0
    %v893 = vand.u32 %v81, 4294901760
    %v894 = vsub.f32 %v81, %v893
    %v895 = vand.u32 %v894, 4294901760
    %v896 = vsub.f32 %v894, %v895
    %v897 = vand.u32 %v896, 4294901760
    %898 = vmatpush1.msra.mxu0 %v897
    %899 = vmatprep.subr.mxu0 0.0
    %v900 = vand.u32 %v82, 4294901760
    %v901 = vsub.f32 %v82, %v900
    %v902 = vand.u32 %v901, 4294901760
    %v903 = vsub.f32 %v901, %v902
    %v904 = vand.u32 %v903, 4294901760
    %905 = vmatpush1.msra.mxu0 %v904
    %906 = vmatprep.subr.mxu0 0.0
    %v907 = vand.u32 %v83, 4294901760
    %v908 = vsub.f32 %v83, %v907
    %v909 = vand.u32 %v908, 4294901760
    %v910 = vsub.f32 %v908, %v909
    %v911 = vand.u32 %v910, 4294901760
    %912 = vmatpush1.msra.mxu0 %v911
    %913 = vmatprep.subr.mxu0 0.0
    %v914 = vand.u32 %v84, 4294901760
    %v915 = vsub.f32 %v84, %v914
    %v916 = vand.u32 %v915, 4294901760
    %v917 = vsub.f32 %v915, %v916
    %v918 = vand.u32 %v917, 4294901760
    %919 = vmatpush1.msra.mxu0 %v918
    %920 = vmatprep.subr.mxu0 0.0
    %v921 = vand.u32 %v85, 4294901760
    %v922 = vsub.f32 %v85, %v921
    %v923 = vand.u32 %v922, 4294901760
    %v924 = vsub.f32 %v922, %v923
    %v925 = vand.u32 %v924, 4294901760
    %926 = vmatpush1.msra.mxu0 %v925
    %927 = vmatprep.subr.mxu0 0.0
    %v928 = vand.u32 %v86, 4294901760
    %v929 = vsub.f32 %v86, %v928
    %v930 = vand.u32 %v929, 4294901760
    %v931 = vsub.f32 %v929, %v930
    %v932 = vand.u32 %v931, 4294901760
    %933 = vmatpush1.msra.mxu0 %v932
    %934 = vmatprep.subr.mxu0 0.0
    %v935 = vand.u32 %v87, 4294901760
    %v936 = vsub.f32 %v87, %v935
    %v937 = vand.u32 %v936, 4294901760
    %v938 = vsub.f32 %v936, %v937
    %v939 = vand.u32 %v938, 4294901760
    %940 = vmatpush1.msra.mxu0 %v939
    %941 = vmatprep.subr.mxu0 0.0
    %v942 = vand.u32 %v88, 4294901760
    %v943 = vsub.f32 %v88, %v942
    %v944 = vand.u32 %v943, 4294901760
    %v945 = vsub.f32 %v943, %v944
    %v946 = vand.u32 %v945, 4294901760
    %947 = vmatpush1.msra.mxu0 %v946
    %948 = vmatprep.subr.mxu0 0.0
    %v949 = vand.u32 %v89, 4294901760
    %v950 = vsub.f32 %v89, %v949
    %v951 = vand.u32 %v950, 4294901760
    %v952 = vsub.f32 %v950, %v951
    %v953 = vand.u32 %v952, 4294901760
    %954 = vmatpush1.msra.mxu0 %v953
    %955 = vmatprep.subr.mxu0 0.0
    %v956 = vand.u32 %v90, 4294901760
    %v957 = vsub.f32 %v90, %v956
    %v958 = vand.u32 %v957, 4294901760
    %v959 = vsub.f32 %v957, %v958
    %v960 = vand.u32 %v959, 4294901760
    %961 = vmatpush1.msra.mxu0 %v960
    %962 = vmatprep.subr.mxu0 0.0
    %v963 = vand.u32 %v91, 4294901760
    %v964 = vsub.f32 %v91, %v963
    %v965 = vand.u32 %v964, 4294901760
    %v966 = vsub.f32 %v964, %v965
    %v967 = vand.u32 %v966, 4294901760
    %968 = vmatpush1.msra.mxu0 %v967
    %969 = vmatprep.subr.mxu0 0.0
    %v970 = vand.u32 %v92, 4294901760
    %v971 = vsub.f32 %v92, %v970
    %v972 = vand.u32 %v971, 4294901760
    %v973 = vsub.f32 %v971, %v972
    %v974 = vand.u32 %v973, 4294901760
    %975 = vmatpush1.msra.mxu0 %v974
    %976 = vmatprep.subr.mxu0 0.0
    %v977 = vand.u32 %v93, 4294901760
    %v978 = vsub.f32 %v93, %v977
    %v979 = vand.u32 %v978, 4294901760
    %v980 = vsub.f32 %v978, %v979
    %v981 = vand.u32 %v980, 4294901760
    %982 = vmatpush1.msra.mxu0 %v981
    %983 = vmatprep.subr.mxu0 0.0
    %v984 = vand.u32 %v94, 4294901760
    %v985 = vsub.f32 %v94, %v984
    %v986 = vand.u32 %v985, 4294901760
    %v987 = vsub.f32 %v985, %v986
    %v988 = vand.u32 %v987, 4294901760
    %989 = vmatpush1.msra.mxu0 %v988
    %990 = vmatprep.subr.mxu0 0.0
    %v991 = vand.u32 %v95, 4294901760
    %v992 = vsub.f32 %v95, %v991
    %v993 = vand.u32 %v992, 4294901760
    %v994 = vsub.f32 %v992, %v993
    %v995 = vand.u32 %v994, 4294901760
    %996 = vmatpush1.msra.mxu0 %v995
    %997 = vmatprep.subr.mxu0 0.0
    %v998 = vand.u32 %v96, 4294901760
    %v999 = vsub.f32 %v96, %v998
    %v1000 = vand.u32 %v999, 4294901760
    %v1001 = vsub.f32 %v999, %v1000
    %v1002 = vand.u32 %v1001, 4294901760
    %1003 = vmatpush1.msra.mxu0 %v1002
    %1004 = vmatprep.subr.mxu0 0.0
    %v1005 = vand.u32 %v97, 4294901760
    %v1006 = vsub.f32 %v97, %v1005
    %v1007 = vand.u32 %v1006, 4294901760
    %v1008 = vsub.f32 %v1006, %v1007
    %v1009 = vand.u32 %v1008, 4294901760
    %1010 = vmatpush1.msra.mxu0 %v1009
    %1011 = vmatprep.subr.mxu0 0.0
    %v1012 = vand.u32 %v98, 4294901760
    %v1013 = vsub.f32 %v98, %v1012
    %v1014 = vand.u32 %v1013, 4294901760
    %v1015 = vsub.f32 %v1013, %v1014
    %v1016 = vand.u32 %v1015, 4294901760
    %1017 = vmatpush1.msra.mxu0 %v1016
    %1018 = vmatprep.subr.mxu0 0.0
    %v1019 = vand.u32 %v99, 4294901760
    %v1020 = vsub.f32 %v99, %v1019
    %v1021 = vand.u32 %v1020, 4294901760
    %v1022 = vsub.f32 %v1020, %v1021
    %v1023 = vand.u32 %v1022, 4294901760
    %1024 = vmatpush1.msra.mxu0 %v1023
    %1025 = vmatprep.subr.mxu0 0.0
    %v1026 = vand.u32 %v100, 4294901760
    %v1027 = vsub.f32 %v100, %v1026
    %v1028 = vand.u32 %v1027, 4294901760
    %v1029 = vsub.f32 %v1027, %v1028
    %v1030 = vand.u32 %v1029, 4294901760
    %1031 = vmatpush1.msra.mxu0 %v1030
    %1032 = vmatprep.subr.mxu0 0.0
    %v1033 = vand.u32 %v101, 4294901760
    %v1034 = vsub.f32 %v101, %v1033
    %v1035 = vand.u32 %v1034, 4294901760
    %v1036 = vsub.f32 %v1034, %v1035
    %v1037 = vand.u32 %v1036, 4294901760
    %1038 = vmatpush1.msra.mxu0 %v1037
    %1039 = vmatprep.subr.mxu0 0.0
    %v1040 = vand.u32 %v102, 4294901760
    %v1041 = vsub.f32 %v102, %v1040
    %v1042 = vand.u32 %v1041, 4294901760
    %v1043 = vsub.f32 %v1041, %v1042
    %v1044 = vand.u32 %v1043, 4294901760
    %1045 = vmatpush1.msra.mxu0 %v1044
    %1046 = vmatprep.subr.mxu0 0.0
    %v1047 = vand.u32 %v103, 4294901760
    %v1048 = vsub.f32 %v103, %v1047
    %v1049 = vand.u32 %v1048, 4294901760
    %v1050 = vsub.f32 %v1048, %v1049
    %v1051 = vand.u32 %v1050, 4294901760
    %1052 = vmatpush1.msra.mxu0 %v1051
    %v1053 = vand.u32 %v299, 4294901760
    %1054 = vmatprep.mubr.f32.mxu0 %v1053
    %v1055 = vand.u32 %v296, 4294901760
    %1056 = vmatmul.mubr.f32.gmra.mrb[0].mxu0 %v1055
    %v1057 = vpop.f32.mrb[0].mxu0
    %v1058 = vadd.f32 %v781, %v1057
    %v1059 = vpop.f32.mrb[0].mxu0
    %v1060 = vand.u32 %v416, 4294901760
    %1061 = vmatprep.mubr.f32.mxu0 %v1060
    %v1062 = vand.u32 %v413, 4294901760
    %1063 = vmatmul.mubr.f32.gmra.mrb[0].mxu0 %v1062
    %v1064 = vpop.f32.mrb[0].mxu0
    %v1065 = vadd.f32 %v796, %v1064
    %v1066 = vpop.f32.mrb[0].mxu0
    %v1067 = vand.u32 %v533, 4294901760
    %1068 = vmatprep.mubr.f32.mxu0 %v1067
    %v1069 = vand.u32 %v530, 4294901760
    %1070 = vmatmul.mubr.f32.gmra.mrb[0].mxu0 %v1069
    %v1071 = vpop.f32.mrb[0].mxu0
    %v1072 = vadd.f32 %v811, %v1071
    %v1073 = vpop.f32.mrb[0].mxu0
    %v1074 = vand.u32 %v650, 4294901760
    %1075 = vmatprep.mubr.f32.mxu0 %v1074
    %v1076 = vand.u32 %v647, 4294901760
    %1077 = vmatmul.mubr.f32.gmra.mrb[0].mxu0 %v1076
    %v1078 = vpop.f32.mrb[0].mxu0
    %v1079 = vadd.f32 %v826, %v1078
    %v1080 = vpop.f32.mrb[0].mxu0
    %1081 = vdwg.mxu0
    %1082 = vmatprep.subr.mxu0 0.0
    %v1083 = vand.u32 %v72, 4294901760
    %v1084 = vsub.f32 %v72, %v1083
    %1085 = vmatpush1.msra.mxu0 %v1084
    %1086 = vmatprep.subr.mxu0 0.0
    %v1087 = vand.u32 %v73, 4294901760
    %v1088 = vsub.f32 %v73, %v1087
    %1089 = vmatpush1.msra.mxu0 %v1088
    %1090 = vmatprep.subr.mxu0 0.0
    %v1091 = vand.u32 %v74, 4294901760
    %v1092 = vsub.f32 %v74, %v1091
    %1093 = vmatpush1.msra.mxu0 %v1092
    %1094 = vmatprep.subr.mxu0 0.0
    %v1095 = vand.u32 %v75, 4294901760
    %v1096 = vsub.f32 %v75, %v1095
    %1097 = vmatpush1.msra.mxu0 %v1096
    %1098 = vmatprep.subr.mxu0 0.0
    %v1099 = vand.u32 %v76, 4294901760
    %v1100 = vsub.f32 %v76, %v1099
    %1101 = vmatpush1.msra.mxu0 %v1100
    %1102 = vmatprep.subr.mxu0 0.0
    %v1103 = vand.u32 %v77, 4294901760
    %v1104 = vsub.f32 %v77, %v1103
    %1105 = vmatpush1.msra.mxu0 %v1104
    %1106 = vmatprep.subr.mxu0 0.0
    %v1107 = vand.u32 %v78, 4294901760
    %v1108 = vsub.f32 %v78, %v1107
    %1109 = vmatpush1.msra.mxu0 %v1108
    %1110 = vmatprep.subr.mxu0 0.0
    %v1111 = vand.u32 %v79, 4294901760
    %v1112 = vsub.f32 %v79, %v1111
    %1113 = vmatpush1.msra.mxu0 %v1112
    %1114 = vmatprep.subr.mxu0 0.0
    %v1115 = vand.u32 %v80, 4294901760
    %v1116 = vsub.f32 %v80, %v1115
    %1117 = vmatpush1.msra.mxu0 %v1116
    %1118 = vmatprep.subr.mxu0 0.0
    %v1119 = vand.u32 %v81, 4294901760
    %v1120 = vsub.f32 %v81, %v1119
    %1121 = vmatpush1.msra.mxu0 %v1120
    %1122 = vmatprep.subr.mxu0 0.0
    %v1123 = vand.u32 %v82, 4294901760
    %v1124 = vsub.f32 %v82, %v1123
    %1125 = vmatpush1.msra.mxu0 %v1124
    %1126 = vmatprep.subr.mxu0 0.0
    %v1127 = vand.u32 %v83, 4294901760
    %v1128 = vsub.f32 %v83, %v1127
    %1129 = vmatpush1.msra.mxu0 %v1128
    %1130 = vmatprep.subr.mxu0 0.0
    %v1131 = vand.u32 %v84, 4294901760
    %v1132 = vsub.f32 %v84, %v1131
    %1133 = vmatpush1.msra.mxu0 %v1132
    %1134 = vmatprep.subr.mxu0 0.0
    %v1135 = vand.u32 %v85, 4294901760
    %v1136 = vsub.f32 %v85, %v1135
    %1137 = vmatpush1.msra.mxu0 %v1136
    %1138 = vmatprep.subr.mxu0 0.0
    %v1139 = vand.u32 %v86, 4294901760
    %v1140 = vsub.f32 %v86, %v1139
    %1141 = vmatpush1.msra.mxu0 %v1140
    %1142 = vmatprep.subr.mxu0 0.0
    %v1143 = vand.u32 %v87, 4294901760
    %v1144 = vsub.f32 %v87, %v1143
    %1145 = vmatpush1.msra.mxu0 %v1144
    %1146 = vmatprep.subr.mxu0 0.0
    %v1147 = vand.u32 %v88, 4294901760
    %v1148 = vsub.f32 %v88, %v1147
    %1149 = vmatpush1.msra.mxu0 %v1148
    %1150 = vmatprep.subr.mxu0 0.0
    %v1151 = vand.u32 %v89, 4294901760
    %v1152 = vsub.f32 %v89, %v1151
    %1153 = vmatpush1.msra.mxu0 %v1152
    %1154 = vmatprep.subr.mxu0 0.0
    %v1155 = vand.u32 %v90, 4294901760
    %v1156 = vsub.f32 %v90, %v1155
    %1157 = vmatpush1.msra.mxu0 %v1156
    %1158 = vmatprep.subr.mxu0 0.0
    %v1159 = vand.u32 %v91, 4294901760
    %v1160 = vsub.f32 %v91, %v1159
    %1161 = vmatpush1.msra.mxu0 %v1160
    %1162 = vmatprep.subr.mxu0 0.0
    %v1163 = vand.u32 %v92, 4294901760
    %v1164 = vsub.f32 %v92, %v1163
    %1165 = vmatpush1.msra.mxu0 %v1164
    %1166 = vmatprep.subr.mxu0 0.0
    %v1167 = vand.u32 %v93, 4294901760
    %v1168 = vsub.f32 %v93, %v1167
    %1169 = vmatpush1.msra.mxu0 %v1168
    %1170 = vmatprep.subr.mxu0 0.0
    %v1171 = vand.u32 %v94, 4294901760
    %v1172 = vsub.f32 %v94, %v1171
    %1173 = vmatpush1.msra.mxu0 %v1172
    %1174 = vmatprep.subr.mxu0 0.0
    %v1175 = vand.u32 %v95, 4294901760
    %v1176 = vsub.f32 %v95, %v1175
    %1177 = vmatpush1.msra.mxu0 %v1176
    %1178 = vmatprep.subr.mxu0 0.0
    %v1179 = vand.u32 %v96, 4294901760
    %v1180 = vsub.f32 %v96, %v1179
    %1181 = vmatpush1.msra.mxu0 %v1180
    %1182 = vmatprep.subr.mxu0 0.0
    %v1183 = vand.u32 %v97, 4294901760
    %v1184 = vsub.f32 %v97, %v1183
    %1185 = vmatpush1.msra.mxu0 %v1184
    %1186 = vmatprep.subr.mxu0 0.0
    %v1187 = vand.u32 %v98, 4294901760
    %v1188 = vsub.f32 %v98, %v1187
    %1189 = vmatpush1.msra.mxu0 %v1188
    %1190 = vmatprep.subr.mxu0 0.0
    %v1191 = vand.u32 %v99, 4294901760
    %v1192 = vsub.f32 %v99, %v1191
    %1193 = vmatpush1.msra.mxu0 %v1192
    %1194 = vmatprep.subr.mxu0 0.0
    %v1195 = vand.u32 %v100, 4294901760
    %v1196 = vsub.f32 %v100, %v1195
    %1197 = vmatpush1.msra.mxu0 %v1196
    %1198 = vmatprep.subr.mxu0 0.0
    %v1199 = vand.u32 %v101, 4294901760
    %v1200 = vsub.f32 %v101, %v1199
    %1201 = vmatpush1.msra.mxu0 %v1200
    %1202 = vmatprep.subr.mxu0 0.0
    %v1203 = vand.u32 %v102, 4294901760
    %v1204 = vsub.f32 %v102, %v1203
    %1205 = vmatpush1.msra.mxu0 %v1204
    %1206 = vmatprep.subr.mxu0 0.0
    %v1207 = vand.u32 %v103, 4294901760
    %v1208 = vsub.f32 %v103, %v1207
    %1209 = vmatpush1.msra.mxu0 %v1208
    %v1210 = vand.u32 %v299, 4294901760
    %v1211 = vsub.f32 %v299, %v1210
    %1212 = vmatprep.mubr.f32.mxu0 %v1211
    %v1213 = vand.u32 %v296, 4294901760
    %v1214 = vsub.f32 %v296, %v1213
    %1215 = vmatmul.mubr.f32.gmra.mrb[0].mxu0 %v1214
    %v1216 = vpop.f32.mrb[0].mxu0
    %v1217 = vadd.f32 %v1058, %v1216
    %v1218 = vpop.f32.mrb[0].mxu0
    %v1219 = vand.u32 %v416, 4294901760
    %v1220 = vsub.f32 %v416, %v1219
    %1221 = vmatprep.mubr.f32.mxu0 %v1220
    %v1222 = vand.u32 %v413, 4294901760
    %v1223 = vsub.f32 %v413, %v1222
    %1224 = vmatmul.mubr.f32.gmra.mrb[0].mxu0 %v1223
    %v1225 = vpop.f32.mrb[0].mxu0
    %v1226 = vadd.f32 %v1065, %v1225
    %v1227 = vpop.f32.mrb[0].mxu0
    %v1228 = vand.u32 %v533, 4294901760
    %v1229 = vsub.f32 %v533, %v1228
    %1230 = vmatprep.mubr.f32.mxu0 %v1229
    %v1231 = vand.u32 %v530, 4294901760
    %v1232 = vsub.f32 %v530, %v1231
    %1233 = vmatmul.mubr.f32.gmra.mrb[0].mxu0 %v1232
    %v1234 = vpop.f32.mrb[0].mxu0
    %v1235 = vadd.f32 %v1072, %v1234
    %v1236 = vpop.f32.mrb[0].mxu0
    %v1237 = vand.u32 %v650, 4294901760
    %v1238 = vsub.f32 %v650, %v1237
    %1239 = vmatprep.mubr.f32.mxu0 %v1238
    %v1240 = vand.u32 %v647, 4294901760
    %v1241 = vsub.f32 %v647, %v1240
    %1242 = vmatmul.mubr.f32.gmra.mrb[0].mxu0 %v1241
    %v1243 = vpop.f32.mrb[0].mxu0
    %v1244 = vadd.f32 %v1079, %v1243
    %v1245 = vpop.f32.mrb[0].mxu0
    %1246 = vdwg.mxu0
    %1247 = vmatprep.subr.mxu0 0.0
    %v1248 = vand.u32 %v72, 4294901760
    %1249 = vmatpush1.msra.mxu0 %v1248
    %1250 = vmatprep.subr.mxu0 0.0
    %v1251 = vand.u32 %v73, 4294901760
    %1252 = vmatpush1.msra.mxu0 %v1251
    %1253 = vmatprep.subr.mxu0 0.0
    %v1254 = vand.u32 %v74, 4294901760
    %1255 = vmatpush1.msra.mxu0 %v1254
    %1256 = vmatprep.subr.mxu0 0.0
    %v1257 = vand.u32 %v75, 4294901760
    %1258 = vmatpush1.msra.mxu0 %v1257
    %1259 = vmatprep.subr.mxu0 0.0
    %v1260 = vand.u32 %v76, 4294901760
    %1261 = vmatpush1.msra.mxu0 %v1260
    %1262 = vmatprep.subr.mxu0 0.0
    %v1263 = vand.u32 %v77, 4294901760
    %1264 = vmatpush1.msra.mxu0 %v1263
    %1265 = vmatprep.subr.mxu0 0.0
    %v1266 = vand.u32 %v78, 4294901760
    %1267 = vmatpush1.msra.mxu0 %v1266
    %1268 = vmatprep.subr.mxu0 0.0
    %v1269 = vand.u32 %v79, 4294901760
    %1270 = vmatpush1.msra.mxu0 %v1269
    %1271 = vmatprep.subr.mxu0 0.0
    %v1272 = vand.u32 %v80, 4294901760
    %1273 = vmatpush1.msra.mxu0 %v1272
    %1274 = vmatprep.subr.mxu0 0.0
    %v1275 = vand.u32 %v81, 4294901760
    %1276 = vmatpush1.msra.mxu0 %v1275
    %1277 = vmatprep.subr.mxu0 0.0
    %v1278 = vand.u32 %v82, 4294901760
    %1279 = vmatpush1.msra.mxu0 %v1278
    %1280 = vmatprep.subr.mxu0 0.0
    %v1281 = vand.u32 %v83, 4294901760
    %1282 = vmatpush1.msra.mxu0 %v1281
    %1283 = vmatprep.subr.mxu0 0.0
    %v1284 = vand.u32 %v84, 4294901760
    %1285 = vmatpush1.msra.mxu0 %v1284
    %1286 = vmatprep.subr.mxu0 0.0
    %v1287 = vand.u32 %v85, 4294901760
    %1288 = vmatpush1.msra.mxu0 %v1287
    %1289 = vmatprep.subr.mxu0 0.0
    %v1290 = vand.u32 %v86, 4294901760
    %1291 = vmatpush1.msra.mxu0 %v1290
    %1292 = vmatprep.subr.mxu0 0.0
    %v1293 = vand.u32 %v87, 4294901760
    %1294 = vmatpush1.msra.mxu0 %v1293
    %1295 = vmatprep.subr.mxu0 0.0
    %v1296 = vand.u32 %v88, 4294901760
    %1297 = vmatpush1.msra.mxu0 %v1296
    %1298 = vmatprep.subr.mxu0 0.0
    %v1299 = vand.u32 %v89, 4294901760
    %1300 = vmatpush1.msra.mxu0 %v1299
    %1301 = vmatprep.subr.mxu0 0.0
    %v1302 = vand.u32 %v90, 4294901760
    %1303 = vmatpush1.msra.mxu0 %v1302
    %1304 = vmatprep.subr.mxu0 0.0
    %v1305 = vand.u32 %v91, 4294901760
    %1306 = vmatpush1.msra.mxu0 %v1305
    %1307 = vmatprep.subr.mxu0 0.0
    %v1308 = vand.u32 %v92, 4294901760
    %1309 = vmatpush1.msra.mxu0 %v1308
    %1310 = vmatprep.subr.mxu0 0.0
    %v1311 = vand.u32 %v93, 4294901760
    %1312 = vmatpush1.msra.mxu0 %v1311
    %1313 = vmatprep.subr.mxu0 0.0
    %v1314 = vand.u32 %v94, 4294901760
    %1315 = vmatpush1.msra.mxu0 %v1314
    %1316 = vmatprep.subr.mxu0 0.0
    %v1317 = vand.u32 %v95, 4294901760
    %1318 = vmatpush1.msra.mxu0 %v1317
    %1319 = vmatprep.subr.mxu0 0.0
    %v1320 = vand.u32 %v96, 4294901760
    %1321 = vmatpush1.msra.mxu0 %v1320
    %1322 = vmatprep.subr.mxu0 0.0
    %v1323 = vand.u32 %v97, 4294901760
    %1324 = vmatpush1.msra.mxu0 %v1323
    %1325 = vmatprep.subr.mxu0 0.0
    %v1326 = vand.u32 %v98, 4294901760
    %1327 = vmatpush1.msra.mxu0 %v1326
    %1328 = vmatprep.subr.mxu0 0.0
    %v1329 = vand.u32 %v99, 4294901760
    %1330 = vmatpush1.msra.mxu0 %v1329
    %1331 = vmatprep.subr.mxu0 0.0
    %v1332 = vand.u32 %v100, 4294901760
    %1333 = vmatpush1.msra.mxu0 %v1332
    %1334 = vmatprep.subr.mxu0 0.0
    %v1335 = vand.u32 %v101, 4294901760
    %1336 = vmatpush1.msra.mxu0 %v1335
    %1337 = vmatprep.subr.mxu0 0.0
    %v1338 = vand.u32 %v102, 4294901760
    %1339 = vmatpush1.msra.mxu0 %v1338
    %1340 = vmatprep.subr.mxu0 0.0
    %v1341 = vand.u32 %v103, 4294901760
    %1342 = vmatpush1.msra.mxu0 %v1341
    %v1343 = vand.u32 %v299, 4294901760
    %v1344 = vsub.f32 %v299, %v1343
    %v1345 = vand.u32 %v1344, 4294901760
    %1346 = vmatprep.mubr.f32.mxu0 %v1345
    %v1347 = vand.u32 %v296, 4294901760
    %v1348 = vsub.f32 %v296, %v1347
    %v1349 = vand.u32 %v1348, 4294901760
    %1350 = vmatmul.mubr.f32.gmra.mrb[0].mxu0 %v1349
    %v1351 = vpop.f32.mrb[0].mxu0
    %v1352 = vadd.f32 %v1217, %v1351
    %v1353 = vpop.f32.mrb[0].mxu0
    %v1354 = vand.u32 %v416, 4294901760
    %v1355 = vsub.f32 %v416, %v1354
    %v1356 = vand.u32 %v1355, 4294901760
    %1357 = vmatprep.mubr.f32.mxu0 %v1356
    %v1358 = vand.u32 %v413, 4294901760
    %v1359 = vsub.f32 %v413, %v1358
    %v1360 = vand.u32 %v1359, 4294901760
    %1361 = vmatmul.mubr.f32.gmra.mrb[0].mxu0 %v1360
    %v1362 = vpop.f32.mrb[0].mxu0
    %v1363 = vadd.f32 %v1226, %v1362
    %v1364 = vpop.f32.mrb[0].mxu0
    %v1365 = vand.u32 %v533, 4294901760
    %v1366 = vsub.f32 %v533, %v1365
    %v1367 = vand.u32 %v1366, 4294901760
    %1368 = vmatprep.mubr.f32.mxu0 %v1367
    %v1369 = vand.u32 %v530, 4294901760
    %v1370 = vsub.f32 %v530, %v1369
    %v1371 = vand.u32 %v1370, 4294901760
    %1372 = vmatmul.mubr.f32.gmra.mrb[0].mxu0 %v1371
    %v1373 = vpop.f32.mrb[0].mxu0
    %v1374 = vadd.f32 %v1235, %v1373
    %v1375 = vpop.f32.mrb[0].mxu0
    %v1376 = vand.u32 %v650, 4294901760
    %v1377 = vsub.f32 %v650, %v1376
    %v1378 = vand.u32 %v1377, 4294901760
    %1379 = vmatprep.mubr.f32.mxu0 %v1378
    %v1380 = vand.u32 %v647, 4294901760
    %v1381 = vsub.f32 %v647, %v1380
    %v1382 = vand.u32 %v1381, 4294901760
    %1383 = vmatmul.mubr.f32.gmra.mrb[0].mxu0 %v1382
    %v1384 = vpop.f32.mrb[0].mxu0
    %v1385 = vadd.f32 %v1244, %v1384
    %v1386 = vpop.f32.mrb[0].mxu0
    %1387 = vdwg.mxu0
    %1388 = vmatprep.subr.mxu0 0.0
    %v1389 = vand.u32 %v72, 4294901760
    %v1390 = vsub.f32 %v72, %v1389
    %v1391 = vand.u32 %v1390, 4294901760
    %1392 = vmatpush1.msra.mxu0 %v1391
    %1393 = vmatprep.subr.mxu0 0.0
    %v1394 = vand.u32 %v73, 4294901760
    %v1395 = vsub.f32 %v73, %v1394
    %v1396 = vand.u32 %v1395, 4294901760
    %1397 = vmatpush1.msra.mxu0 %v1396
    %1398 = vmatprep.subr.mxu0 0.0
    %v1399 = vand.u32 %v74, 4294901760
    %v1400 = vsub.f32 %v74, %v1399
    %v1401 = vand.u32 %v1400, 4294901760
    %1402 = vmatpush1.msra.mxu0 %v1401
    %1403 = vmatprep.subr.mxu0 0.0
    %v1404 = vand.u32 %v75, 4294901760
    %v1405 = vsub.f32 %v75, %v1404
    %v1406 = vand.u32 %v1405, 4294901760
    %1407 = vmatpush1.msra.mxu0 %v1406
    %1408 = vmatprep.subr.mxu0 0.0
    %v1409 = vand.u32 %v76, 4294901760
    %v1410 = vsub.f32 %v76, %v1409
    %v1411 = vand.u32 %v1410, 4294901760
    %1412 = vmatpush1.msra.mxu0 %v1411
    %1413 = vmatprep.subr.mxu0 0.0
    %v1414 = vand.u32 %v77, 4294901760
    %v1415 = vsub.f32 %v77, %v1414
    %v1416 = vand.u32 %v1415, 4294901760
    %1417 = vmatpush1.msra.mxu0 %v1416
    %1418 = vmatprep.subr.mxu0 0.0
    %v1419 = vand.u32 %v78, 4294901760
    %v1420 = vsub.f32 %v78, %v1419
    %v1421 = vand.u32 %v1420, 4294901760
    %1422 = vmatpush1.msra.mxu0 %v1421
    %1423 = vmatprep.subr.mxu0 0.0
    %v1424 = vand.u32 %v79, 4294901760
    %v1425 = vsub.f32 %v79, %v1424
    %v1426 = vand.u32 %v1425, 4294901760
    %1427 = vmatpush1.msra.mxu0 %v1426
    %1428 = vmatprep.subr.mxu0 0.0
    %v1429 = vand.u32 %v80, 4294901760
    %v1430 = vsub.f32 %v80, %v1429
    %v1431 = vand.u32 %v1430, 4294901760
    %1432 = vmatpush1.msra.mxu0 %v1431
    %1433 = vmatprep.subr.mxu0 0.0
    %v1434 = vand.u32 %v81, 4294901760
    %v1435 = vsub.f32 %v81, %v1434
    %v1436 = vand.u32 %v1435, 4294901760
    %1437 = vmatpush1.msra.mxu0 %v1436
    %1438 = vmatprep.subr.mxu0 0.0
    %v1439 = vand.u32 %v82, 4294901760
    %v1440 = vsub.f32 %v82, %v1439
    %v1441 = vand.u32 %v1440, 4294901760
    %1442 = vmatpush1.msra.mxu0 %v1441
    %1443 = vmatprep.subr.mxu0 0.0
    %v1444 = vand.u32 %v83, 4294901760
    %v1445 = vsub.f32 %v83, %v1444
    %v1446 = vand.u32 %v1445, 4294901760
    %1447 = vmatpush1.msra.mxu0 %v1446
    %1448 = vmatprep.subr.mxu0 0.0
    %v1449 = vand.u32 %v84, 4294901760
    %v1450 = vsub.f32 %v84, %v1449
    %v1451 = vand.u32 %v1450, 4294901760
    %1452 = vmatpush1.msra.mxu0 %v1451
    %1453 = vmatprep.subr.mxu0 0.0
    %v1454 = vand.u32 %v85, 4294901760
    %v1455 = vsub.f32 %v85, %v1454
    %v1456 = vand.u32 %v1455, 4294901760
    %1457 = vmatpush1.msra.mxu0 %v1456
    %1458 = vmatprep.subr.mxu0 0.0
    %v1459 = vand.u32 %v86, 4294901760
    %v1460 = vsub.f32 %v86, %v1459
    %v1461 = vand.u32 %v1460, 4294901760
    %1462 = vmatpush1.msra.mxu0 %v1461
    %1463 = vmatprep.subr.mxu0 0.0
    %v1464 = vand.u32 %v87, 4294901760
    %v1465 = vsub.f32 %v87, %v1464
    %v1466 = vand.u32 %v1465, 4294901760
    %1467 = vmatpush1.msra.mxu0 %v1466
    %1468 = vmatprep.subr.mxu0 0.0
    %v1469 = vand.u32 %v88, 4294901760
    %v1470 = vsub.f32 %v88, %v1469
    %v1471 = vand.u32 %v1470, 4294901760
    %1472 = vmatpush1.msra.mxu0 %v1471
    %1473 = vmatprep.subr.mxu0 0.0
    %v1474 = vand.u32 %v89, 4294901760
    %v1475 = vsub.f32 %v89, %v1474
    %v1476 = vand.u32 %v1475, 4294901760
    %1477 = vmatpush1.msra.mxu0 %v1476
    %1478 = vmatprep.subr.mxu0 0.0
    %v1479 = vand.u32 %v90, 4294901760
    %v1480 = vsub.f32 %v90, %v1479
    %v1481 = vand.u32 %v1480, 4294901760
    %1482 = vmatpush1.msra.mxu0 %v1481
    %1483 = vmatprep.subr.mxu0 0.0
    %v1484 = vand.u32 %v91, 4294901760
    %v1485 = vsub.f32 %v91, %v1484
    %v1486 = vand.u32 %v1485, 4294901760
    %1487 = vmatpush1.msra.mxu0 %v1486
    %1488 = vmatprep.subr.mxu0 0.0
    %v1489 = vand.u32 %v92, 4294901760
    %v1490 = vsub.f32 %v92, %v1489
    %v1491 = vand.u32 %v1490, 4294901760
    %1492 = vmatpush1.msra.mxu0 %v1491
    %1493 = vmatprep.subr.mxu0 0.0
    %v1494 = vand.u32 %v93, 4294901760
    %v1495 = vsub.f32 %v93, %v1494
    %v1496 = vand.u32 %v1495, 4294901760
    %1497 = vmatpush1.msra.mxu0 %v1496
    %1498 = vmatprep.subr.mxu0 0.0
    %v1499 = vand.u32 %v94, 4294901760
    %v1500 = vsub.f32 %v94, %v1499
    %v1501 = vand.u32 %v1500, 4294901760
    %1502 = vmatpush1.msra.mxu0 %v1501
    %1503 = vmatprep.subr.mxu0 0.0
    %v1504 = vand.u32 %v95, 4294901760
    %v1505 = vsub.f32 %v95, %v1504
    %v1506 = vand.u32 %v1505, 4294901760
    %1507 = vmatpush1.msra.mxu0 %v1506
    %1508 = vmatprep.subr.mxu0 0.0
    %v1509 = vand.u32 %v96, 4294901760
    %v1510 = vsub.f32 %v96, %v1509
    %v1511 = vand.u32 %v1510, 4294901760
    %1512 = vmatpush1.msra.mxu0 %v1511
    %1513 = vmatprep.subr.mxu0 0.0
    %v1514 = vand.u32 %v97, 4294901760
    %v1515 = vsub.f32 %v97, %v1514
    %v1516 = vand.u32 %v1515, 4294901760
    %1517 = vmatpush1.msra.mxu0 %v1516
    %1518 = vmatprep.subr.mxu0 0.0
    %v1519 = vand.u32 %v98, 4294901760
    %v1520 = vsub.f32 %v98, %v1519
    %v1521 = vand.u32 %v1520, 4294901760
    %1522 = vmatpush1.msra.mxu0 %v1521
    %1523 = vmatprep.subr.mxu0 0.0
    %v1524 = vand.u32 %v99, 4294901760
    %v1525 = vsub.f32 %v99, %v1524
    %v1526 = vand.u32 %v1525, 4294901760
    %1527 = vmatpush1.msra.mxu0 %v1526
    %1528 = vmatprep.subr.mxu0 0.0
    %v1529 = vand.u32 %v100, 4294901760
    %v1530 = vsub.f32 %v100, %v1529
    %v1531 = vand.u32 %v1530, 4294901760
    %1532 = vmatpush1.msra.mxu0 %v1531
    %1533 = vmatprep.subr.mxu0 0.0
    %v1534 = vand.u32 %v101, 4294901760
    %v1535 = vsub.f32 %v101, %v1534
    %v1536 = vand.u32 %v1535, 4294901760
    %1537 = vmatpush1.msra.mxu0 %v1536
    %1538 = vmatprep.subr.mxu0 0.0
    %v1539 = vand.u32 %v102, 4294901760
    %v1540 = vsub.f32 %v102, %v1539
    %v1541 = vand.u32 %v1540, 4294901760
    %1542 = vmatpush1.msra.mxu0 %v1541
    %1543 = vmatprep.subr.mxu0 0.0
    %v1544 = vand.u32 %v103, 4294901760
    %v1545 = vsub.f32 %v103, %v1544
    %v1546 = vand.u32 %v1545, 4294901760
    %1547 = vmatpush1.msra.mxu0 %v1546
    %v1548 = vand.u32 %v299, 4294901760
    %1549 = vmatprep.mubr.f32.mxu0 %v1548
    %v1550 = vand.u32 %v296, 4294901760
    %1551 = vmatmul.mubr.f32.gmra.mrb[0].mxu0 %v1550
    %v1552 = vpop.f32.mrb[0].mxu0
    %v1553 = vadd.f32 %v1352, %v1552
    %v1554 = vpop.f32.mrb[0].mxu0
    %v1555 = vand.u32 %v416, 4294901760
    %1556 = vmatprep.mubr.f32.mxu0 %v1555
    %v1557 = vand.u32 %v413, 4294901760
    %1558 = vmatmul.mubr.f32.gmra.mrb[0].mxu0 %v1557
    %v1559 = vpop.f32.mrb[0].mxu0
    %v1560 = vadd.f32 %v1363, %v1559
    %v1561 = vpop.f32.mrb[0].mxu0
    %v1562 = vand.u32 %v533, 4294901760
    %1563 = vmatprep.mubr.f32.mxu0 %v1562
    %v1564 = vand.u32 %v530, 4294901760
    %1565 = vmatmul.mubr.f32.gmra.mrb[0].mxu0 %v1564
    %v1566 = vpop.f32.mrb[0].mxu0
    %v1567 = vadd.f32 %v1374, %v1566
    %v1568 = vpop.f32.mrb[0].mxu0
    %v1569 = vand.u32 %v650, 4294901760
    %1570 = vmatprep.mubr.f32.mxu0 %v1569
    %v1571 = vand.u32 %v647, 4294901760
    %1572 = vmatmul.mubr.f32.gmra.mrb[0].mxu0 %v1571
    %v1573 = vpop.f32.mrb[0].mxu0
    %v1574 = vadd.f32 %v1385, %v1573
    %v1575 = vpop.f32.mrb[0].mxu0
    %1576 = vdwg.mxu0
    %1577 = vmatprep.subr.mxu0 0.0
    %v1578 = vand.u32 %v72, 4294901760
    %1579 = vmatpush1.msra.mxu0 %v1578
    %1580 = vmatprep.subr.mxu0 0.0
    %v1581 = vand.u32 %v73, 4294901760
    %1582 = vmatpush1.msra.mxu0 %v1581
    %1583 = vmatprep.subr.mxu0 0.0
    %v1584 = vand.u32 %v74, 4294901760
    %1585 = vmatpush1.msra.mxu0 %v1584
    %1586 = vmatprep.subr.mxu0 0.0
    %v1587 = vand.u32 %v75, 4294901760
    %1588 = vmatpush1.msra.mxu0 %v1587
    %1589 = vmatprep.subr.mxu0 0.0
    %v1590 = vand.u32 %v76, 4294901760
    %1591 = vmatpush1.msra.mxu0 %v1590
    %1592 = vmatprep.subr.mxu0 0.0
    %v1593 = vand.u32 %v77, 4294901760
    %1594 = vmatpush1.msra.mxu0 %v1593
    %1595 = vmatprep.subr.mxu0 0.0
    %v1596 = vand.u32 %v78, 4294901760
    %1597 = vmatpush1.msra.mxu0 %v1596
    %1598 = vmatprep.subr.mxu0 0.0
    %v1599 = vand.u32 %v79, 4294901760
    %1600 = vmatpush1.msra.mxu0 %v1599
    %1601 = vmatprep.subr.mxu0 0.0
    %v1602 = vand.u32 %v80, 4294901760
    %1603 = vmatpush1.msra.mxu0 %v1602
    %1604 = vmatprep.subr.mxu0 0.0
    %v1605 = vand.u32 %v81, 4294901760
    %1606 = vmatpush1.msra.mxu0 %v1605
    %1607 = vmatprep.subr.mxu0 0.0
    %v1608 = vand.u32 %v82, 4294901760
    %1609 = vmatpush1.msra.mxu0 %v1608
    %1610 = vmatprep.subr.mxu0 0.0
    %v1611 = vand.u32 %v83, 4294901760
    %1612 = vmatpush1.msra.mxu0 %v1611
    %1613 = vmatprep.subr.mxu0 0.0
    %v1614 = vand.u32 %v84, 4294901760
    %1615 = vmatpush1.msra.mxu0 %v1614
    %1616 = vmatprep.subr.mxu0 0.0
    %v1617 = vand.u32 %v85, 4294901760
    %1618 = vmatpush1.msra.mxu0 %v1617
    %1619 = vmatprep.subr.mxu0 0.0
    %v1620 = vand.u32 %v86, 4294901760
    %1621 = vmatpush1.msra.mxu0 %v1620
    %1622 = vmatprep.subr.mxu0 0.0
    %v1623 = vand.u32 %v87, 4294901760
    %1624 = vmatpush1.msra.mxu0 %v1623
    %1625 = vmatprep.subr.mxu0 0.0
    %v1626 = vand.u32 %v88, 4294901760
    %1627 = vmatpush1.msra.mxu0 %v1626
    %1628 = vmatprep.subr.mxu0 0.0
    %v1629 = vand.u32 %v89, 4294901760
    %1630 = vmatpush1.msra.mxu0 %v1629
    %1631 = vmatprep.subr.mxu0 0.0
    %v1632 = vand.u32 %v90, 4294901760
    %1633 = vmatpush1.msra.mxu0 %v1632
    %1634 = vmatprep.subr.mxu0 0.0
    %v1635 = vand.u32 %v91, 4294901760
    %1636 = vmatpush1.msra.mxu0 %v1635
    %1637 = vmatprep.subr.mxu0 0.0
    %v1638 = vand.u32 %v92, 4294901760
    %1639 = vmatpush1.msra.mxu0 %v1638
    %1640 = vmatprep.subr.mxu0 0.0
    %v1641 = vand.u32 %v93, 4294901760
    %1642 = vmatpush1.msra.mxu0 %v1641
    %1643 = vmatprep.subr.mxu0 0.0
    %v1644 = vand.u32 %v94, 4294901760
    %1645 = vmatpush1.msra.mxu0 %v1644
    %1646 = vmatprep.subr.mxu0 0.0
    %v1647 = vand.u32 %v95, 4294901760
    %1648 = vmatpush1.msra.mxu0 %v1647
    %1649 = vmatprep.subr.mxu0 0.0
    %v1650 = vand.u32 %v96, 4294901760
    %1651 = vmatpush1.msra.mxu0 %v1650
    %1652 = vmatprep.subr.mxu0 0.0
    %v1653 = vand.u32 %v97, 4294901760
    %1654 = vmatpush1.msra.mxu0 %v1653
    %1655 = vmatprep.subr.mxu0 0.0
    %v1656 = vand.u32 %v98, 4294901760
    %1657 = vmatpush1.msra.mxu0 %v1656
    %1658 = vmatprep.subr.mxu0 0.0
    %v1659 = vand.u32 %v99, 4294901760
    %1660 = vmatpush1.msra.mxu0 %v1659
    %1661 = vmatprep.subr.mxu0 0.0
    %v1662 = vand.u32 %v100, 4294901760
    %1663 = vmatpush1.msra.mxu0 %v1662
    %1664 = vmatprep.subr.mxu0 0.0
    %v1665 = vand.u32 %v101, 4294901760
    %1666 = vmatpush1.msra.mxu0 %v1665
    %1667 = vmatprep.subr.mxu0 0.0
    %v1668 = vand.u32 %v102, 4294901760
    %1669 = vmatpush1.msra.mxu0 %v1668
    %1670 = vmatprep.subr.mxu0 0.0
    %v1671 = vand.u32 %v103, 4294901760
    %1672 = vmatpush1.msra.mxu0 %v1671
    %v1673 = vand.u32 %v299, 4294901760
    %1674 = vmatprep.mubr.f32.mxu0 %v1673
    %v1675 = vand.u32 %v296, 4294901760
    %1676 = vmatmul.mubr.f32.gmra.mrb[0].mxu0 %v1675
    %v1677 = vpop.f32.mrb[0].mxu0
    %v1678 = vadd.f32 %v1553, %v1677
    %v1679 = vpop.f32.mrb[0].mxu0
    %v1680 = vand.u32 %v416, 4294901760
    %1681 = vmatprep.mubr.f32.mxu0 %v1680
    %v1682 = vand.u32 %v413, 4294901760
    %1683 = vmatmul.mubr.f32.gmra.mrb[0].mxu0 %v1682
    %v1684 = vpop.f32.mrb[0].mxu0
    %v1685 = vadd.f32 %v1560, %v1684
    %v1686 = vpop.f32.mrb[0].mxu0
    %v1687 = vand.u32 %v533, 4294901760
    %1688 = vmatprep.mubr.f32.mxu0 %v1687
    %v1689 = vand.u32 %v530, 4294901760
    %1690 = vmatmul.mubr.f32.gmra.mrb[0].mxu0 %v1689
    %v1691 = vpop.f32.mrb[0].mxu0
    %v1692 = vadd.f32 %v1567, %v1691
    %v1693 = vpop.f32.mrb[0].mxu0
    %v1694 = vand.u32 %v650, 4294901760
    %1695 = vmatprep.mubr.f32.mxu0 %v1694
    %v1696 = vand.u32 %v647, 4294901760
    %1697 = vmatmul.mubr.f32.gmra.mrb[0].mxu0 %v1696
    %v1698 = vpop.f32.mrb[0].mxu0
    %v1699 = vadd.f32 %v1574, %v1698
    %v1700 = vpop.f32.mrb[0].mxu0
    %1701 = vdwg.mxu0
    %1702 = vmatprep.subr.mxu0 0.0
    %v1703 = vand.u32 %v104, 4294901760
    %1704 = vmatpush1.msra.mxu0 %v1703
    %1705 = vmatprep.subr.mxu0 0.0
    %v1706 = vand.u32 %v105, 4294901760
    %1707 = vmatpush1.msra.mxu0 %v1706
    %1708 = vmatprep.subr.mxu0 0.0
    %v1709 = vand.u32 %v106, 4294901760
    %1710 = vmatpush1.msra.mxu0 %v1709
    %1711 = vmatprep.subr.mxu0 0.0
    %v1712 = vand.u32 %v107, 4294901760
    %1713 = vmatpush1.msra.mxu0 %v1712
    %1714 = vmatprep.subr.mxu0 0.0
    %v1715 = vand.u32 %v108, 4294901760
    %1716 = vmatpush1.msra.mxu0 %v1715
    %1717 = vmatprep.subr.mxu0 0.0
    %v1718 = vand.u32 %v109, 4294901760
    %1719 = vmatpush1.msra.mxu0 %v1718
    %1720 = vmatprep.subr.mxu0 0.0
    %v1721 = vand.u32 %v110, 4294901760
    %1722 = vmatpush1.msra.mxu0 %v1721
    %1723 = vmatprep.subr.mxu0 0.0
    %v1724 = vand.u32 %v111, 4294901760
    %1725 = vmatpush1.msra.mxu0 %v1724
    %1726 = vmatprep.subr.mxu0 0.0
    %v1727 = vand.u32 %v112, 4294901760
    %1728 = vmatpush1.msra.mxu0 %v1727
    %1729 = vmatprep.subr.mxu0 0.0
    %v1730 = vand.u32 %v113, 4294901760
    %1731 = vmatpush1.msra.mxu0 %v1730
    %1732 = vmatprep.subr.mxu0 0.0
    %v1733 = vand.u32 %v114, 4294901760
    %1734 = vmatpush1.msra.mxu0 %v1733
    %1735 = vmatprep.subr.mxu0 0.0
    %v1736 = vand.u32 %v115, 4294901760
    %1737 = vmatpush1.msra.mxu0 %v1736
    %1738 = vmatprep.subr.mxu0 0.0
    %v1739 = vand.u32 %v116, 4294901760
    %1740 = vmatpush1.msra.mxu0 %v1739
    %1741 = vmatprep.subr.mxu0 0.0
    %v1742 = vand.u32 %v117, 4294901760
    %1743 = vmatpush1.msra.mxu0 %v1742
    %1744 = vmatprep.subr.mxu0 0.0
    %v1745 = vand.u32 %v118, 4294901760
    %1746 = vmatpush1.msra.mxu0 %v1745
    %1747 = vmatprep.subr.mxu0 0.0
    %v1748 = vand.u32 %v119, 4294901760
    %1749 = vmatpush1.msra.mxu0 %v1748
    %1750 = vmatprep.subr.mxu0 0.0
    %v1751 = vand.u32 %v120, 4294901760
    %1752 = vmatpush1.msra.mxu0 %v1751
    %1753 = vmatprep.subr.mxu0 0.0
    %v1754 = vand.u32 %v121, 4294901760
    %1755 = vmatpush1.msra.mxu0 %v1754
    %1756 = vmatprep.subr.mxu0 0.0
    %v1757 = vand.u32 %v122, 4294901760
    %1758 = vmatpush1.msra.mxu0 %v1757
    %1759 = vmatprep.subr.mxu0 0.0
    %v1760 = vand.u32 %v123, 4294901760
    %1761 = vmatpush1.msra.mxu0 %v1760
    %1762 = vmatprep.subr.mxu0 0.0
    %v1763 = vand.u32 %v124, 4294901760
    %1764 = vmatpush1.msra.mxu0 %v1763
    %1765 = vmatprep.subr.mxu0 0.0
    %v1766 = vand.u32 %v125, 4294901760
    %1767 = vmatpush1.msra.mxu0 %v1766
    %1768 = vmatprep.subr.mxu0 0.0
    %v1769 = vand.u32 %v126, 4294901760
    %1770 = vmatpush1.msra.mxu0 %v1769
    %1771 = vmatprep.subr.mxu0 0.0
    %v1772 = vand.u32 %v127, 4294901760
    %1773 = vmatpush1.msra.mxu0 %v1772
    %1774 = vmatprep.subr.mxu0 0.0
    %v1775 = vand.u32 %v128, 4294901760
    %1776 = vmatpush1.msra.mxu0 %v1775
    %1777 = vmatprep.subr.mxu0 0.0
    %v1778 = vand.u32 %v129, 4294901760
    %1779 = vmatpush1.msra.mxu0 %v1778
    %1780 = vmatprep.subr.mxu0 0.0
    %v1781 = vand.u32 %v130, 4294901760
    %1782 = vmatpush1.msra.mxu0 %v1781
    %1783 = vmatprep.subr.mxu0 0.0
    %v1784 = vand.u32 %v131, 4294901760
    %1785 = vmatpush1.msra.mxu0 %v1784
    %1786 = vmatprep.subr.mxu0 0.0
    %v1787 = vand.u32 %v132, 4294901760
    %1788 = vmatpush1.msra.mxu0 %v1787
    %1789 = vmatprep.subr.mxu0 0.0
    %v1790 = vand.u32 %v133, 4294901760
    %1791 = vmatpush1.msra.mxu0 %v1790
    %1792 = vmatprep.subr.mxu0 0.0
    %v1793 = vand.u32 %v134, 4294901760
    %1794 = vmatpush1.msra.mxu0 %v1793
    %1795 = vmatprep.subr.mxu0 0.0
    %v1796 = vand.u32 %v135, 4294901760
    %1797 = vmatpush1.msra.mxu0 %v1796
    %v1798 = vand.u32 %v300, 4294901760
    %v1799 = vsub.f32 %v300, %v1798
    %v1800 = vand.u32 %v1799, 4294901760
    %v1801 = vsub.f32 %v1799, %v1800
    %v1802 = vand.u32 %v1801, 4294901760
    %1803 = vmatprep.mubr.f32.mxu0 %v1802
    %v1804 = vand.u32 %v297, 4294901760
    %v1805 = vsub.f32 %v297, %v1804
    %v1806 = vand.u32 %v1805, 4294901760
    %v1807 = vsub.f32 %v1805, %v1806
    %v1808 = vand.u32 %v1807, 4294901760
    %1809 = vmatmul.mubr.f32.gmra.mrb[0].mxu0 %v1808
    %v1810 = vpop.f32.mrb[0].mxu0
    %v1811 = vadd.f32 %v1678, %v1810
    %v1812 = vpop.f32.mrb[0].mxu0
    %v1813 = vand.u32 %v417, 4294901760
    %v1814 = vsub.f32 %v417, %v1813
    %v1815 = vand.u32 %v1814, 4294901760
    %v1816 = vsub.f32 %v1814, %v1815
    %v1817 = vand.u32 %v1816, 4294901760
    %1818 = vmatprep.mubr.f32.mxu0 %v1817
    %v1819 = vand.u32 %v414, 4294901760
    %v1820 = vsub.f32 %v414, %v1819
    %v1821 = vand.u32 %v1820, 4294901760
    %v1822 = vsub.f32 %v1820, %v1821
    %v1823 = vand.u32 %v1822, 4294901760
    %1824 = vmatmul.mubr.f32.gmra.mrb[0].mxu0 %v1823
    %v1825 = vpop.f32.mrb[0].mxu0
    %v1826 = vadd.f32 %v1685, %v1825
    %v1827 = vpop.f32.mrb[0].mxu0
    %v1828 = vand.u32 %v534, 4294901760
    %v1829 = vsub.f32 %v534, %v1828
    %v1830 = vand.u32 %v1829, 4294901760
    %v1831 = vsub.f32 %v1829, %v1830
    %v1832 = vand.u32 %v1831, 4294901760
    %1833 = vmatprep.mubr.f32.mxu0 %v1832
    %v1834 = vand.u32 %v531, 4294901760
    %v1835 = vsub.f32 %v531, %v1834
    %v1836 = vand.u32 %v1835, 4294901760
    %v1837 = vsub.f32 %v1835, %v1836
    %v1838 = vand.u32 %v1837, 4294901760
    %1839 = vmatmul.mubr.f32.gmra.mrb[0].mxu0 %v1838
    %v1840 = vpop.f32.mrb[0].mxu0
    %v1841 = vadd.f32 %v1692, %v1840
    %v1842 = vpop.f32.mrb[0].mxu0
    %v1843 = vand.u32 %v651, 4294901760
    %v1844 = vsub.f32 %v651, %v1843
    %v1845 = vand.u32 %v1844, 4294901760
    %v1846 = vsub.f32 %v1844, %v1845
    %v1847 = vand.u32 %v1846, 4294901760
    %1848 = vmatprep.mubr.f32.mxu0 %v1847
    %v1849 = vand.u32 %v648, 4294901760
    %v1850 = vsub.f32 %v648, %v1849
    %v1851 = vand.u32 %v1850, 4294901760
    %v1852 = vsub.f32 %v1850, %v1851
    %v1853 = vand.u32 %v1852, 4294901760
    %1854 = vmatmul.mubr.f32.gmra.mrb[0].mxu0 %v1853
    %v1855 = vpop.f32.mrb[0].mxu0
    %v1856 = vadd.f32 %v1699, %v1855
    %v1857 = vpop.f32.mrb[0].mxu0
    %1858 = vdwg.mxu0
    %1859 = vmatprep.subr.mxu0 0.0
    %v1860 = vand.u32 %v104, 4294901760
    %v1861 = vsub.f32 %v104, %v1860
    %v1862 = vand.u32 %v1861, 4294901760
    %v1863 = vsub.f32 %v1861, %v1862
    %v1864 = vand.u32 %v1863, 4294901760
    %1865 = vmatpush1.msra.mxu0 %v1864
    %1866 = vmatprep.subr.mxu0 0.0
    %v1867 = vand.u32 %v105, 4294901760
    %v1868 = vsub.f32 %v105, %v1867
    %v1869 = vand.u32 %v1868, 4294901760
    %v1870 = vsub.f32 %v1868, %v1869
    %v1871 = vand.u32 %v1870, 4294901760
    %1872 = vmatpush1.msra.mxu0 %v1871
    %1873 = vmatprep.subr.mxu0 0.0
    %v1874 = vand.u32 %v106, 4294901760
    %v1875 = vsub.f32 %v106, %v1874
    %v1876 = vand.u32 %v1875, 4294901760
    %v1877 = vsub.f32 %v1875, %v1876
    %v1878 = vand.u32 %v1877, 4294901760
    %1879 = vmatpush1.msra.mxu0 %v1878
    %1880 = vmatprep.subr.mxu0 0.0
    %v1881 = vand.u32 %v107, 4294901760
    %v1882 = vsub.f32 %v107, %v1881
    %v1883 = vand.u32 %v1882, 4294901760
    %v1884 = vsub.f32 %v1882, %v1883
    %v1885 = vand.u32 %v1884, 4294901760
    %1886 = vmatpush1.msra.mxu0 %v1885
    %1887 = vmatprep.subr.mxu0 0.0
    %v1888 = vand.u32 %v108, 4294901760
    %v1889 = vsub.f32 %v108, %v1888
    %v1890 = vand.u32 %v1889, 4294901760
    %v1891 = vsub.f32 %v1889, %v1890
    %v1892 = vand.u32 %v1891, 4294901760
    %1893 = vmatpush1.msra.mxu0 %v1892
    %1894 = vmatprep.subr.mxu0 0.0
    %v1895 = vand.u32 %v109, 4294901760
    %v1896 = vsub.f32 %v109, %v1895
    %v1897 = vand.u32 %v1896, 4294901760
    %v1898 = vsub.f32 %v1896, %v1897
    %v1899 = vand.u32 %v1898, 4294901760
    %1900 = vmatpush1.msra.mxu0 %v1899
    %1901 = vmatprep.subr.mxu0 0.0
    %v1902 = vand.u32 %v110, 4294901760
    %v1903 = vsub.f32 %v110, %v1902
    %v1904 = vand.u32 %v1903, 4294901760
    %v1905 = vsub.f32 %v1903, %v1904
    %v1906 = vand.u32 %v1905, 4294901760
    %1907 = vmatpush1.msra.mxu0 %v1906
    %1908 = vmatprep.subr.mxu0 0.0
    %v1909 = vand.u32 %v111, 4294901760
    %v1910 = vsub.f32 %v111, %v1909
    %v1911 = vand.u32 %v1910, 4294901760
    %v1912 = vsub.f32 %v1910, %v1911
    %v1913 = vand.u32 %v1912, 4294901760
    %1914 = vmatpush1.msra.mxu0 %v1913
    %1915 = vmatprep.subr.mxu0 0.0
    %v1916 = vand.u32 %v112, 4294901760
    %v1917 = vsub.f32 %v112, %v1916
    %v1918 = vand.u32 %v1917, 4294901760
    %v1919 = vsub.f32 %v1917, %v1918
    %v1920 = vand.u32 %v1919, 4294901760
    %1921 = vmatpush1.msra.mxu0 %v1920
    %1922 = vmatprep.subr.mxu0 0.0
    %v1923 = vand.u32 %v113, 4294901760
    %v1924 = vsub.f32 %v113, %v1923
    %v1925 = vand.u32 %v1924, 4294901760
    %v1926 = vsub.f32 %v1924, %v1925
    %v1927 = vand.u32 %v1926, 4294901760
    %1928 = vmatpush1.msra.mxu0 %v1927
    %1929 = vmatprep.subr.mxu0 0.0
    %v1930 = vand.u32 %v114, 4294901760
    %v1931 = vsub.f32 %v114, %v1930
    %v1932 = vand.u32 %v1931, 4294901760
    %v1933 = vsub.f32 %v1931, %v1932
    %v1934 = vand.u32 %v1933, 4294901760
    %1935 = vmatpush1.msra.mxu0 %v1934
    %1936 = vmatprep.subr.mxu0 0.0
    %v1937 = vand.u32 %v115, 4294901760
    %v1938 = vsub.f32 %v115, %v1937
    %v1939 = vand.u32 %v1938, 4294901760
    %v1940 = vsub.f32 %v1938, %v1939
    %v1941 = vand.u32 %v1940, 4294901760
    %1942 = vmatpush1.msra.mxu0 %v1941
    %1943 = vmatprep.subr.mxu0 0.0
    %v1944 = vand.u32 %v116, 4294901760
    %v1945 = vsub.f32 %v116, %v1944
    %v1946 = vand.u32 %v1945, 4294901760
    %v1947 = vsub.f32 %v1945, %v1946
    %v1948 = vand.u32 %v1947, 4294901760
    %1949 = vmatpush1.msra.mxu0 %v1948
    %1950 = vmatprep.subr.mxu0 0.0
    %v1951 = vand.u32 %v117, 4294901760
    %v1952 = vsub.f32 %v117, %v1951
    %v1953 = vand.u32 %v1952, 4294901760
    %v1954 = vsub.f32 %v1952, %v1953
    %v1955 = vand.u32 %v1954, 4294901760
    %1956 = vmatpush1.msra.mxu0 %v1955
    %1957 = vmatprep.subr.mxu0 0.0
    %v1958 = vand.u32 %v118, 4294901760
    %v1959 = vsub.f32 %v118, %v1958
    %v1960 = vand.u32 %v1959, 4294901760
    %v1961 = vsub.f32 %v1959, %v1960
    %v1962 = vand.u32 %v1961, 4294901760
    %1963 = vmatpush1.msra.mxu0 %v1962
    %1964 = vmatprep.subr.mxu0 0.0
    %v1965 = vand.u32 %v119, 4294901760
    %v1966 = vsub.f32 %v119, %v1965
    %v1967 = vand.u32 %v1966, 4294901760
    %v1968 = vsub.f32 %v1966, %v1967
    %v1969 = vand.u32 %v1968, 4294901760
    %1970 = vmatpush1.msra.mxu0 %v1969
    %1971 = vmatprep.subr.mxu0 0.0
    %v1972 = vand.u32 %v120, 4294901760
    %v1973 = vsub.f32 %v120, %v1972
    %v1974 = vand.u32 %v1973, 4294901760
    %v1975 = vsub.f32 %v1973, %v1974
    %v1976 = vand.u32 %v1975, 4294901760
    %1977 = vmatpush1.msra.mxu0 %v1976
    %1978 = vmatprep.subr.mxu0 0.0
    %v1979 = vand.u32 %v121, 4294901760
    %v1980 = vsub.f32 %v121, %v1979
    %v1981 = vand.u32 %v1980, 4294901760
    %v1982 = vsub.f32 %v1980, %v1981
    %v1983 = vand.u32 %v1982, 4294901760
    %1984 = vmatpush1.msra.mxu0 %v1983
    %1985 = vmatprep.subr.mxu0 0.0
    %v1986 = vand.u32 %v122, 4294901760
    %v1987 = vsub.f32 %v122, %v1986
    %v1988 = vand.u32 %v1987, 4294901760
    %v1989 = vsub.f32 %v1987, %v1988
    %v1990 = vand.u32 %v1989, 4294901760
    %1991 = vmatpush1.msra.mxu0 %v1990
    %1992 = vmatprep.subr.mxu0 0.0
    %v1993 = vand.u32 %v123, 4294901760
    %v1994 = vsub.f32 %v123, %v1993
    %v1995 = vand.u32 %v1994, 4294901760
    %v1996 = vsub.f32 %v1994, %v1995
    %v1997 = vand.u32 %v1996, 4294901760
    %1998 = vmatpush1.msra.mxu0 %v1997
    %1999 = vmatprep.subr.mxu0 0.0
    %v2000 = vand.u32 %v124, 4294901760
    %v2001 = vsub.f32 %v124, %v2000
    %v2002 = vand.u32 %v2001, 4294901760
    %v2003 = vsub.f32 %v2001, %v2002
    %v2004 = vand.u32 %v2003, 4294901760
    %2005 = vmatpush1.msra.mxu0 %v2004
    %2006 = vmatprep.subr.mxu0 0.0
    %v2007 = vand.u32 %v125, 4294901760
    %v2008 = vsub.f32 %v125, %v2007
    %v2009 = vand.u32 %v2008, 4294901760
    %v2010 = vsub.f32 %v2008, %v2009
    %v2011 = vand.u32 %v2010, 4294901760
    %2012 = vmatpush1.msra.mxu0 %v2011
    %2013 = vmatprep.subr.mxu0 0.0
    %v2014 = vand.u32 %v126, 4294901760
    %v2015 = vsub.f32 %v126, %v2014
    %v2016 = vand.u32 %v2015, 4294901760
    %v2017 = vsub.f32 %v2015, %v2016
    %v2018 = vand.u32 %v2017, 4294901760
    %2019 = vmatpush1.msra.mxu0 %v2018
    %2020 = vmatprep.subr.mxu0 0.0
    %v2021 = vand.u32 %v127, 4294901760
    %v2022 = vsub.f32 %v127, %v2021
    %v2023 = vand.u32 %v2022, 4294901760
    %v2024 = vsub.f32 %v2022, %v2023
    %v2025 = vand.u32 %v2024, 4294901760
    %2026 = vmatpush1.msra.mxu0 %v2025
    %2027 = vmatprep.subr.mxu0 0.0
    %v2028 = vand.u32 %v128, 4294901760
    %v2029 = vsub.f32 %v128, %v2028
    %v2030 = vand.u32 %v2029, 4294901760
    %v2031 = vsub.f32 %v2029, %v2030
    %v2032 = vand.u32 %v2031, 4294901760
    %2033 = vmatpush1.msra.mxu0 %v2032
    %2034 = vmatprep.subr.mxu0 0.0
    %v2035 = vand.u32 %v129, 4294901760
    %v2036 = vsub.f32 %v129, %v2035
    %v2037 = vand.u32 %v2036, 4294901760
    %v2038 = vsub.f32 %v2036, %v2037
    %v2039 = vand.u32 %v2038, 4294901760
    %2040 = vmatpush1.msra.mxu0 %v2039
    %2041 = vmatprep.subr.mxu0 0.0
    %v2042 = vand.u32 %v130, 4294901760
    %v2043 = vsub.f32 %v130, %v2042
    %v2044 = vand.u32 %v2043, 4294901760
    %v2045 = vsub.f32 %v2043, %v2044
    %v2046 = vand.u32 %v2045, 4294901760
    %2047 = vmatpush1.msra.mxu0 %v2046
    %2048 = vmatprep.subr.mxu0 0.0
    %v2049 = vand.u32 %v131, 4294901760
    %v2050 = vsub.f32 %v131, %v2049
    %v2051 = vand.u32 %v2050, 4294901760
    %v2052 = vsub.f32 %v2050, %v2051
    %v2053 = vand.u32 %v2052, 4294901760
    %2054 = vmatpush1.msra.mxu0 %v2053
    %2055 = vmatprep.subr.mxu0 0.0
    %v2056 = vand.u32 %v132, 4294901760
    %v2057 = vsub.f32 %v132, %v2056
    %v2058 = vand.u32 %v2057, 4294901760
    %v2059 = vsub.f32 %v2057, %v2058
    %v2060 = vand.u32 %v2059, 4294901760
    %2061 = vmatpush1.msra.mxu0 %v2060
    %2062 = vmatprep.subr.mxu0 0.0
    %v2063 = vand.u32 %v133, 4294901760
    %v2064 = vsub.f32 %v133, %v2063
    %v2065 = vand.u32 %v2064, 4294901760
    %v2066 = vsub.f32 %v2064, %v2065
    %v2067 = vand.u32 %v2066, 4294901760
    %2068 = vmatpush1.msra.mxu0 %v2067
    %2069 = vmatprep.subr.mxu0 0.0
    %v2070 = vand.u32 %v134, 4294901760
    %v2071 = vsub.f32 %v134, %v2070
    %v2072 = vand.u32 %v2071, 4294901760
    %v2073 = vsub.f32 %v2071, %v2072
    %v2074 = vand.u32 %v2073, 4294901760
    %2075 = vmatpush1.msra.mxu0 %v2074
    %2076 = vmatprep.subr.mxu0 0.0
    %v2077 = vand.u32 %v135, 4294901760
    %v2078 = vsub.f32 %v135, %v2077
    %v2079 = vand.u32 %v2078, 4294901760
    %v2080 = vsub.f32 %v2078, %v2079
    %v2081 = vand.u32 %v2080, 4294901760
    %2082 = vmatpush1.msra.mxu0 %v2081
    %v2083 = vand.u32 %v300, 4294901760
    %2084 = vmatprep.mubr.f32.mxu0 %v2083
    %v2085 = vand.u32 %v297, 4294901760
    %2086 = vmatmul.mubr.f32.gmra.mrb[0].mxu0 %v2085
    %v2087 = vpop.f32.mrb[0].mxu0
    %v2088 = vadd.f32 %v1811, %v2087
    %v2089 = vpop.f32.mrb[0].mxu0
    %v2090 = vand.u32 %v417, 4294901760
    %2091 = vmatprep.mubr.f32.mxu0 %v2090
    %v2092 = vand.u32 %v414, 4294901760
    %2093 = vmatmul.mubr.f32.gmra.mrb[0].mxu0 %v2092
    %v2094 = vpop.f32.mrb[0].mxu0
    %v2095 = vadd.f32 %v1826, %v2094
    %v2096 = vpop.f32.mrb[0].mxu0
    %v2097 = vand.u32 %v534, 4294901760
    %2098 = vmatprep.mubr.f32.mxu0 %v2097
    %v2099 = vand.u32 %v531, 4294901760
    %2100 = vmatmul.mubr.f32.gmra.mrb[0].mxu0 %v2099
    %v2101 = vpop.f32.mrb[0].mxu0
    %v2102 = vadd.f32 %v1841, %v2101
    %v2103 = vpop.f32.mrb[0].mxu0
    %v2104 = vand.u32 %v651, 4294901760
    %2105 = vmatprep.mubr.f32.mxu0 %v2104
    %v2106 = vand.u32 %v648, 4294901760
    %2107 = vmatmul.mubr.f32.gmra.mrb[0].mxu0 %v2106
    %v2108 = vpop.f32.mrb[0].mxu0
    %v2109 = vadd.f32 %v1856, %v2108
    %v2110 = vpop.f32.mrb[0].mxu0
    %2111 = vdwg.mxu0
    %2112 = vmatprep.subr.mxu0 0.0
    %v2113 = vand.u32 %v104, 4294901760
    %v2114 = vsub.f32 %v104, %v2113
    %2115 = vmatpush1.msra.mxu0 %v2114
    %2116 = vmatprep.subr.mxu0 0.0
    %v2117 = vand.u32 %v105, 4294901760
    %v2118 = vsub.f32 %v105, %v2117
    %2119 = vmatpush1.msra.mxu0 %v2118
    %2120 = vmatprep.subr.mxu0 0.0
    %v2121 = vand.u32 %v106, 4294901760
    %v2122 = vsub.f32 %v106, %v2121
    %2123 = vmatpush1.msra.mxu0 %v2122
    %2124 = vmatprep.subr.mxu0 0.0
    %v2125 = vand.u32 %v107, 4294901760
    %v2126 = vsub.f32 %v107, %v2125
    %2127 = vmatpush1.msra.mxu0 %v2126
    %2128 = vmatprep.subr.mxu0 0.0
    %v2129 = vand.u32 %v108, 4294901760
    %v2130 = vsub.f32 %v108, %v2129
    %2131 = vmatpush1.msra.mxu0 %v2130
    %2132 = vmatprep.subr.mxu0 0.0
    %v2133 = vand.u32 %v109, 4294901760
    %v2134 = vsub.f32 %v109, %v2133
    %2135 = vmatpush1.msra.mxu0 %v2134
    %2136 = vmatprep.subr.mxu0 0.0
    %v2137 = vand.u32 %v110, 4294901760
    %v2138 = vsub.f32 %v110, %v2137
    %2139 = vmatpush1.msra.mxu0 %v2138
    %2140 = vmatprep.subr.mxu0 0.0
    %v2141 = vand.u32 %v111, 4294901760
    %v2142 = vsub.f32 %v111, %v2141
    %2143 = vmatpush1.msra.mxu0 %v2142
    %2144 = vmatprep.subr.mxu0 0.0
    %v2145 = vand.u32 %v112, 4294901760
    %v2146 = vsub.f32 %v112, %v2145
    %2147 = vmatpush1.msra.mxu0 %v2146
    %2148 = vmatprep.subr.mxu0 0.0
    %v2149 = vand.u32 %v113, 4294901760
    %v2150 = vsub.f32 %v113, %v2149
    %2151 = vmatpush1.msra.mxu0 %v2150
    %2152 = vmatprep.subr.mxu0 0.0
    %v2153 = vand.u32 %v114, 4294901760
    %v2154 = vsub.f32 %v114, %v2153
    %2155 = vmatpush1.msra.mxu0 %v2154
    %2156 = vmatprep.subr.mxu0 0.0
    %v2157 = vand.u32 %v115, 4294901760
    %v2158 = vsub.f32 %v115, %v2157
    %2159 = vmatpush1.msra.mxu0 %v2158
    %2160 = vmatprep.subr.mxu0 0.0
    %v2161 = vand.u32 %v116, 4294901760
    %v2162 = vsub.f32 %v116, %v2161
    %2163 = vmatpush1.msra.mxu0 %v2162
    %2164 = vmatprep.subr.mxu0 0.0
    %v2165 = vand.u32 %v117, 4294901760
    %v2166 = vsub.f32 %v117, %v2165
    %2167 = vmatpush1.msra.mxu0 %v2166
    %2168 = vmatprep.subr.mxu0 0.0
    %v2169 = vand.u32 %v118, 4294901760
    %v2170 = vsub.f32 %v118, %v2169
    %2171 = vmatpush1.msra.mxu0 %v2170
    %2172 = vmatprep.subr.mxu0 0.0
    %v2173 = vand.u32 %v119, 4294901760
    %v2174 = vsub.f32 %v119, %v2173
    %2175 = vmatpush1.msra.mxu0 %v2174
    %2176 = vmatprep.subr.mxu0 0.0
    %v2177 = vand.u32 %v120, 4294901760
    %v2178 = vsub.f32 %v120, %v2177
    %2179 = vmatpush1.msra.mxu0 %v2178
    %2180 = vmatprep.subr.mxu0 0.0
    %v2181 = vand.u32 %v121, 4294901760
    %v2182 = vsub.f32 %v121, %v2181
    %2183 = vmatpush1.msra.mxu0 %v2182
    %2184 = vmatprep.subr.mxu0 0.0
    %v2185 = vand.u32 %v122, 4294901760
    %v2186 = vsub.f32 %v122, %v2185
    %2187 = vmatpush1.msra.mxu0 %v2186
    %2188 = vmatprep.subr.mxu0 0.0
    %v2189 = vand.u32 %v123, 4294901760
    %v2190 = vsub.f32 %v123, %v2189
    %2191 = vmatpush1.msra.mxu0 %v2190
    %2192 = vmatprep.subr.mxu0 0.0
    %v2193 = vand.u32 %v124, 4294901760
    %v2194 = vsub.f32 %v124, %v2193
    %2195 = vmatpush1.msra.mxu0 %v2194
    %2196 = vmatprep.subr.mxu0 0.0
    %v2197 = vand.u32 %v125, 4294901760
    %v2198 = vsub.f32 %v125, %v2197
    %2199 = vmatpush1.msra.mxu0 %v2198
    %2200 = vmatprep.subr.mxu0 0.0
    %v2201 = vand.u32 %v126, 4294901760
    %v2202 = vsub.f32 %v126, %v2201
    %2203 = vmatpush1.msra.mxu0 %v2202
    %2204 = vmatprep.subr.mxu0 0.0
    %v2205 = vand.u32 %v127, 4294901760
    %v2206 = vsub.f32 %v127, %v2205
    %2207 = vmatpush1.msra.mxu0 %v2206
    %2208 = vmatprep.subr.mxu0 0.0
    %v2209 = vand.u32 %v128, 4294901760
    %v2210 = vsub.f32 %v128, %v2209
    %2211 = vmatpush1.msra.mxu0 %v2210
    %2212 = vmatprep.subr.mxu0 0.0
    %v2213 = vand.u32 %v129, 4294901760
    %v2214 = vsub.f32 %v129, %v2213
    %2215 = vmatpush1.msra.mxu0 %v2214
    %2216 = vmatprep.subr.mxu0 0.0
    %v2217 = vand.u32 %v130, 4294901760
    %v2218 = vsub.f32 %v130, %v2217
    %2219 = vmatpush1.msra.mxu0 %v2218
    %2220 = vmatprep.subr.mxu0 0.0
    %v2221 = vand.u32 %v131, 4294901760
    %v2222 = vsub.f32 %v131, %v2221
    %2223 = vmatpush1.msra.mxu0 %v2222
    %2224 = vmatprep.subr.mxu0 0.0
    %v2225 = vand.u32 %v132, 4294901760
    %v2226 = vsub.f32 %v132, %v2225
    %2227 = vmatpush1.msra.mxu0 %v2226
    %2228 = vmatprep.subr.mxu0 0.0
    %v2229 = vand.u32 %v133, 4294901760
    %v2230 = vsub.f32 %v133, %v2229
    %2231 = vmatpush1.msra.mxu0 %v2230
    %2232 = vmatprep.subr.mxu0 0.0
    %v2233 = vand.u32 %v134, 4294901760
    %v2234 = vsub.f32 %v134, %v2233
    %2235 = vmatpush1.msra.mxu0 %v2234
    %2236 = vmatprep.subr.mxu0 0.0
    %v2237 = vand.u32 %v135, 4294901760
    %v2238 = vsub.f32 %v135, %v2237
    %2239 = vmatpush1.msra.mxu0 %v2238
    %v2240 = vand.u32 %v300, 4294901760
    %v2241 = vsub.f32 %v300, %v2240
    %2242 = vmatprep.mubr.f32.mxu0 %v2241
    %v2243 = vand.u32 %v297, 4294901760
    %v2244 = vsub.f32 %v297, %v2243
    %2245 = vmatmul.mubr.f32.gmra.mrb[0].mxu0 %v2244
    %v2246 = vpop.f32.mrb[0].mxu0
    %v2247 = vadd.f32 %v2088, %v2246
    %v2248 = vpop.f32.mrb[0].mxu0
    %v2249 = vand.u32 %v417, 4294901760
    %v2250 = vsub.f32 %v417, %v2249
    %2251 = vmatprep.mubr.f32.mxu0 %v2250
    %v2252 = vand.u32 %v414, 4294901760
    %v2253 = vsub.f32 %v414, %v2252
    %2254 = vmatmul.mubr.f32.gmra.mrb[0].mxu0 %v2253
    %v2255 = vpop.f32.mrb[0].mxu0
    %v2256 = vadd.f32 %v2095, %v2255
    %v2257 = vpop.f32.mrb[0].mxu0
    %v2258 = vand.u32 %v534, 4294901760
    %v2259 = vsub.f32 %v534, %v2258
    %2260 = vmatprep.mubr.f32.mxu0 %v2259
    %v2261 = vand.u32 %v531, 4294901760
    %v2262 = vsub.f32 %v531, %v2261
    %2263 = vmatmul.mubr.f32.gmra.mrb[0].mxu0 %v2262
    %v2264 = vpop.f32.mrb[0].mxu0
    %v2265 = vadd.f32 %v2102, %v2264
    %v2266 = vpop.f32.mrb[0].mxu0
    %v2267 = vand.u32 %v651, 4294901760
    %v2268 = vsub.f32 %v651, %v2267
    %2269 = vmatprep.mubr.f32.mxu0 %v2268
    %v2270 = vand.u32 %v648, 4294901760
    %v2271 = vsub.f32 %v648, %v2270
    %2272 = vmatmul.mubr.f32.gmra.mrb[0].mxu0 %v2271
    %v2273 = vpop.f32.mrb[0].mxu0
    %v2274 = vadd.f32 %v2109, %v2273
    %v2275 = vpop.f32.mrb[0].mxu0
    %2276 = vdwg.mxu0
    %2277 = vmatprep.subr.mxu0 0.0
    %v2278 = vand.u32 %v104, 4294901760
    %2279 = vmatpush1.msra.mxu0 %v2278
    %2280 = vmatprep.subr.mxu0 0.0
    %v2281 = vand.u32 %v105, 4294901760
    %2282 = vmatpush1.msra.mxu0 %v2281
    %2283 = vmatprep.subr.mxu0 0.0
    %v2284 = vand.u32 %v106, 4294901760
    %2285 = vmatpush1.msra.mxu0 %v2284
    %2286 = vmatprep.subr.mxu0 0.0
    %v2287 = vand.u32 %v107, 4294901760
    %2288 = vmatpush1.msra.mxu0 %v2287
    %2289 = vmatprep.subr.mxu0 0.0
    %v2290 = vand.u32 %v108, 4294901760
    %2291 = vmatpush1.msra.mxu0 %v2290
    %2292 = vmatprep.subr.mxu0 0.0
    %v2293 = vand.u32 %v109, 4294901760
    %2294 = vmatpush1.msra.mxu0 %v2293
    %2295 = vmatprep.subr.mxu0 0.0
    %v2296 = vand.u32 %v110, 4294901760
    %2297 = vmatpush1.msra.mxu0 %v2296
    %2298 = vmatprep.subr.mxu0 0.0
    %v2299 = vand.u32 %v111, 4294901760
    %2300 = vmatpush1.msra.mxu0 %v2299
    %2301 = vmatprep.subr.mxu0 0.0
    %v2302 = vand.u32 %v112, 4294901760
    %2303 = vmatpush1.msra.mxu0 %v2302
    %2304 = vmatprep.subr.mxu0 0.0
    %v2305 = vand.u32 %v113, 4294901760
    %2306 = vmatpush1.msra.mxu0 %v2305
    %2307 = vmatprep.subr.mxu0 0.0
    %v2308 = vand.u32 %v114, 4294901760
    %2309 = vmatpush1.msra.mxu0 %v2308
    %2310 = vmatprep.subr.mxu0 0.0
    %v2311 = vand.u32 %v115, 4294901760
    %2312 = vmatpush1.msra.mxu0 %v2311
    %2313 = vmatprep.subr.mxu0 0.0
    %v2314 = vand.u32 %v116, 4294901760
    %2315 = vmatpush1.msra.mxu0 %v2314
    %2316 = vmatprep.subr.mxu0 0.0
    %v2317 = vand.u32 %v117, 4294901760
    %2318 = vmatpush1.msra.mxu0 %v2317
    %2319 = vmatprep.subr.mxu0 0.0
    %v2320 = vand.u32 %v118, 4294901760
    %2321 = vmatpush1.msra.mxu0 %v2320
    %2322 = vmatprep.subr.mxu0 0.0
    %v2323 = vand.u32 %v119, 4294901760
    %2324 = vmatpush1.msra.mxu0 %v2323
    %2325 = vmatprep.subr.mxu0 0.0
    %v2326 = vand.u32 %v120, 4294901760
    %2327 = vmatpush1.msra.mxu0 %v2326
    %2328 = vmatprep.subr.mxu0 0.0
    %v2329 = vand.u32 %v121, 4294901760
    %2330 = vmatpush1.msra.mxu0 %v2329
    %2331 = vmatprep.subr.mxu0 0.0
    %v2332 = vand.u32 %v122, 4294901760
    %2333 = vmatpush1.msra.mxu0 %v2332
    %2334 = vmatprep.subr.mxu0 0.0
    %v2335 = vand.u32 %v123, 4294901760
    %2336 = vmatpush1.msra.mxu0 %v2335
    %2337 = vmatprep.subr.mxu0 0.0
    %v2338 = vand.u32 %v124, 4294901760
    %2339 = vmatpush1.msra.mxu0 %v2338
    %2340 = vmatprep.subr.mxu0 0.0
    %v2341 = vand.u32 %v125, 4294901760
    %2342 = vmatpush1.msra.mxu0 %v2341
    %2343 = vmatprep.subr.mxu0 0.0
    %v2344 = vand.u32 %v126, 4294901760
    %2345 = vmatpush1.msra.mxu0 %v2344
    %2346 = vmatprep.subr.mxu0 0.0
    %v2347 = vand.u32 %v127, 4294901760
    %2348 = vmatpush1.msra.mxu0 %v2347
    %2349 = vmatprep.subr.mxu0 0.0
    %v2350 = vand.u32 %v128, 4294901760
    %2351 = vmatpush1.msra.mxu0 %v2350
    %2352 = vmatprep.subr.mxu0 0.0
    %v2353 = vand.u32 %v129, 4294901760
    %2354 = vmatpush1.msra.mxu0 %v2353
    %2355 = vmatprep.subr.mxu0 0.0
    %v2356 = vand.u32 %v130, 4294901760
    %2357 = vmatpush1.msra.mxu0 %v2356
    %2358 = vmatprep.subr.mxu0 0.0
    %v2359 = vand.u32 %v131, 4294901760
    %2360 = vmatpush1.msra.mxu0 %v2359
    %2361 = vmatprep.subr.mxu0 0.0
    %v2362 = vand.u32 %v132, 4294901760
    %2363 = vmatpush1.msra.mxu0 %v2362
    %2364 = vmatprep.subr.mxu0 0.0
    %v2365 = vand.u32 %v133, 4294901760
    %2366 = vmatpush1.msra.mxu0 %v2365
    %2367 = vmatprep.subr.mxu0 0.0
    %v2368 = vand.u32 %v134, 4294901760
    %2369 = vmatpush1.msra.mxu0 %v2368
    %2370 = vmatprep.subr.mxu0 0.0
    %v2371 = vand.u32 %v135, 4294901760
    %2372 = vmatpush1.msra.mxu0 %v2371
    %v2373 = vand.u32 %v300, 4294901760
    %v2374 = vsub.f32 %v300, %v2373
    %v2375 = vand.u32 %v2374, 4294901760
    %2376 = vmatprep.mubr.f32.mxu0 %v2375
    %v2377 = vand.u32 %v297, 4294901760
    %v2378 = vsub.f32 %v297, %v2377
    %v2379 = vand.u32 %v2378, 4294901760
    %2380 = vmatmul.mubr.f32.gmra.mrb[0].mxu0 %v2379
    %v2381 = vpop.f32.mrb[0].mxu0
    %v2382 = vadd.f32 %v2247, %v2381
    %v2383 = vpop.f32.mrb[0].mxu0
    %v2384 = vand.u32 %v417, 4294901760
    %v2385 = vsub.f32 %v417, %v2384
    %v2386 = vand.u32 %v2385, 4294901760
    %2387 = vmatprep.mubr.f32.mxu0 %v2386
    %v2388 = vand.u32 %v414, 4294901760
    %v2389 = vsub.f32 %v414, %v2388
    %v2390 = vand.u32 %v2389, 4294901760
    %2391 = vmatmul.mubr.f32.gmra.mrb[0].mxu0 %v2390
    %v2392 = vpop.f32.mrb[0].mxu0
    %v2393 = vadd.f32 %v2256, %v2392
    %v2394 = vpop.f32.mrb[0].mxu0
    %v2395 = vand.u32 %v534, 4294901760
    %v2396 = vsub.f32 %v534, %v2395
    %v2397 = vand.u32 %v2396, 4294901760
    %2398 = vmatprep.mubr.f32.mxu0 %v2397
    %v2399 = vand.u32 %v531, 4294901760
    %v2400 = vsub.f32 %v531, %v2399
    %v2401 = vand.u32 %v2400, 4294901760
    %2402 = vmatmul.mubr.f32.gmra.mrb[0].mxu0 %v2401
    %v2403 = vpop.f32.mrb[0].mxu0
    %v2404 = vadd.f32 %v2265, %v2403
    %v2405 = vpop.f32.mrb[0].mxu0
    %v2406 = vand.u32 %v651, 4294901760
    %v2407 = vsub.f32 %v651, %v2406
    %v2408 = vand.u32 %v2407, 4294901760
    %2409 = vmatprep.mubr.f32.mxu0 %v2408
    %v2410 = vand.u32 %v648, 4294901760
    %v2411 = vsub.f32 %v648, %v2410
    %v2412 = vand.u32 %v2411, 4294901760
    %2413 = vmatmul.mubr.f32.gmra.mrb[0].mxu0 %v2412
    %v2414 = vpop.f32.mrb[0].mxu0
    %v2415 = vadd.f32 %v2274, %v2414
    %v2416 = vpop.f32.mrb[0].mxu0
    %2417 = vdwg.mxu0
    %2418 = vmatprep.subr.mxu0 0.0
    %v2419 = vand.u32 %v104, 4294901760
    %v2420 = vsub.f32 %v104, %v2419
    %v2421 = vand.u32 %v2420, 4294901760
    %2422 = vmatpush1.msra.mxu0 %v2421
    %2423 = vmatprep.subr.mxu0 0.0
    %v2424 = vand.u32 %v105, 4294901760
    %v2425 = vsub.f32 %v105, %v2424
    %v2426 = vand.u32 %v2425, 4294901760
    %2427 = vmatpush1.msra.mxu0 %v2426
    %2428 = vmatprep.subr.mxu0 0.0
    %v2429 = vand.u32 %v106, 4294901760
    %v2430 = vsub.f32 %v106, %v2429
    %v2431 = vand.u32 %v2430, 4294901760
    %2432 = vmatpush1.msra.mxu0 %v2431
    %2433 = vmatprep.subr.mxu0 0.0
    %v2434 = vand.u32 %v107, 4294901760
    %v2435 = vsub.f32 %v107, %v2434
    %v2436 = vand.u32 %v2435, 4294901760
    %2437 = vmatpush1.msra.mxu0 %v2436
    %2438 = vmatprep.subr.mxu0 0.0
    %v2439 = vand.u32 %v108, 4294901760
    %v2440 = vsub.f32 %v108, %v2439
    %v2441 = vand.u32 %v2440, 4294901760
    %2442 = vmatpush1.msra.mxu0 %v2441
    %2443 = vmatprep.subr.mxu0 0.0
    %v2444 = vand.u32 %v109, 4294901760
    %v2445 = vsub.f32 %v109, %v2444
    %v2446 = vand.u32 %v2445, 4294901760
    %2447 = vmatpush1.msra.mxu0 %v2446
    %2448 = vmatprep.subr.mxu0 0.0
    %v2449 = vand.u32 %v110, 4294901760
    %v2450 = vsub.f32 %v110, %v2449
    %v2451 = vand.u32 %v2450, 4294901760
    %2452 = vmatpush1.msra.mxu0 %v2451
    %2453 = vmatprep.subr.mxu0 0.0
    %v2454 = vand.u32 %v111, 4294901760
    %v2455 = vsub.f32 %v111, %v2454
    %v2456 = vand.u32 %v2455, 4294901760
    %2457 = vmatpush1.msra.mxu0 %v2456
    %2458 = vmatprep.subr.mxu0 0.0
    %v2459 = vand.u32 %v112, 4294901760
    %v2460 = vsub.f32 %v112, %v2459
    %v2461 = vand.u32 %v2460, 4294901760
    %2462 = vmatpush1.msra.mxu0 %v2461
    %2463 = vmatprep.subr.mxu0 0.0
    %v2464 = vand.u32 %v113, 4294901760
    %v2465 = vsub.f32 %v113, %v2464
    %v2466 = vand.u32 %v2465, 4294901760
    %2467 = vmatpush1.msra.mxu0 %v2466
    %2468 = vmatprep.subr.mxu0 0.0
    %v2469 = vand.u32 %v114, 4294901760
    %v2470 = vsub.f32 %v114, %v2469
    %v2471 = vand.u32 %v2470, 4294901760
    %2472 = vmatpush1.msra.mxu0 %v2471
    %2473 = vmatprep.subr.mxu0 0.0
    %v2474 = vand.u32 %v115, 4294901760
    %v2475 = vsub.f32 %v115, %v2474
    %v2476 = vand.u32 %v2475, 4294901760
    %2477 = vmatpush1.msra.mxu0 %v2476
    %2478 = vmatprep.subr.mxu0 0.0
    %v2479 = vand.u32 %v116, 4294901760
    %v2480 = vsub.f32 %v116, %v2479
    %v2481 = vand.u32 %v2480, 4294901760
    %2482 = vmatpush1.msra.mxu0 %v2481
    %2483 = vmatprep.subr.mxu0 0.0
    %v2484 = vand.u32 %v117, 4294901760
    %v2485 = vsub.f32 %v117, %v2484
    %v2486 = vand.u32 %v2485, 4294901760
    %2487 = vmatpush1.msra.mxu0 %v2486
    %2488 = vmatprep.subr.mxu0 0.0
    %v2489 = vand.u32 %v118, 4294901760
    %v2490 = vsub.f32 %v118, %v2489
    %v2491 = vand.u32 %v2490, 4294901760
    %2492 = vmatpush1.msra.mxu0 %v2491
    %2493 = vmatprep.subr.mxu0 0.0
    %v2494 = vand.u32 %v119, 4294901760
    %v2495 = vsub.f32 %v119, %v2494
    %v2496 = vand.u32 %v2495, 4294901760
    %2497 = vmatpush1.msra.mxu0 %v2496
    %2498 = vmatprep.subr.mxu0 0.0
    %v2499 = vand.u32 %v120, 4294901760
    %v2500 = vsub.f32 %v120, %v2499
    %v2501 = vand.u32 %v2500, 4294901760
    %2502 = vmatpush1.msra.mxu0 %v2501
    %2503 = vmatprep.subr.mxu0 0.0
    %v2504 = vand.u32 %v121, 4294901760
    %v2505 = vsub.f32 %v121, %v2504
    %v2506 = vand.u32 %v2505, 4294901760
    %2507 = vmatpush1.msra.mxu0 %v2506
    %2508 = vmatprep.subr.mxu0 0.0
    %v2509 = vand.u32 %v122, 4294901760
    %v2510 = vsub.f32 %v122, %v2509
    %v2511 = vand.u32 %v2510, 4294901760
    %2512 = vmatpush1.msra.mxu0 %v2511
    %2513 = vmatprep.subr.mxu0 0.0
    %v2514 = vand.u32 %v123, 4294901760
    %v2515 = vsub.f32 %v123, %v2514
    %v2516 = vand.u32 %v2515, 4294901760
    %2517 = vmatpush1.msra.mxu0 %v2516
    %2518 = vmatprep.subr.mxu0 0.0
    %v2519 = vand.u32 %v124, 4294901760
    %v2520 = vsub.f32 %v124, %v2519
    %v2521 = vand.u32 %v2520, 4294901760
    %2522 = vmatpush1.msra.mxu0 %v2521
    %2523 = vmatprep.subr.mxu0 0.0
    %v2524 = vand.u32 %v125, 4294901760
    %v2525 = vsub.f32 %v125, %v2524
    %v2526 = vand.u32 %v2525, 4294901760
    %2527 = vmatpush1.msra.mxu0 %v2526
    %2528 = vmatprep.subr.mxu0 0.0
    %v2529 = vand.u32 %v126, 4294901760
    %v2530 = vsub.f32 %v126, %v2529
    %v2531 = vand.u32 %v2530, 4294901760
    %2532 = vmatpush1.msra.mxu0 %v2531
    %2533 = vmatprep.subr.mxu0 0.0
    %v2534 = vand.u32 %v127, 4294901760
    %v2535 = vsub.f32 %v127, %v2534
    %v2536 = vand.u32 %v2535, 4294901760
    %2537 = vmatpush1.msra.mxu0 %v2536
    %2538 = vmatprep.subr.mxu0 0.0
    %v2539 = vand.u32 %v128, 4294901760
    %v2540 = vsub.f32 %v128, %v2539
    %v2541 = vand.u32 %v2540, 4294901760
    %2542 = vmatpush1.msra.mxu0 %v2541
    %2543 = vmatprep.subr.mxu0 0.0
    %v2544 = vand.u32 %v129, 4294901760
    %v2545 = vsub.f32 %v129, %v2544
    %v2546 = vand.u32 %v2545, 4294901760
    %2547 = vmatpush1.msra.mxu0 %v2546
    %2548 = vmatprep.subr.mxu0 0.0
    %v2549 = vand.u32 %v130, 4294901760
    %v2550 = vsub.f32 %v130, %v2549
    %v2551 = vand.u32 %v2550, 4294901760
    %2552 = vmatpush1.msra.mxu0 %v2551
    %2553 = vmatprep.subr.mxu0 0.0
    %v2554 = vand.u32 %v131, 4294901760
    %v2555 = vsub.f32 %v131, %v2554
    %v2556 = vand.u32 %v2555, 4294901760
    %2557 = vmatpush1.msra.mxu0 %v2556
    %2558 = vmatprep.subr.mxu0 0.0
    %v2559 = vand.u32 %v132, 4294901760
    %v2560 = vsub.f32 %v132, %v2559
    %v2561 = vand.u32 %v2560, 4294901760
    %2562 = vmatpush1.msra.mxu0 %v2561
    %2563 = vmatprep.subr.mxu0 0.0
    %v2564 = vand.u32 %v133, 4294901760
    %v2565 = vsub.f32 %v133, %v2564
    %v2566 = vand.u32 %v2565, 4294901760
    %2567 = vmatpush1.msra.mxu0 %v2566
    %2568 = vmatprep.subr.mxu0 0.0
    %v2569 = vand.u32 %v134, 4294901760
    %v2570 = vsub.f32 %v134, %v2569
    %v2571 = vand.u32 %v2570, 4294901760
    %2572 = vmatpush1.msra.mxu0 %v2571
    %2573 = vmatprep.subr.mxu0 0.0
    %v2574 = vand.u32 %v135, 4294901760
    %v2575 = vsub.f32 %v135, %v2574
    %v2576 = vand.u32 %v2575, 4294901760
    %2577 = vmatpush1.msra.mxu0 %v2576
    %v2578 = vand.u32 %v300, 4294901760
    %2579 = vmatprep.mubr.f32.mxu0 %v2578
    %v2580 = vand.u32 %v297, 4294901760
    %2581 = vmatmul.mubr.f32.gmra.mrb[0].mxu0 %v2580
    %v2582 = vpop.f32.mrb[0].mxu0
    %v2583 = vadd.f32 %v2382, %v2582
    %v2584 = vpop.f32.mrb[0].mxu0
    %v2585 = vand.u32 %v417, 4294901760
    %2586 = vmatprep.mubr.f32.mxu0 %v2585
    %v2587 = vand.u32 %v414, 4294901760
    %2588 = vmatmul.mubr.f32.gmra.mrb[0].mxu0 %v2587
    %v2589 = vpop.f32.mrb[0].mxu0
    %v2590 = vadd.f32 %v2393, %v2589
    %v2591 = vpop.f32.mrb[0].mxu0
    %v2592 = vand.u32 %v534, 4294901760
    %2593 = vmatprep.mubr.f32.mxu0 %v2592
    %v2594 = vand.u32 %v531, 4294901760
    %2595 = vmatmul.mubr.f32.gmra.mrb[0].mxu0 %v2594
    %v2596 = vpop.f32.mrb[0].mxu0
    %v2597 = vadd.f32 %v2404, %v2596
    %v2598 = vpop.f32.mrb[0].mxu0
    %v2599 = vand.u32 %v651, 4294901760
    %2600 = vmatprep.mubr.f32.mxu0 %v2599
    %v2601 = vand.u32 %v648, 4294901760
    %2602 = vmatmul.mubr.f32.gmra.mrb[0].mxu0 %v2601
    %v2603 = vpop.f32.mrb[0].mxu0
    %v2604 = vadd.f32 %v2415, %v2603
    %v2605 = vpop.f32.mrb[0].mxu0
    %2606 = vdwg.mxu0
    %2607 = vmatprep.subr.mxu0 0.0
    %v2608 = vand.u32 %v104, 4294901760
    %2609 = vmatpush1.msra.mxu0 %v2608
    %2610 = vmatprep.subr.mxu0 0.0
    %v2611 = vand.u32 %v105, 4294901760
    %2612 = vmatpush1.msra.mxu0 %v2611
    %2613 = vmatprep.subr.mxu0 0.0
    %v2614 = vand.u32 %v106, 4294901760
    %2615 = vmatpush1.msra.mxu0 %v2614
    %2616 = vmatprep.subr.mxu0 0.0
    %v2617 = vand.u32 %v107, 4294901760
    %2618 = vmatpush1.msra.mxu0 %v2617
    %2619 = vmatprep.subr.mxu0 0.0
    %v2620 = vand.u32 %v108, 4294901760
    %2621 = vmatpush1.msra.mxu0 %v2620
    %2622 = vmatprep.subr.mxu0 0.0
    %v2623 = vand.u32 %v109, 4294901760
    %2624 = vmatpush1.msra.mxu0 %v2623
    %2625 = vmatprep.subr.mxu0 0.0
    %v2626 = vand.u32 %v110, 4294901760
    %2627 = vmatpush1.msra.mxu0 %v2626
    %2628 = vmatprep.subr.mxu0 0.0
    %v2629 = vand.u32 %v111, 4294901760
    %2630 = vmatpush1.msra.mxu0 %v2629
    %2631 = vmatprep.subr.mxu0 0.0
    %v2632 = vand.u32 %v112, 4294901760
    %2633 = vmatpush1.msra.mxu0 %v2632
    %2634 = vmatprep.subr.mxu0 0.0
    %v2635 = vand.u32 %v113, 4294901760
    %2636 = vmatpush1.msra.mxu0 %v2635
    %2637 = vmatprep.subr.mxu0 0.0
    %v2638 = vand.u32 %v114, 4294901760
    %2639 = vmatpush1.msra.mxu0 %v2638
    %2640 = vmatprep.subr.mxu0 0.0
    %v2641 = vand.u32 %v115, 4294901760
    %2642 = vmatpush1.msra.mxu0 %v2641
    %2643 = vmatprep.subr.mxu0 0.0
    %v2644 = vand.u32 %v116, 4294901760
    %2645 = vmatpush1.msra.mxu0 %v2644
    %2646 = vmatprep.subr.mxu0 0.0
    %v2647 = vand.u32 %v117, 4294901760
    %2648 = vmatpush1.msra.mxu0 %v2647
    %2649 = vmatprep.subr.mxu0 0.0
    %v2650 = vand.u32 %v118, 4294901760
    %2651 = vmatpush1.msra.mxu0 %v2650
    %2652 = vmatprep.subr.mxu0 0.0
    %v2653 = vand.u32 %v119, 4294901760
    %2654 = vmatpush1.msra.mxu0 %v2653
    %2655 = vmatprep.subr.mxu0 0.0
    %v2656 = vand.u32 %v120, 4294901760
    %2657 = vmatpush1.msra.mxu0 %v2656
    %2658 = vmatprep.subr.mxu0 0.0
    %v2659 = vand.u32 %v121, 4294901760
    %2660 = vmatpush1.msra.mxu0 %v2659
    %2661 = vmatprep.subr.mxu0 0.0
    %v2662 = vand.u32 %v122, 4294901760
    %2663 = vmatpush1.msra.mxu0 %v2662
    %2664 = vmatprep.subr.mxu0 0.0
    %v2665 = vand.u32 %v123, 4294901760
    %2666 = vmatpush1.msra.mxu0 %v2665
    %2667 = vmatprep.subr.mxu0 0.0
    %v2668 = vand.u32 %v124, 4294901760
    %2669 = vmatpush1.msra.mxu0 %v2668
    %2670 = vmatprep.subr.mxu0 0.0
    %v2671 = vand.u32 %v125, 4294901760
    %2672 = vmatpush1.msra.mxu0 %v2671
    %2673 = vmatprep.subr.mxu0 0.0
    %v2674 = vand.u32 %v126, 4294901760
    %2675 = vmatpush1.msra.mxu0 %v2674
    %2676 = vmatprep.subr.mxu0 0.0
    %v2677 = vand.u32 %v127, 4294901760
    %2678 = vmatpush1.msra.mxu0 %v2677
    %2679 = vmatprep.subr.mxu0 0.0
    %v2680 = vand.u32 %v128, 4294901760
    %2681 = vmatpush1.msra.mxu0 %v2680
    %2682 = vmatprep.subr.mxu0 0.0
    %v2683 = vand.u32 %v129, 4294901760
    %2684 = vmatpush1.msra.mxu0 %v2683
    %2685 = vmatprep.subr.mxu0 0.0
    %v2686 = vand.u32 %v130, 4294901760
    %2687 = vmatpush1.msra.mxu0 %v2686
    %2688 = vmatprep.subr.mxu0 0.0
    %v2689 = vand.u32 %v131, 4294901760
    %2690 = vmatpush1.msra.mxu0 %v2689
    %2691 = vmatprep.subr.mxu0 0.0
    %v2692 = vand.u32 %v132, 4294901760
    %2693 = vmatpush1.msra.mxu0 %v2692
    %2694 = vmatprep.subr.mxu0 0.0
    %v2695 = vand.u32 %v133, 4294901760
    %2696 = vmatpush1.msra.mxu0 %v2695
    %2697 = vmatprep.subr.mxu0 0.0
    %v2698 = vand.u32 %v134, 4294901760
    %2699 = vmatpush1.msra.mxu0 %v2698
    %2700 = vmatprep.subr.mxu0 0.0
    %v2701 = vand.u32 %v135, 4294901760
    %2702 = vmatpush1.msra.mxu0 %v2701
    %v2703 = vand.u32 %v300, 4294901760
    %2704 = vmatprep.mubr.f32.mxu0 %v2703
    %v2705 = vand.u32 %v297, 4294901760
    %2706 = vmatmul.mubr.f32.gmra.mrb[0].mxu0 %v2705
    %v2707 = vpop.f32.mrb[0].mxu0
    %v2708 = vadd.f32 %v2583, %v2707
    %v2709 = vpop.f32.mrb[0].mxu0
    %v2710 = vand.u32 %v417, 4294901760
    %2711 = vmatprep.mubr.f32.mxu0 %v2710
    %v2712 = vand.u32 %v414, 4294901760
    %2713 = vmatmul.mubr.f32.gmra.mrb[0].mxu0 %v2712
    %v2714 = vpop.f32.mrb[0].mxu0
    %v2715 = vadd.f32 %v2590, %v2714
    %v2716 = vpop.f32.mrb[0].mxu0
    %v2717 = vand.u32 %v534, 4294901760
    %2718 = vmatprep.mubr.f32.mxu0 %v2717
    %v2719 = vand.u32 %v531, 4294901760
    %2720 = vmatmul.mubr.f32.gmra.mrb[0].mxu0 %v2719
    %v2721 = vpop.f32.mrb[0].mxu0
    %v2722 = vadd.f32 %v2597, %v2721
    %v2723 = vpop.f32.mrb[0].mxu0
    %v2724 = vand.u32 %v651, 4294901760
    %2725 = vmatprep.mubr.f32.mxu0 %v2724
    %v2726 = vand.u32 %v648, 4294901760
    %2727 = vmatmul.mubr.f32.gmra.mrb[0].mxu0 %v2726
    %v2728 = vpop.f32.mrb[0].mxu0
    %v2729 = vadd.f32 %v2604, %v2728
    %v2730 = vpop.f32.mrb[0].mxu0
    %2731 = vdwg.mxu0
    %2732 = vmatprep.subr.mxu0 0.0
    %v2733 = vand.u32 %v136, 4294901760
    %2734 = vmatpush1.msra.mxu0 %v2733
    %2735 = vmatprep.subr.mxu0 0.0
    %v2736 = vand.u32 %v137, 4294901760
    %2737 = vmatpush1.msra.mxu0 %v2736
    %2738 = vmatprep.subr.mxu0 0.0
    %v2739 = vand.u32 %v138, 4294901760
    %2740 = vmatpush1.msra.mxu0 %v2739
    %2741 = vmatprep.subr.mxu0 0.0
    %v2742 = vand.u32 %v139, 4294901760
    %2743 = vmatpush1.msra.mxu0 %v2742
    %2744 = vmatprep.subr.mxu0 0.0
    %v2745 = vand.u32 %v140, 4294901760
    %2746 = vmatpush1.msra.mxu0 %v2745
    %2747 = vmatprep.subr.mxu0 0.0
    %v2748 = vand.u32 %v141, 4294901760
    %2749 = vmatpush1.msra.mxu0 %v2748
    %2750 = vmatprep.subr.mxu0 0.0
    %v2751 = vand.u32 %v142, 4294901760
    %2752 = vmatpush1.msra.mxu0 %v2751
    %2753 = vmatprep.subr.mxu0 0.0
    %v2754 = vand.u32 %v143, 4294901760
    %2755 = vmatpush1.msra.mxu0 %v2754
    %2756 = vmatprep.subr.mxu0 0.0
    %v2757 = vand.u32 %v144, 4294901760
    %2758 = vmatpush1.msra.mxu0 %v2757
    %2759 = vmatprep.subr.mxu0 0.0
    %v2760 = vand.u32 %v145, 4294901760
    %2761 = vmatpush1.msra.mxu0 %v2760
    %2762 = vmatprep.subr.mxu0 0.0
    %v2763 = vand.u32 %v146, 4294901760
    %2764 = vmatpush1.msra.mxu0 %v2763
    %2765 = vmatprep.subr.mxu0 0.0
    %v2766 = vand.u32 %v147, 4294901760
    %2767 = vmatpush1.msra.mxu0 %v2766
    %2768 = vmatprep.subr.mxu0 0.0
    %v2769 = vand.u32 %v148, 4294901760
    %2770 = vmatpush1.msra.mxu0 %v2769
    %2771 = vmatprep.subr.mxu0 0.0
    %v2772 = vand.u32 %v149, 4294901760
    %2773 = vmatpush1.msra.mxu0 %v2772
    %2774 = vmatprep.subr.mxu0 0.0
    %v2775 = vand.u32 %v150, 4294901760
    %2776 = vmatpush1.msra.mxu0 %v2775
    %2777 = vmatprep.subr.mxu0 0.0
    %v2778 = vand.u32 %v151, 4294901760
    %2779 = vmatpush1.msra.mxu0 %v2778
    %2780 = vmatprep.subr.mxu0 0.0
    %2781 = vmatpush1.msra.mxu0 0.0
    %2782 = vmatprep.subr.mxu0 0.0
    %2783 = vmatpush1.msra.mxu0 0.0
    %2784 = vmatprep.subr.mxu0 0.0
    %2785 = vmatpush1.msra.mxu0 0.0
    %2786 = vmatprep.subr.mxu0 0.0
    %2787 = vmatpush1.msra.mxu0 0.0
    %2788 = vmatprep.subr.mxu0 0.0
    %2789 = vmatpush1.msra.mxu0 0.0
    %2790 = vmatprep.subr.mxu0 0.0
    %2791 = vmatpush1.msra.mxu0 0.0
    %2792 = vmatprep.subr.mxu0 0.0
    %2793 = vmatpush1.msra.mxu0 0.0
    %2794 = vmatprep.subr.mxu0 0.0
    %2795 = vmatpush1.msra.mxu0 0.0
    %2796 = vmatprep.subr.mxu0 0.0
    %2797 = vmatpush1.msra.mxu0 0.0
    %2798 = vmatprep.subr.mxu0 0.0
    %2799 = vmatpush1.msra.mxu0 0.0
    %2800 = vmatprep.subr.mxu0 0.0
    %2801 = vmatpush1.msra.mxu0 0.0
    %2802 = vmatprep.subr.mxu0 0.0
    %2803 = vmatpush1.msra.mxu0 0.0
    %2804 = vmatprep.subr.mxu0 0.0
    %2805 = vmatpush1.msra.mxu0 0.0
    %2806 = vmatprep.subr.mxu0 0.0
    %2807 = vmatpush1.msra.mxu0 0.0
    %2808 = vmatprep.subr.mxu0 0.0
    %2809 = vmatpush1.msra.mxu0 0.0
    %2810 = vmatprep.subr.mxu0 0.0
    %2811 = vmatpush1.msra.mxu0 0.0
    %2812 = vmatprep.mubr.f32.mxu0 0.0
    %v2813 = vand.u32 %v298, 4294901760
    %v2814 = vsub.f32 %v298, %v2813
    %v2815 = vand.u32 %v2814, 4294901760
    %v2816 = vsub.f32 %v2814, %v2815
    %v2817 = vand.u32 %v2816, 4294901760
    %2818 = vmatmul.mubr.f32.gmra.mrb[0].mxu0 %v2817
    %v2819 = vpop.f32.mrb[0].mxu0
    %v2820 = vadd.f32 %v2708, %v2819
    %v2821 = vpop.f32.mrb[0].mxu0
    %2822 = vmatprep.mubr.f32.mxu0 0.0
    %v2823 = vand.u32 %v415, 4294901760
    %v2824 = vsub.f32 %v415, %v2823
    %v2825 = vand.u32 %v2824, 4294901760
    %v2826 = vsub.f32 %v2824, %v2825
    %v2827 = vand.u32 %v2826, 4294901760
    %2828 = vmatmul.mubr.f32.gmra.mrb[0].mxu0 %v2827
    %v2829 = vpop.f32.mrb[0].mxu0
    %v2830 = vadd.f32 %v2715, %v2829
    %v2831 = vpop.f32.mrb[0].mxu0
    %2832 = vmatprep.mubr.f32.mxu0 0.0
    %v2833 = vand.u32 %v532, 4294901760
    %v2834 = vsub.f32 %v532, %v2833
    %v2835 = vand.u32 %v2834, 4294901760
    %v2836 = vsub.f32 %v2834, %v2835
    %v2837 = vand.u32 %v2836, 4294901760
    %2838 = vmatmul.mubr.f32.gmra.mrb[0].mxu0 %v2837
    %v2839 = vpop.f32.mrb[0].mxu0
    %v2840 = vadd.f32 %v2722, %v2839
    %v2841 = vpop.f32.mrb[0].mxu0
    %2842 = vmatprep.mubr.f32.mxu0 0.0
    %v2843 = vand.u32 %v649, 4294901760
    %v2844 = vsub.f32 %v649, %v2843
    %v2845 = vand.u32 %v2844, 4294901760
    %v2846 = vsub.f32 %v2844, %v2845
    %v2847 = vand.u32 %v2846, 4294901760
    %2848 = vmatmul.mubr.f32.gmra.mrb[0].mxu0 %v2847
    %v2849 = vpop.f32.mrb[0].mxu0
    %v2850 = vadd.f32 %v2729, %v2849
    %v2851 = vpop.f32.mrb[0].mxu0
    %2852 = vdwg.mxu0
    %2853 = vmatprep.subr.mxu0 0.0
    %v2854 = vand.u32 %v136, 4294901760
    %v2855 = vsub.f32 %v136, %v2854
    %v2856 = vand.u32 %v2855, 4294901760
    %v2857 = vsub.f32 %v2855, %v2856
    %v2858 = vand.u32 %v2857, 4294901760
    %2859 = vmatpush1.msra.mxu0 %v2858
    %2860 = vmatprep.subr.mxu0 0.0
    %v2861 = vand.u32 %v137, 4294901760
    %v2862 = vsub.f32 %v137, %v2861
    %v2863 = vand.u32 %v2862, 4294901760
    %v2864 = vsub.f32 %v2862, %v2863
    %v2865 = vand.u32 %v2864, 4294901760
    %2866 = vmatpush1.msra.mxu0 %v2865
    %2867 = vmatprep.subr.mxu0 0.0
    %v2868 = vand.u32 %v138, 4294901760
    %v2869 = vsub.f32 %v138, %v2868
    %v2870 = vand.u32 %v2869, 4294901760
    %v2871 = vsub.f32 %v2869, %v2870
    %v2872 = vand.u32 %v2871, 4294901760
    %2873 = vmatpush1.msra.mxu0 %v2872
    %2874 = vmatprep.subr.mxu0 0.0
    %v2875 = vand.u32 %v139, 4294901760
    %v2876 = vsub.f32 %v139, %v2875
    %v2877 = vand.u32 %v2876, 4294901760
    %v2878 = vsub.f32 %v2876, %v2877
    %v2879 = vand.u32 %v2878, 4294901760
    %2880 = vmatpush1.msra.mxu0 %v2879
    %2881 = vmatprep.subr.mxu0 0.0
    %v2882 = vand.u32 %v140, 4294901760
    %v2883 = vsub.f32 %v140, %v2882
    %v2884 = vand.u32 %v2883, 4294901760
    %v2885 = vsub.f32 %v2883, %v2884
    %v2886 = vand.u32 %v2885, 4294901760
    %2887 = vmatpush1.msra.mxu0 %v2886
    %2888 = vmatprep.subr.mxu0 0.0
    %v2889 = vand.u32 %v141, 4294901760
    %v2890 = vsub.f32 %v141, %v2889
    %v2891 = vand.u32 %v2890, 4294901760
    %v2892 = vsub.f32 %v2890, %v2891
    %v2893 = vand.u32 %v2892, 4294901760
    %2894 = vmatpush1.msra.mxu0 %v2893
    %2895 = vmatprep.subr.mxu0 0.0
    %v2896 = vand.u32 %v142, 4294901760
    %v2897 = vsub.f32 %v142, %v2896
    %v2898 = vand.u32 %v2897, 4294901760
    %v2899 = vsub.f32 %v2897, %v2898
    %v2900 = vand.u32 %v2899, 4294901760
    %2901 = vmatpush1.msra.mxu0 %v2900
    %2902 = vmatprep.subr.mxu0 0.0
    %v2903 = vand.u32 %v143, 4294901760
    %v2904 = vsub.f32 %v143, %v2903
    %v2905 = vand.u32 %v2904, 4294901760
    %v2906 = vsub.f32 %v2904, %v2905
    %v2907 = vand.u32 %v2906, 4294901760
    %2908 = vmatpush1.msra.mxu0 %v2907
    %2909 = vmatprep.subr.mxu0 0.0
    %v2910 = vand.u32 %v144, 4294901760
    %v2911 = vsub.f32 %v144, %v2910
    %v2912 = vand.u32 %v2911, 4294901760
    %v2913 = vsub.f32 %v2911, %v2912
    %v2914 = vand.u32 %v2913, 4294901760
    %2915 = vmatpush1.msra.mxu0 %v2914
    %2916 = vmatprep.subr.mxu0 0.0
    %v2917 = vand.u32 %v145, 4294901760
    %v2918 = vsub.f32 %v145, %v2917
    %v2919 = vand.u32 %v2918, 4294901760
    %v2920 = vsub.f32 %v2918, %v2919
    %v2921 = vand.u32 %v2920, 4294901760
    %2922 = vmatpush1.msra.mxu0 %v2921
    %2923 = vmatprep.subr.mxu0 0.0
    %v2924 = vand.u32 %v146, 4294901760
    %v2925 = vsub.f32 %v146, %v2924
    %v2926 = vand.u32 %v2925, 4294901760
    %v2927 = vsub.f32 %v2925, %v2926
    %v2928 = vand.u32 %v2927, 4294901760
    %2929 = vmatpush1.msra.mxu0 %v2928
    %2930 = vmatprep.subr.mxu0 0.0
    %v2931 = vand.u32 %v147, 4294901760
    %v2932 = vsub.f32 %v147, %v2931
    %v2933 = vand.u32 %v2932, 4294901760
    %v2934 = vsub.f32 %v2932, %v2933
    %v2935 = vand.u32 %v2934, 4294901760
    %2936 = vmatpush1.msra.mxu0 %v2935
    %2937 = vmatprep.subr.mxu0 0.0
    %v2938 = vand.u32 %v148, 4294901760
    %v2939 = vsub.f32 %v148, %v2938
    %v2940 = vand.u32 %v2939, 4294901760
    %v2941 = vsub.f32 %v2939, %v2940
    %v2942 = vand.u32 %v2941, 4294901760
    %2943 = vmatpush1.msra.mxu0 %v2942
    %2944 = vmatprep.subr.mxu0 0.0
    %v2945 = vand.u32 %v149, 4294901760
    %v2946 = vsub.f32 %v149, %v2945
    %v2947 = vand.u32 %v2946, 4294901760
    %v2948 = vsub.f32 %v2946, %v2947
    %v2949 = vand.u32 %v2948, 4294901760
    %2950 = vmatpush1.msra.mxu0 %v2949
    %2951 = vmatprep.subr.mxu0 0.0
    %v2952 = vand.u32 %v150, 4294901760
    %v2953 = vsub.f32 %v150, %v2952
    %v2954 = vand.u32 %v2953, 4294901760
    %v2955 = vsub.f32 %v2953, %v2954
    %v2956 = vand.u32 %v2955, 4294901760
    %2957 = vmatpush1.msra.mxu0 %v2956
    %2958 = vmatprep.subr.mxu0 0.0
    %v2959 = vand.u32 %v151, 4294901760
    %v2960 = vsub.f32 %v151, %v2959
    %v2961 = vand.u32 %v2960, 4294901760
    %v2962 = vsub.f32 %v2960, %v2961
    %v2963 = vand.u32 %v2962, 4294901760
    %2964 = vmatpush1.msra.mxu0 %v2963
    %2965 = vmatprep.subr.mxu0 0.0
    %2966 = vmatpush1.msra.mxu0 0.0
    %2967 = vmatprep.subr.mxu0 0.0
    %2968 = vmatpush1.msra.mxu0 0.0
    %2969 = vmatprep.subr.mxu0 0.0
    %2970 = vmatpush1.msra.mxu0 0.0
    %2971 = vmatprep.subr.mxu0 0.0
    %2972 = vmatpush1.msra.mxu0 0.0
    %2973 = vmatprep.subr.mxu0 0.0
    %2974 = vmatpush1.msra.mxu0 0.0
    %2975 = vmatprep.subr.mxu0 0.0
    %2976 = vmatpush1.msra.mxu0 0.0
    %2977 = vmatprep.subr.mxu0 0.0
    %2978 = vmatpush1.msra.mxu0 0.0
    %2979 = vmatprep.subr.mxu0 0.0
    %2980 = vmatpush1.msra.mxu0 0.0
    %2981 = vmatprep.subr.mxu0 0.0
    %2982 = vmatpush1.msra.mxu0 0.0
    %2983 = vmatprep.subr.mxu0 0.0
    %2984 = vmatpush1.msra.mxu0 0.0
    %2985 = vmatprep.subr.mxu0 0.0
    %2986 = vmatpush1.msra.mxu0 0.0
    %2987 = vmatprep.subr.mxu0 0.0
    %2988 = vmatpush1.msra.mxu0 0.0
    %2989 = vmatprep.subr.mxu0 0.0
    %2990 = vmatpush1.msra.mxu0 0.0
    %2991 = vmatprep.subr.mxu0 0.0
    %2992 = vmatpush1.msra.mxu0 0.0
    %2993 = vmatprep.subr.mxu0 0.0
    %2994 = vmatpush1.msra.mxu0 0.0
    %2995 = vmatprep.subr.mxu0 0.0
    %2996 = vmatpush1.msra.mxu0 0.0
    %2997 = vmatprep.mubr.f32.mxu0 0.0
    %v2998 = vand.u32 %v298, 4294901760
    %2999 = vmatmul.mubr.f32.gmra.mrb[0].mxu0 %v2998
    %v3000 = vpop.f32.mrb[0].mxu0
    %v3001 = vadd.f32 %v2820, %v3000
    %v3002 = vpop.f32.mrb[0].mxu0
    %3003 = vmatprep.mubr.f32.mxu0 0.0
    %v3004 = vand.u32 %v415, 4294901760
    %3005 = vmatmul.mubr.f32.gmra.mrb[0].mxu0 %v3004
    %v3006 = vpop.f32.mrb[0].mxu0
    %v3007 = vadd.f32 %v2830, %v3006
    %v3008 = vpop.f32.mrb[0].mxu0
    %3009 = vmatprep.mubr.f32.mxu0 0.0
    %v3010 = vand.u32 %v532, 4294901760
    %3011 = vmatmul.mubr.f32.gmra.mrb[0].mxu0 %v3010
    %v3012 = vpop.f32.mrb[0].mxu0
    %v3013 = vadd.f32 %v2840, %v3012
    %v3014 = vpop.f32.mrb[0].mxu0
    %3015 = vmatprep.mubr.f32.mxu0 0.0
    %v3016 = vand.u32 %v649, 4294901760
    %3017 = vmatmul.mubr.f32.gmra.mrb[0].mxu0 %v3016
    %v3018 = vpop.f32.mrb[0].mxu0
    %v3019 = vadd.f32 %v2850, %v3018
    %v3020 = vpop.f32.mrb[0].mxu0
    %3021 = vdwg.mxu0
    %3022 = vmatprep.subr.mxu0 0.0
    %v3023 = vand.u32 %v136, 4294901760
    %v3024 = vsub.f32 %v136, %v3023
    %3025 = vmatpush1.msra.mxu0 %v3024
    %3026 = vmatprep.subr.mxu0 0.0
    %v3027 = vand.u32 %v137, 4294901760
    %v3028 = vsub.f32 %v137, %v3027
    %3029 = vmatpush1.msra.mxu0 %v3028
    %3030 = vmatprep.subr.mxu0 0.0
    %v3031 = vand.u32 %v138, 4294901760
    %v3032 = vsub.f32 %v138, %v3031
    %3033 = vmatpush1.msra.mxu0 %v3032
    %3034 = vmatprep.subr.mxu0 0.0
    %v3035 = vand.u32 %v139, 4294901760
    %v3036 = vsub.f32 %v139, %v3035
    %3037 = vmatpush1.msra.mxu0 %v3036
    %3038 = vmatprep.subr.mxu0 0.0
    %v3039 = vand.u32 %v140, 4294901760
    %v3040 = vsub.f32 %v140, %v3039
    %3041 = vmatpush1.msra.mxu0 %v3040
    %3042 = vmatprep.subr.mxu0 0.0
    %v3043 = vand.u32 %v141, 4294901760
    %v3044 = vsub.f32 %v141, %v3043
    %3045 = vmatpush1.msra.mxu0 %v3044
    %3046 = vmatprep.subr.mxu0 0.0
    %v3047 = vand.u32 %v142, 4294901760
    %v3048 = vsub.f32 %v142, %v3047
    %3049 = vmatpush1.msra.mxu0 %v3048
    %3050 = vmatprep.subr.mxu0 0.0
    %v3051 = vand.u32 %v143, 4294901760
    %v3052 = vsub.f32 %v143, %v3051
    %3053 = vmatpush1.msra.mxu0 %v3052
    %3054 = vmatprep.subr.mxu0 0.0
    %v3055 = vand.u32 %v144, 4294901760
    %v3056 = vsub.f32 %v144, %v3055
    %3057 = vmatpush1.msra.mxu0 %v3056
    %3058 = vmatprep.subr.mxu0 0.0
    %v3059 = vand.u32 %v145, 4294901760
    %v3060 = vsub.f32 %v145, %v3059
    %3061 = vmatpush1.msra.mxu0 %v3060
    %3062 = vmatprep.subr.mxu0 0.0
    %v3063 = vand.u32 %v146, 4294901760
    %v3064 = vsub.f32 %v146, %v3063
    %3065 = vmatpush1.msra.mxu0 %v3064
    %3066 = vmatprep.subr.mxu0 0.0
    %v3067 = vand.u32 %v147, 4294901760
    %v3068 = vsub.f32 %v147, %v3067
    %3069 = vmatpush1.msra.mxu0 %v3068
    %3070 = vmatprep.subr.mxu0 0.0
    %v3071 = vand.u32 %v148, 4294901760
    %v3072 = vsub.f32 %v148, %v3071
    %3073 = vmatpush1.msra.mxu0 %v3072
    %3074 = vmatprep.subr.mxu0 0.0
    %v3075 = vand.u32 %v149, 4294901760
    %v3076 = vsub.f32 %v149, %v3075
    %3077 = vmatpush1.msra.mxu0 %v3076
    %3078 = vmatprep.subr.mxu0 0.0
    %v3079 = vand.u32 %v150, 4294901760
    %v3080 = vsub.f32 %v150, %v3079
    %3081 = vmatpush1.msra.mxu0 %v3080
    %3082 = vmatprep.subr.mxu0 0.0
    %v3083 = vand.u32 %v151, 4294901760
    %v3084 = vsub.f32 %v151, %v3083
    %3085 = vmatpush1.msra.mxu0 %v3084
    %3086 = vmatprep.subr.mxu0 0.0
    %3087 = vmatpush1.msra.mxu0 0.0
    %3088 = vmatprep.subr.mxu0 0.0
    %3089 = vmatpush1.msra.mxu0 0.0
    %3090 = vmatprep.subr.mxu0 0.0
    %3091 = vmatpush1.msra.mxu0 0.0
    %3092 = vmatprep.subr.mxu0 0.0
    %3093 = vmatpush1.msra.mxu0 0.0
    %3094 = vmatprep.subr.mxu0 0.0
    %3095 = vmatpush1.msra.mxu0 0.0
    %3096 = vmatprep.subr.mxu0 0.0
    %3097 = vmatpush1.msra.mxu0 0.0
    %3098 = vmatprep.subr.mxu0 0.0
    %3099 = vmatpush1.msra.mxu0 0.0
    %3100 = vmatprep.subr.mxu0 0.0
    %3101 = vmatpush1.msra.mxu0 0.0
    %3102 = vmatprep.subr.mxu0 0.0
    %3103 = vmatpush1.msra.mxu0 0.0
    %3104 = vmatprep.subr.mxu0 0.0
    %3105 = vmatpush1.msra.mxu0 0.0
    %3106 = vmatprep.subr.mxu0 0.0
    %3107 = vmatpush1.msra.mxu0 0.0
    %3108 = vmatprep.subr.mxu0 0.0
    %3109 = vmatpush1.msra.mxu0 0.0
    %3110 = vmatprep.subr.mxu0 0.0
    %3111 = vmatpush1.msra.mxu0 0.0
    %3112 = vmatprep.subr.mxu0 0.0
    %3113 = vmatpush1.msra.mxu0 0.0
    %3114 = vmatprep.subr.mxu0 0.0
    %3115 = vmatpush1.msra.mxu0 0.0
    %3116 = vmatprep.subr.mxu0 0.0
    %3117 = vmatpush1.msra.mxu0 0.0
    %3118 = vmatprep.mubr.f32.mxu0 0.0
    %v3119 = vand.u32 %v298, 4294901760
    %v3120 = vsub.f32 %v298, %v3119
    %3121 = vmatmul.mubr.f32.gmra.mrb[0].mxu0 %v3120
    %v3122 = vpop.f32.mrb[0].mxu0
    %v3123 = vadd.f32 %v3001, %v3122
    %v3124 = vpop.f32.mrb[0].mxu0
    %3125 = vmatprep.mubr.f32.mxu0 0.0
    %v3126 = vand.u32 %v415, 4294901760
    %v3127 = vsub.f32 %v415, %v3126
    %3128 = vmatmul.mubr.f32.gmra.mrb[0].mxu0 %v3127
    %v3129 = vpop.f32.mrb[0].mxu0
    %v3130 = vadd.f32 %v3007, %v3129
    %v3131 = vpop.f32.mrb[0].mxu0
    %3132 = vmatprep.mubr.f32.mxu0 0.0
    %v3133 = vand.u32 %v532, 4294901760
    %v3134 = vsub.f32 %v532, %v3133
    %3135 = vmatmul.mubr.f32.gmra.mrb[0].mxu0 %v3134
    %v3136 = vpop.f32.mrb[0].mxu0
    %v3137 = vadd.f32 %v3013, %v3136
    %v3138 = vpop.f32.mrb[0].mxu0
    %3139 = vmatprep.mubr.f32.mxu0 0.0
    %v3140 = vand.u32 %v649, 4294901760
    %v3141 = vsub.f32 %v649, %v3140
    %3142 = vmatmul.mubr.f32.gmra.mrb[0].mxu0 %v3141
    %v3143 = vpop.f32.mrb[0].mxu0
    %v3144 = vadd.f32 %v3019, %v3143
    %v3145 = vpop.f32.mrb[0].mxu0
    %3146 = vdwg.mxu0
    %3147 = vmatprep.subr.mxu0 0.0
    %v3148 = vand.u32 %v136, 4294901760
    %3149 = vmatpush1.msra.mxu0 %v3148
    %3150 = vmatprep.subr.mxu0 0.0
    %v3151 = vand.u32 %v137, 4294901760
    %3152 = vmatpush1.msra.mxu0 %v3151
    %3153 = vmatprep.subr.mxu0 0.0
    %v3154 = vand.u32 %v138, 4294901760
    %3155 = vmatpush1.msra.mxu0 %v3154
    %3156 = vmatprep.subr.mxu0 0.0
    %v3157 = vand.u32 %v139, 4294901760
    %3158 = vmatpush1.msra.mxu0 %v3157
    %3159 = vmatprep.subr.mxu0 0.0
    %v3160 = vand.u32 %v140, 4294901760
    %3161 = vmatpush1.msra.mxu0 %v3160
    %3162 = vmatprep.subr.mxu0 0.0
    %v3163 = vand.u32 %v141, 4294901760
    %3164 = vmatpush1.msra.mxu0 %v3163
    %3165 = vmatprep.subr.mxu0 0.0
    %v3166 = vand.u32 %v142, 4294901760
    %3167 = vmatpush1.msra.mxu0 %v3166
    %3168 = vmatprep.subr.mxu0 0.0
    %v3169 = vand.u32 %v143, 4294901760
    %3170 = vmatpush1.msra.mxu0 %v3169
    %3171 = vmatprep.subr.mxu0 0.0
    %v3172 = vand.u32 %v144, 4294901760
    %3173 = vmatpush1.msra.mxu0 %v3172
    %3174 = vmatprep.subr.mxu0 0.0
    %v3175 = vand.u32 %v145, 4294901760
    %3176 = vmatpush1.msra.mxu0 %v3175
    %3177 = vmatprep.subr.mxu0 0.0
    %v3178 = vand.u32 %v146, 4294901760
    %3179 = vmatpush1.msra.mxu0 %v3178
    %3180 = vmatprep.subr.mxu0 0.0
    %v3181 = vand.u32 %v147, 4294901760
    %3182 = vmatpush1.msra.mxu0 %v3181
    %3183 = vmatprep.subr.mxu0 0.0
    %v3184 = vand.u32 %v148, 4294901760
    %3185 = vmatpush1.msra.mxu0 %v3184
    %3186 = vmatprep.subr.mxu0 0.0
    %v3187 = vand.u32 %v149, 4294901760
    %3188 = vmatpush1.msra.mxu0 %v3187
    %3189 = vmatprep.subr.mxu0 0.0
    %v3190 = vand.u32 %v150, 4294901760
    %3191 = vmatpush1.msra.mxu0 %v3190
    %3192 = vmatprep.subr.mxu0 0.0
    %v3193 = vand.u32 %v151, 4294901760
    %3194 = vmatpush1.msra.mxu0 %v3193
    %3195 = vmatprep.subr.mxu0 0.0
    %3196 = vmatpush1.msra.mxu0 0.0
    %3197 = vmatprep.subr.mxu0 0.0
    %3198 = vmatpush1.msra.mxu0 0.0
    %3199 = vmatprep.subr.mxu0 0.0
    %3200 = vmatpush1.msra.mxu0 0.0
    %3201 = vmatprep.subr.mxu0 0.0
    %3202 = vmatpush1.msra.mxu0 0.0
    %3203 = vmatprep.subr.mxu0 0.0
    %3204 = vmatpush1.msra.mxu0 0.0
    %3205 = vmatprep.subr.mxu0 0.0
    %3206 = vmatpush1.msra.mxu0 0.0
    %3207 = vmatprep.subr.mxu0 0.0
    %3208 = vmatpush1.msra.mxu0 0.0
    %3209 = vmatprep.subr.mxu0 0.0
    %3210 = vmatpush1.msra.mxu0 0.0
    %3211 = vmatprep.subr.mxu0 0.0
    %3212 = vmatpush1.msra.mxu0 0.0
    %3213 = vmatprep.subr.mxu0 0.0
    %3214 = vmatpush1.msra.mxu0 0.0
    %3215 = vmatprep.subr.mxu0 0.0
    %3216 = vmatpush1.msra.mxu0 0.0
    %3217 = vmatprep.subr.mxu0 0.0
    %3218 = vmatpush1.msra.mxu0 0.0
    %3219 = vmatprep.subr.mxu0 0.0
    %3220 = vmatpush1.msra.mxu0 0.0
    %3221 = vmatprep.subr.mxu0 0.0
    %3222 = vmatpush1.msra.mxu0 0.0
    %3223 = vmatprep.subr.mxu0 0.0
    %3224 = vmatpush1.msra.mxu0 0.0
    %3225 = vmatprep.subr.mxu0 0.0
    %3226 = vmatpush1.msra.mxu0 0.0
    %3227 = vmatprep.mubr.f32.mxu0 0.0
    %v3228 = vand.u32 %v298, 4294901760
    %v3229 = vsub.f32 %v298, %v3228
    %v3230 = vand.u32 %v3229, 4294901760
    %3231 = vmatmul.mubr.f32.gmra.mrb[0].mxu0 %v3230
    %v3232 = vpop.f32.mrb[0].mxu0
    %v3233 = vadd.f32 %v3123, %v3232
    %v3234 = vpop.f32.mrb[0].mxu0
    %3235 = vmatprep.mubr.f32.mxu0 0.0
    %v3236 = vand.u32 %v415, 4294901760
    %v3237 = vsub.f32 %v415, %v3236
    %v3238 = vand.u32 %v3237, 4294901760
    %3239 = vmatmul.mubr.f32.gmra.mrb[0].mxu0 %v3238
    %v3240 = vpop.f32.mrb[0].mxu0
    %v3241 = vadd.f32 %v3130, %v3240
    %v3242 = vpop.f32.mrb[0].mxu0
    %3243 = vmatprep.mubr.f32.mxu0 0.0
    %v3244 = vand.u32 %v532, 4294901760
    %v3245 = vsub.f32 %v532, %v3244
    %v3246 = vand.u32 %v3245, 4294901760
    %3247 = vmatmul.mubr.f32.gmra.mrb[0].mxu0 %v3246
    %v3248 = vpop.f32.mrb[0].mxu0
    %v3249 = vadd.f32 %v3137, %v3248
    %v3250 = vpop.f32.mrb[0].mxu0
    %3251 = vmatprep.mubr.f32.mxu0 0.0
    %v3252 = vand.u32 %v649, 4294901760
    %v3253 = vsub.f32 %v649, %v3252
    %v3254 = vand.u32 %v3253, 4294901760
    %3255 = vmatmul.mubr.f32.gmra.mrb[0].mxu0 %v3254
    %v3256 = vpop.f32.mrb[0].mxu0
    %v3257 = vadd.f32 %v3144, %v3256
    %v3258 = vpop.f32.mrb[0].mxu0
    %3259 = vdwg.mxu0
    %3260 = vmatprep.subr.mxu0 0.0
    %v3261 = vand.u32 %v136, 4294901760
    %v3262 = vsub.f32 %v136, %v3261
    %v3263 = vand.u32 %v3262, 4294901760
    %3264 = vmatpush1.msra.mxu0 %v3263
    %3265 = vmatprep.subr.mxu0 0.0
    %v3266 = vand.u32 %v137, 4294901760
    %v3267 = vsub.f32 %v137, %v3266
    %v3268 = vand.u32 %v3267, 4294901760
    %3269 = vmatpush1.msra.mxu0 %v3268
    %3270 = vmatprep.subr.mxu0 0.0
    %v3271 = vand.u32 %v138, 4294901760
    %v3272 = vsub.f32 %v138, %v3271
    %v3273 = vand.u32 %v3272, 4294901760
    %3274 = vmatpush1.msra.mxu0 %v3273
    %3275 = vmatprep.subr.mxu0 0.0
    %v3276 = vand.u32 %v139, 4294901760
    %v3277 = vsub.f32 %v139, %v3276
    %v3278 = vand.u32 %v3277, 4294901760
    %3279 = vmatpush1.msra.mxu0 %v3278
    %3280 = vmatprep.subr.mxu0 0.0
    %v3281 = vand.u32 %v140, 4294901760
    %v3282 = vsub.f32 %v140, %v3281
    %v3283 = vand.u32 %v3282, 4294901760
    %3284 = vmatpush1.msra.mxu0 %v3283
    %3285 = vmatprep.subr.mxu0 0.0
    %v3286 = vand.u32 %v141, 4294901760
    %v3287 = vsub.f32 %v141, %v3286
    %v3288 = vand.u32 %v3287, 4294901760
    %3289 = vmatpush1.msra.mxu0 %v3288
    %3290 = vmatprep.subr.mxu0 0.0
    %v3291 = vand.u32 %v142, 4294901760
    %v3292 = vsub.f32 %v142, %v3291
    %v3293 = vand.u32 %v3292, 4294901760
    %3294 = vmatpush1.msra.mxu0 %v3293
    %3295 = vmatprep.subr.mxu0 0.0
    %v3296 = vand.u32 %v143, 4294901760
    %v3297 = vsub.f32 %v143, %v3296
    %v3298 = vand.u32 %v3297, 4294901760
    %3299 = vmatpush1.msra.mxu0 %v3298
    %3300 = vmatprep.subr.mxu0 0.0
    %v3301 = vand.u32 %v144, 4294901760
    %v3302 = vsub.f32 %v144, %v3301
    %v3303 = vand.u32 %v3302, 4294901760
    %3304 = vmatpush1.msra.mxu0 %v3303
    %3305 = vmatprep.subr.mxu0 0.0
    %v3306 = vand.u32 %v145, 4294901760
    %v3307 = vsub.f32 %v145, %v3306
    %v3308 = vand.u32 %v3307, 4294901760
    %3309 = vmatpush1.msra.mxu0 %v3308
    %3310 = vmatprep.subr.mxu0 0.0
    %v3311 = vand.u32 %v146, 4294901760
    %v3312 = vsub.f32 %v146, %v3311
    %v3313 = vand.u32 %v3312, 4294901760
    %3314 = vmatpush1.msra.mxu0 %v3313
    %3315 = vmatprep.subr.mxu0 0.0
    %v3316 = vand.u32 %v147, 4294901760
    %v3317 = vsub.f32 %v147, %v3316
    %v3318 = vand.u32 %v3317, 4294901760
    %3319 = vmatpush1.msra.mxu0 %v3318
    %3320 = vmatprep.subr.mxu0 0.0
    %v3321 = vand.u32 %v148, 4294901760
    %v3322 = vsub.f32 %v148, %v3321
    %v3323 = vand.u32 %v3322, 4294901760
    %3324 = vmatpush1.msra.mxu0 %v3323
    %3325 = vmatprep.subr.mxu0 0.0
    %v3326 = vand.u32 %v149, 4294901760
    %v3327 = vsub.f32 %v149, %v3326
    %v3328 = vand.u32 %v3327, 4294901760
    %3329 = vmatpush1.msra.mxu0 %v3328
    %3330 = vmatprep.subr.mxu0 0.0
    %v3331 = vand.u32 %v150, 4294901760
    %v3332 = vsub.f32 %v150, %v3331
    %v3333 = vand.u32 %v3332, 4294901760
    %3334 = vmatpush1.msra.mxu0 %v3333
    %3335 = vmatprep.subr.mxu0 0.0
    %v3336 = vand.u32 %v151, 4294901760
    %v3337 = vsub.f32 %v151, %v3336
    %v3338 = vand.u32 %v3337, 4294901760
    %3339 = vmatpush1.msra.mxu0 %v3338
    %3340 = vmatprep.subr.mxu0 0.0
    %3341 = vmatpush1.msra.mxu0 0.0
    %3342 = vmatprep.subr.mxu0 0.0
    %3343 = vmatpush1.msra.mxu0 0.0
    %3344 = vmatprep.subr.mxu0 0.0
    %3345 = vmatpush1.msra.mxu0 0.0
    %3346 = vmatprep.subr.mxu0 0.0
    %3347 = vmatpush1.msra.mxu0 0.0
    %3348 = vmatprep.subr.mxu0 0.0
    %3349 = vmatpush1.msra.mxu0 0.0
    %3350 = vmatprep.subr.mxu0 0.0
    %3351 = vmatpush1.msra.mxu0 0.0
    %3352 = vmatprep.subr.mxu0 0.0
    %3353 = vmatpush1.msra.mxu0 0.0
    %3354 = vmatprep.subr.mxu0 0.0
    %3355 = vmatpush1.msra.mxu0 0.0
    %3356 = vmatprep.subr.mxu0 0.0
    %3357 = vmatpush1.msra.mxu0 0.0
    %3358 = vmatprep.subr.mxu0 0.0
    %3359 = vmatpush1.msra.mxu0 0.0
    %3360 = vmatprep.subr.mxu0 0.0
    %3361 = vmatpush1.msra.mxu0 0.0
    %3362 = vmatprep.subr.mxu0 0.0
    %3363 = vmatpush1.msra.mxu0 0.0
    %3364 = vmatprep.subr.mxu0 0.0
    %3365 = vmatpush1.msra.mxu0 0.0
    %3366 = vmatprep.subr.mxu0 0.0
    %3367 = vmatpush1.msra.mxu0 0.0
    %3368 = vmatprep.subr.mxu0 0.0
    %3369 = vmatpush1.msra.mxu0 0.0
    %3370 = vmatprep.subr.mxu0 0.0
    %3371 = vmatpush1.msra.mxu0 0.0
    %3372 = vmatprep.mubr.f32.mxu0 0.0
    %v3373 = vand.u32 %v298, 4294901760
    %3374 = vmatmul.mubr.f32.gmra.mrb[0].mxu0 %v3373
    %v3375 = vpop.f32.mrb[0].mxu0
    %v3376 = vadd.f32 %v3233, %v3375
    %v3377 = vpop.f32.mrb[0].mxu0
    %3378 = vmatprep.mubr.f32.mxu0 0.0
    %v3379 = vand.u32 %v415, 4294901760
    %3380 = vmatmul.mubr.f32.gmra.mrb[0].mxu0 %v3379
    %v3381 = vpop.f32.mrb[0].mxu0
    %v3382 = vadd.f32 %v3241, %v3381
    %v3383 = vpop.f32.mrb[0].mxu0
    %3384 = vmatprep.mubr.f32.mxu0 0.0
    %v3385 = vand.u32 %v532, 4294901760
    %3386 = vmatmul.mubr.f32.gmra.mrb[0].mxu0 %v3385
    %v3387 = vpop.f32.mrb[0].mxu0
    %v3388 = vadd.f32 %v3249, %v3387
    %v3389 = vpop.f32.mrb[0].mxu0
    %3390 = vmatprep.mubr.f32.mxu0 0.0
    %v3391 = vand.u32 %v649, 4294901760
    %3392 = vmatmul.mubr.f32.gmra.mrb[0].mxu0 %v3391
    %v3393 = vpop.f32.mrb[0].mxu0
    %v3394 = vadd.f32 %v3257, %v3393
    %v3395 = vpop.f32.mrb[0].mxu0
    %3396 = vdwg.mxu0
    %3397 = vmatprep.subr.mxu0 0.0
    %v3398 = vand.u32 %v136, 4294901760
    %3399 = vmatpush1.msra.mxu0 %v3398
    %3400 = vmatprep.subr.mxu0 0.0
    %v3401 = vand.u32 %v137, 4294901760
    %3402 = vmatpush1.msra.mxu0 %v3401
    %3403 = vmatprep.subr.mxu0 0.0
    %v3404 = vand.u32 %v138, 4294901760
    %3405 = vmatpush1.msra.mxu0 %v3404
    %3406 = vmatprep.subr.mxu0 0.0
    %v3407 = vand.u32 %v139, 4294901760
    %3408 = vmatpush1.msra.mxu0 %v3407
    %3409 = vmatprep.subr.mxu0 0.0
    %v3410 = vand.u32 %v140, 4294901760
    %3411 = vmatpush1.msra.mxu0 %v3410
    %3412 = vmatprep.subr.mxu0 0.0
    %v3413 = vand.u32 %v141, 4294901760
    %3414 = vmatpush1.msra.mxu0 %v3413
    %3415 = vmatprep.subr.mxu0 0.0
    %v3416 = vand.u32 %v142, 4294901760
    %3417 = vmatpush1.msra.mxu0 %v3416
    %3418 = vmatprep.subr.mxu0 0.0
    %v3419 = vand.u32 %v143, 4294901760
    %3420 = vmatpush1.msra.mxu0 %v3419
    %3421 = vmatprep.subr.mxu0 0.0
    %v3422 = vand.u32 %v144, 4294901760
    %3423 = vmatpush1.msra.mxu0 %v3422
    %3424 = vmatprep.subr.mxu0 0.0
    %v3425 = vand.u32 %v145, 4294901760
    %3426 = vmatpush1.msra.mxu0 %v3425
    %3427 = vmatprep.subr.mxu0 0.0
    %v3428 = vand.u32 %v146, 4294901760
    %3429 = vmatpush1.msra.mxu0 %v3428
    %3430 = vmatprep.subr.mxu0 0.0
    %v3431 = vand.u32 %v147, 4294901760
    %3432 = vmatpush1.msra.mxu0 %v3431
    %3433 = vmatprep.subr.mxu0 0.0
    %v3434 = vand.u32 %v148, 4294901760
    %3435 = vmatpush1.msra.mxu0 %v3434
    %3436 = vmatprep.subr.mxu0 0.0
    %v3437 = vand.u32 %v149, 4294901760
    %3438 = vmatpush1.msra.mxu0 %v3437
    %3439 = vmatprep.subr.mxu0 0.0
    %v3440 = vand.u32 %v150, 4294901760
    %3441 = vmatpush1.msra.mxu0 %v3440
    %3442 = vmatprep.subr.mxu0 0.0
    %v3443 = vand.u32 %v151, 4294901760
    %3444 = vmatpush1.msra.mxu0 %v3443
    %3445 = vmatprep.subr.mxu0 0.0
    %3446 = vmatpush1.msra.mxu0 0.0
    %3447 = vmatprep.subr.mxu0 0.0
    %3448 = vmatpush1.msra.mxu0 0.0
    %3449 = vmatprep.subr.mxu0 0.0
    %3450 = vmatpush1.msra.mxu0 0.0
    %3451 = vmatprep.subr.mxu0 0.0
    %3452 = vmatpush1.msra.mxu0 0.0
    %3453 = vmatprep.subr.mxu0 0.0
    %3454 = vmatpush1.msra.mxu0 0.0
    %3455 = vmatprep.subr.mxu0 0.0
    %3456 = vmatpush1.msra.mxu0 0.0
    %3457 = vmatprep.subr.mxu0 0.0
    %3458 = vmatpush1.msra.mxu0 0.0
    %3459 = vmatprep.subr.mxu0 0.0
    %3460 = vmatpush1.msra.mxu0 0.0
    %3461 = vmatprep.subr.mxu0 0.0
    %3462 = vmatpush1.msra.mxu0 0.0
    %3463 = vmatprep.subr.mxu0 0.0
    %3464 = vmatpush1.msra.mxu0 0.0
    %3465 = vmatprep.subr.mxu0 0.0
    %3466 = vmatpush1.msra.mxu0 0.0
    %3467 = vmatprep.subr.mxu0 0.0
    %3468 = vmatpush1.msra.mxu0 0.0
    %3469 = vmatprep.subr.mxu0 0.0
    %3470 = vmatpush1.msra.mxu0 0.0
    %3471 = vmatprep.subr.mxu0 0.0
    %3472 = vmatpush1.msra.mxu0 0.0
    %3473 = vmatprep.subr.mxu0 0.0
    %3474 = vmatpush1.msra.mxu0 0.0
    %3475 = vmatprep.subr.mxu0 0.0
    %3476 = vmatpush1.msra.mxu0 0.0
    %3477 = vmatprep.mubr.f32.mxu0 0.0
    %v3478 = vand.u32 %v298, 4294901760
    %3479 = vmatmul.mubr.f32.gmra.mrb[0].mxu0 %v3478
    %v3480 = vpop.f32.mrb[0].mxu0
    %v3481 = vadd.f32 %v3376, %v3480
    %v3482 = vpop.f32.mrb[0].mxu0
    %3483 = vmatprep.mubr.f32.mxu0 0.0
    %v3484 = vand.u32 %v415, 4294901760
    %3485 = vmatmul.mubr.f32.gmra.mrb[0].mxu0 %v3484
    %v3486 = vpop.f32.mrb[0].mxu0
    %v3487 = vadd.f32 %v3382, %v3486
    %v3488 = vpop.f32.mrb[0].mxu0
    %3489 = vmatprep.mubr.f32.mxu0 0.0
    %v3490 = vand.u32 %v532, 4294901760
    %3491 = vmatmul.mubr.f32.gmra.mrb[0].mxu0 %v3490
    %v3492 = vpop.f32.mrb[0].mxu0
    %v3493 = vadd.f32 %v3388, %v3492
    %v3494 = vpop.f32.mrb[0].mxu0
    %3495 = vmatprep.mubr.f32.mxu0 0.0
    %v3496 = vand.u32 %v649, 4294901760
    %3497 = vmatmul.mubr.f32.gmra.mrb[0].mxu0 %v3496
    %v3498 = vpop.f32.mrb[0].mxu0
    %v3499 = vadd.f32 %v3394, %v3498
    %v3500 = vpop.f32.mrb[0].mxu0
    %3501 = vdwg.mxu0
    %v3502 = vmul.f32 %v3481, 0.2
    %v3503 = vmul.f32 %v3487, 0.2
    %v3504 = vmul.f32 %v3493, 0.2
    %v3505 = vmul.f32 %v3499, 0.2
    %3506 = vst [vmem:[#allocation7] sm:$0xff] %v3502
    %3507 = vst [vmem:[#allocation7 + $0x8] sm:$0xff] %v3503
    %3508 = vst [vmem:[#allocation7 + $0x10] sm:$0xff] %v3504
    %3509 = vst [vmem:[#allocation7 + $0x18] sm:$0xff] %v3505
    // Predicated region
    $region18: #{tpu_custom_call.1} parent=1 // pred_check
      _
    $region19: #{tpu_custom_call.1} parent=1 // pred_check_branch
      %3511 = sbr.rel (0) target = $region21
    $region20: #{tpu_custom_call.1} parent=1 // pred_region
      %s3513 = ssub.s32 512, 16
      %3514 = vsyncadd [#allocation4], %s3513
      %s3515 = sshll.u32 [#allocation7], 4
      %s3516 = int_to_ptr.vmem [resolvable:$true] %s3515
      %3521 = dma.vmem_to_hbm [thread:$0]  %s3516, 16, %s2, [#allocation4], 16, 16, 1
    $region21: #{tpu_custom_call.1} parent=1 // pred_fallthru
      _
    // Predicated region
    $region22: #{tpu_custom_call.1} parent=1 // pred_check
      _
    $region23: #{tpu_custom_call.1} parent=1 // pred_check_branch
      %3523 = sbr.rel (0) target = $region25
    $region24: #{tpu_custom_call.1} parent=1 // pred_region
      %3524 = dma.done [#allocation4], 512
    $region25: #{tpu_custom_call.1} parent=1 // pred_fallthru
      _
    %3525 = vsyncpa [#allocation3], 1
    %3526 = vsyncpa [#allocation6], 1
    %3527 = vsyncpa [#allocation4], 1

</llo_original>
